<compile_context>
chip_gen: v7x
topology: tpu7x:2x2x1
jax: 0.10.0
libtpu: 0.0.40
codegen_flags: <defaults>
</compile_context>

<pallas_src>
import math

import jax
import jax.numpy as jnp
from jax.experimental import pallas as pl
from jax.experimental.pallas import tpu as pltpu


# ----------------------------------------------------------------------------
# Kernel: row-wise sparsemax over the last (lane) axis of a (TR, K) tile
# ----------------------------------------------------------------------------
def _sparsemax_kernel(x_ref, o_ref):
    z = x_ref[...].astype(jnp.float32)                       # (TR, K)
    z = z - jnp.max(z, axis=-1, keepdims=True)               # shift by row max

    # Pairwise comparison per row: ge[r, i, j] = (z[r, j] >= z[r, i]).
    ge = (z[:, None, :] >= z[:, :, None]).astype(jnp.float32)  # (TR, K, K)
    cnt = jnp.sum(ge, axis=-1)                                  # descending rank (ties -> max rank)
    csum = jnp.sum(ge * z[:, None, :], axis=-1)                 # sum of elements >= z_i

    support = ((1.0 + cnt * z) > csum).astype(jnp.float32)      # (TR, K)
    k = jnp.max(support * cnt, axis=-1, keepdims=True)          # support size, always >= 1
    ssum = jnp.sum(support * z, axis=-1, keepdims=True)         # sum of supported z
    tau = (ssum - 1.0) / k

    out = jnp.maximum(z - tau, 0.0)
    o_ref[...] = out.astype(o_ref.dtype)


# ----------------------------------------------------------------------------
# Wrapper: matches complexSparsemax(dim).forward(x)
# ----------------------------------------------------------------------------
def complex_sparsemax(x, dim=-1, *, row_tile=8):
    """Sparsemax along `dim` (default -1); output has the same shape/dtype as x."""
    # Move the logits axis last; flatten everything else into rows.  The full
    # logits axis sits on the lane dimension -> lane-dense loads/stores.
    x_m = jnp.moveaxis(x, dim, -1)
    lead_shape = x_m.shape[:-1]
    K = x_m.shape[-1]
    N = math.prod(lead_shape)
    x2 = x_m.reshape(N, K)

    # Pad the row count to a multiple of the row tile (padding rows discarded).
    n_pad = ((N + row_tile - 1) // row_tile) * row_tile
    if n_pad != N:
        x2 = jnp.pad(x2, ((0, n_pad - N), (0, 0)))

    out2 = pl.pallas_call(
        _sparsemax_kernel,
        out_shape=jax.ShapeDtypeStruct((n_pad, K), x.dtype),
        grid=(n_pad // row_tile,),
        in_specs=[pl.BlockSpec((row_tile, K), lambda i: (i, 0))],
        out_specs=pl.BlockSpec((row_tile, K), lambda i: (i, 0)),
        compiler_params=pltpu.CompilerParams(
            # Every row tile is independent -> shardable across TensorCores (v7x).
            dimension_semantics=("parallel",),
        ),
    )(x2)

    out = out2[:N].reshape(lead_shape + (K,))
    return jnp.moveaxis(out, -1, dim)


# ----------------------------------------------------------------------------
# Pure-JAX reference mirroring the PyTorch (sort-based) code
# ----------------------------------------------------------------------------
def _sparsemax_ref(x, dim=-1):
    z = jnp.moveaxis(x, dim, -1).astype(jnp.float32)
    z = z - jnp.max(z, axis=-1, keepdims=True)
    zs = -jnp.sort(-z, axis=-1)                               # descending
    K = z.shape[-1]
    rng = jnp.arange(1, K + 1, dtype=z.dtype)
    bound = 1.0 + rng * zs
    cum = jnp.cumsum(zs, axis=-1)
    is_gt = (bound > cum).astype(z.dtype)
    k = jnp.max(is_gt * rng, axis=-1, keepdims=True)
    tau = (jnp.sum(is_gt * zs, axis=-1, keepdims=True) - 1.0) / k
    out = jnp.maximum(z - tau, 0.0)
    return jnp.moveaxis(out, -1, dim).astype(x.dtype)


# ----------------------------------------------------------------------------
# Main
# ----------------------------------------------------------------------------
if __name__ == "__main__":
    # TODO(synk): backward() of the PyTorch module (custom grad hook) is not part
    # of the forward pass and is not implemented here.
    key = jax.random.PRNGKey(0)
    batch, seq, hidden = 2, 8, 128          # lane-dense logits axis (128 lanes)
    x = jax.random.normal(key, (batch, seq, hidden), dtype=jnp.float32)

    # Default dim = -1 (sparsemax over `hidden`).
    out = jax.block_until_ready(complex_sparsemax(x))
    ref = _sparsemax_ref(x)
    assert out.shape == x.shape and out.dtype == x.dtype
    assert jnp.allclose(out, ref, atol=1e-5, rtol=1e-5), "mismatch vs sort-based reference"

    # Sparsemax sanity: nonnegative, rows sum to 1.
    sums = jnp.sum(out, axis=-1)
    assert bool(jnp.all(out >= 0.0))
    assert jnp.allclose(sums, jnp.ones_like(sums), atol=1e-5)

    # Non-default dim: sparsemax over the `seq` axis.
    out_d1 = jax.block_until_ready(complex_sparsemax(x, dim=1))
    ref_d1 = _sparsemax_ref(x, dim=1)
    assert jnp.allclose(out_d1, ref_d1, atol=1e-5, rtol=1e-5), "mismatch for dim=1"

    print("KERNEL_OK")
</pallas_src>

<mosaic_0001>
module attributes {stable_mosaic.version = 11 : i64} {
  func.func @_sparsemax_kernel(%arg0: i32, %arg1: memref<8x128xf32, #tpu.memory_space<vmem>>, %arg2: memref<8x128xf32, #tpu.memory_space<vmem>>) attributes {dimension_semantics = [#tpu.dimension_semantics<parallel>], iteration_bounds = array<i64: 2>, scalar_prefetch = 0 : i64, scratch_operands = 0 : i64, tpu.core_type = #tpu.core_type<tc>, window_params = [{transform_indices = @transform_0, window_bounds = array<i64: 8, 128>}, {transform_indices = @transform_1, window_bounds = array<i64: 8, 128>}]} {
    %c0 = arith.constant 0 : index
    %c0_0 = arith.constant 0 : index
    %0 = vector.load %arg1[%c0, %c0_0] : memref<8x128xf32, #tpu.memory_space<vmem>>, vector<8x128xf32>
    %cst = arith.constant dense<0xFF800000> : vector<8xf32>
    %1 = vector.multi_reduction <maximumf>, %0, %cst [1] : vector<8x128xf32> to vector<8xf32>
    %2 = vector.shape_cast %1 : vector<8xf32> to vector<8x1xf32>
    %3 = vector.broadcast %2 : vector<8x1xf32> to vector<8x128xf32>
    %4 = arith.subf %0, %3 : vector<8x128xf32>
    %5 = vector.shape_cast %4 : vector<8x128xf32> to vector<8x1x128xf32>
    %6 = vector.shape_cast %4 : vector<8x128xf32> to vector<8x128x1xf32>
    %7 = vector.broadcast %5 : vector<8x1x128xf32> to vector<8x128x128xf32>
    %8 = vector.broadcast %6 : vector<8x128x1xf32> to vector<8x128x128xf32>
    %9 = arith.cmpf oge, %7, %8 : vector<8x128x128xf32>
    %10 = arith.extui %9 : vector<8x128x128xi1> to vector<8x128x128xi32>
    %11 = arith.sitofp %10 : vector<8x128x128xi32> to vector<8x128x128xf32>
    %cst_1 = arith.constant dense<0.000000e+00> : vector<8x128xf32>
    %12 = vector.multi_reduction <add>, %11, %cst_1 [2] : vector<8x128x128xf32> to vector<8x128xf32>
    %13 = vector.shape_cast %4 : vector<8x128xf32> to vector<8x1x128xf32>
    %14 = vector.broadcast %13 : vector<8x1x128xf32> to vector<8x128x128xf32>
    %15 = arith.mulf %11, %14 : vector<8x128x128xf32>
    %cst_2 = arith.constant dense<0.000000e+00> : vector<8x128xf32>
    %16 = vector.multi_reduction <add>, %15, %cst_2 [2] : vector<8x128x128xf32> to vector<8x128xf32>
    %17 = arith.mulf %12, %4 : vector<8x128xf32>
    %cst_3 = arith.constant 1.000000e+00 : f32
    %18 = vector.broadcast %cst_3 : f32 to vector<8x128xf32>
    %19 = arith.addf %18, %17 : vector<8x128xf32>
    %20 = arith.cmpf ogt, %19, %16 : vector<8x128xf32>
    %21 = arith.extui %20 : vector<8x128xi1> to vector<8x128xi32>
    %22 = arith.sitofp %21 : vector<8x128xi32> to vector<8x128xf32>
    %23 = arith.mulf %22, %12 : vector<8x128xf32>
    %cst_4 = arith.constant dense<0xFF800000> : vector<8xf32>
    %24 = vector.multi_reduction <maximumf>, %23, %cst_4 [1] : vector<8x128xf32> to vector<8xf32>
    %25 = vector.shape_cast %24 : vector<8xf32> to vector<8x1xf32>
    %26 = arith.mulf %22, %4 : vector<8x128xf32>
    %cst_5 = arith.constant dense<0.000000e+00> : vector<8xf32>
    %27 = vector.multi_reduction <add>, %26, %cst_5 [1] : vector<8x128xf32> to vector<8xf32>
    %28 = vector.shape_cast %27 : vector<8xf32> to vector<8x1xf32>
    %cst_6 = arith.constant 1.000000e+00 : f32
    %29 = vector.broadcast %cst_6 : f32 to vector<8x1xf32>
    %30 = arith.subf %28, %29 : vector<8x1xf32>
    %31 = arith.divf %30, %25 : vector<8x1xf32>
    %32 = vector.broadcast %31 : vector<8x1xf32> to vector<8x128xf32>
    %33 = arith.subf %4, %32 : vector<8x128xf32>
    %cst_7 = arith.constant 0.000000e+00 : f32
    %34 = vector.broadcast %cst_7 : f32 to vector<8x128xf32>
    %35 = arith.maximumf %33, %34 : vector<8x128xf32>
    %c0_8 = arith.constant 0 : index
    %c0_9 = arith.constant 0 : index
    %36 = vector.load %arg2[%c0_8, %c0_9] : memref<8x128xf32, #tpu.memory_space<vmem>>, vector<8x128xf32>
    tpu.vector_store %arg2[%c0_8, %c0_9], %35 {strides = array<i32>} : memref<8x128xf32, #tpu.memory_space<vmem>>, vector<8x128xf32>,
    return
  }
  func.func @transform_0(%arg0: i32) -> (i32, i32) {
    %c0_i32 = arith.constant 0 : i32
    %c0_i32_0 = arith.constant 0 : i32
    return %arg0, %c0_i32 : i32, i32
  }
  func.func @transform_1(%arg0: i32) -> (i32, i32) {
    %c0_i32 = arith.constant 0 : i32
    %c0_i32_0 = arith.constant 0 : i32
    return %arg0, %c0_i32 : i32, i32
  }
}

</mosaic_0001>

<llo_original>
// kernel: tpu_custom_call.1
$region0: #{tpu_custom_call.1}
  #allocation0 [shape = 'u32[]', space=smem, size = 0x4, offset = 0x4, fixed_abs, tag = 'smem constant byte address 0x4 - core index']
  #allocation1 [shape = 'u32[144,128]{1,0:T(1,128)}', space=vmem, size = 0x12000, scoped, tag = 'internal scratch']
  %s0 = inlined_call_operand.hbm [shape: f32[16,128], index: 0, kind: input, shape index: {}]
  %s1 = inlined_call_operand.hbm [shape: f32[16,128], index: 1, kind: output, shape index: {}]
  %s2 = sld [smem:[#allocation0]]
  $region41: #{tpu_custom_call.1} parent=0
    _
  %s4 = ssub.s32 1, %s2
  %s5 = scalar_select 0, %s4, %s2
  $region1: #{tpu_custom_call.1} parent=0
    #allocation2 [shape = 'u8[8192]{0}', space=vmem, size = 0x2000, scoped, tag = 'input window, operand 0']
    #allocation3 [shape = 's32[2]{0}', space=sflag, size = 0x8, scoped, tag = 'scoped memory for tpu_custom_call.1']
    #allocation4 [shape = 's32[2]{0}', space=sflag, size = 0x8, scoped, tag = 'scoped memory for tpu_custom_call.1']
    #allocation5 [shape = 'u8[8192]{0}', space=vmem, size = 0x2000, scoped, tag = 'output window, operand 0']
    %6 = vsyncpa [#allocation3], 0
    %s7 = scalar_lea.sflag [#allocation3], 1
    %8 = vsyncpa %s7, 0
    %9 = vsyncpa [#allocation4], 0
    %s10 = scalar_lea.sflag [#allocation4], 1
    %11 = vsyncpa %s10, 0
    loop: start=0, step=1, limit=4
    $region2: #{tpu_custom_call.1} parent=1 // loop_pre_header
      _
    $region3: #{tpu_custom_call.1} parent=1 // loop_header
      %s13 = sphi 0, %s17
      %p14 = scmp.ge.s32.totalorder %s13, 4
      %s23 = sphi 0, %s25
      %s26 = sphi 0, %s23
      %s27 = sphi 0, %s26
      %s43 = sphi 0, %s27
      %s49 = sphi 0, %s51
      %s52 = sphi 0, %s49
      %s53 = sphi 0, %s52
      %s69 = sphi 0, %s53
    $region4: #{tpu_custom_call.1} parent=1 // loop_header_branch
      %16 = sbr.rel (%p14) target = $region8
    $region5: #{tpu_custom_call.1} parent=1 // loop_body
      %s18 = ssub.s32 %s13, 1
      %s19 = ssub.s32 %s13, 2
      %s20 = sadd.s32 %s13, 1
      %s21 = ssub.s32 %s13, %s20
      %p22 = scmp.eq.s32.totalorder %s21, 0
      %s24 = sadd.s32 %s23, 1
      %s25 = scalar_select %p22, %s23, %s24
      %p28 = pneg %p22
      %p29 = scmp.eq.s32.totalorder %s13, 1
      %p30 = por %p28, %p29
      %p31 = scmp.ne.s32.totalorder %s23, %s26
      %p32 = scmp.eq.s32.totalorder %s13, 0
      %p33 = por %p31, %p32
      %p34 = scmp.ne.s32.totalorder %s23, %s26
      %p35 = scmp.eq.s32.totalorder %s18, 1
      %p36 = por %p34, %p35
      %p37 = scmp.ne.s32.totalorder %s26, %s27
      %p38 = scmp.eq.s32.totalorder %s18, 0
      %p39 = por %p37, %p38
      %p40 = scmp.ne.s32.totalorder %s26, %s27
      %p41 = scmp.eq.s32.totalorder %s19, 1
      %p42 = por %p40, %p41
      %p44 = scmp.ne.s32.totalorder %s27, %s43
      %p45 = scmp.eq.s32.totalorder %s19, 0
      %p46 = por %p44, %p45
      %s47 = ssub.s32 %s13, %s20
      %p48 = scmp.eq.s32.totalorder %s47, 0
      %s50 = sadd.s32 %s49, 1
      %s51 = scalar_select %p48, %s49, %s50
      %p54 = pneg %p48
      %p55 = scmp.eq.s32.totalorder %s13, 1
      %p56 = por %p54, %p55
      %p57 = scmp.ne.s32.totalorder %s49, %s52
      %p58 = scmp.eq.s32.totalorder %s13, 0
      %p59 = por %p57, %p58
      %p60 = scmp.ne.s32.totalorder %s49, %s52
      %p61 = scmp.eq.s32.totalorder %s18, 1
      %p62 = por %p60, %p61
      %p63 = scmp.ne.s32.totalorder %s52, %s53
      %p64 = scmp.eq.s32.totalorder %s18, 0
      %p65 = por %p63, %p64
      %p66 = scmp.ne.s32.totalorder %s52, %s53
      %p67 = scmp.eq.s32.totalorder %s19, 1
      %p68 = por %p66, %p67
      %p70 = scmp.ne.s32.totalorder %s53, %s69
      %p71 = scmp.eq.s32.totalorder %s19, 0
      %p72 = por %p70, %p71
      %p73 = scmp.le.s32.totalorder 1, %s13
      %p74 = scmp.lt.s32.totalorder %s13, 3
      %p75 = pnand %p73, %p74
      %p76 = pneg %p75
      // Predicated region
      $region9: #{tpu_custom_call.1} parent=5 // pred_check
        _
      $region10: #{tpu_custom_call.1} parent=5 // pred_check_branch
        %78 = sbr.rel (%p75) target = $region12
      $region11: #{tpu_custom_call.1} parent=5 // pred_region
        %s79 = ssub.s32 %s13, 1
      $region12: #{tpu_custom_call.1} parent=5 // pred_fallthru
        _
      %p80 = scmp.lt.s32.totalorder %s13, 2
      // Predicated region
      $region13: #{tpu_custom_call.1} parent=5 // pred_check
        %p81 = pneg %p80
      $region14: #{tpu_custom_call.1} parent=5 // pred_check_branch
        %83 = sbr.rel (%p81) target = $region16
      $region15: #{tpu_custom_call.1} parent=5 // pred_region
        // Predicated region
        $region17: #{tpu_custom_call.1} parent=15 // pred_check
          %p84 = pneg %p33
        $region18: #{tpu_custom_call.1} parent=15 // pred_check_branch
          %86 = sbr.rel (%p84) target = $region20
        $region19: #{tpu_custom_call.1} parent=15 // pred_region
          %s87 = sand.u32 %s23, 1
          %s88 = scalar_lea.sflag [#allocation3], %s87
          %s89 = sand.u32 %s23, 1
          %s90 = smul.addr %s89, 8
          %s91 = scalar_lea.vmem [#allocation2], %s90
          %s93 = ssub.s32 128, 128
          %94 = vsyncadd %s88, %s93
          %s95 = smul.addr %s13, 128
          %s96 = scalar_lea.hbm %s0, %s95
          %s98 = sshll.u32 %s91, 4
          %s99 = int_to_ptr.vmem [resolvable:$true] %s98
          %101 = dma.hbm_to_vmem [thread:$0]  %s96, 128, %s99, %s88
        $region20: #{tpu_custom_call.1} parent=15 // pred_fallthru
          _
      $region16: #{tpu_custom_call.1} parent=5 // pred_fallthru
        _
      %p102 = scmp.le.s32.totalorder 1, %s13
      %p103 = scmp.lt.s32.totalorder %s13, 3
      %p104 = pnand %p102, %p103
      %p105 = pneg %p104
      // Predicated region
      $region21: #{tpu_custom_call.1} parent=5 // pred_check
        _
      $region22: #{tpu_custom_call.1} parent=5 // pred_check_branch
        %107 = sbr.rel (%p104) target = $region24
      $region23: #{tpu_custom_call.1} parent=5 // pred_region
        %s108 = ssub.s32 %s13, 1
        %s109 = sand.u32 %s26, 1
        %s110 = scalar_lea.sflag [#allocation3], %s109
        %s111 = sand.u32 %s26, 1
        %s112 = smul.addr %s111, 8
        %s113 = scalar_lea.vmem [#allocation2], %s112
        // Predicated region
        $region25: #{tpu_custom_call.1} parent=23 // pred_check
          %p114 = pneg %p39
        $region26: #{tpu_custom_call.1} parent=23 // pred_check_branch
          %116 = sbr.rel (%p114) target = $region28
        $region27: #{tpu_custom_call.1} parent=23 // pred_region
          %117 = dma.done %s110, 128
        $region28: #{tpu_custom_call.1} parent=23 // pred_fallthru
          _
        %s118 = sand.u32 %s26, 1
        %s119 = scalar_lea.sflag [#allocation3], %s118
        %s120 = sand.u32 %s26, 1
        %s121 = smul.addr %s120, 8
        %s122 = scalar_lea.vmem [#allocation2], %s121
        %p123 = pneg %p39
        %p124 = pneg %p36
        %p125 = pneg %p65
        %p126 = pneg %p62
        %s127 = sand.u32 %s52, 1
        %s128 = scalar_lea.sflag [#allocation4], %s127
        %s129 = sand.u32 %s52, 1
        %s130 = smul.addr %s129, 8
        %s131 = scalar_lea.vmem [#allocation5], %s130
        %v132 = vld [vmem:[%s113] sm:$0xff]
        %133 = vmax.xlane.f32.xlu0 %v132
        %v134 = vpop.xlane.xlu0 %133
        %v135 = vsub.f32 %v132, %v134
        %v137 = vcombine.high %v135, %v135
        %v139 = vunpack.c.l.s4 1966171168
        %v140 = vunpack.c.0.s8 %v139
        %v141 = vlaneseq
        %v142 = vshrl.u32 %v141, 7
        %v143 = vsub.s32 %v140, %v142
        %v144 = vrot.slane %v135, %v143
        %v146 = vunpack.c.l.s4 1966171168
        %v147 = vunpack.c.0.s8 %v146
        %v148 = vlaneseq
        %v149 = vshrl.u32 %v148, 7
        %v150 = vsub.s32 %v147, %v149
        %v151 = vrot.slane %v137, %v150
        %v152 = vcombine.high %v144, %v144
        %v153 = vcombine.high %v151, %v151
        %v155 = vunpack.c.l.s4 1966171168
        %v156 = vunpack.c.0.s8 %v155
        %v157 = vlaneseq
        %v158 = vshrl.u32 %v157, 7
        %v159 = vsub.s32 %v156, %v158
        %v160 = vrot.slane %v144, %v159
        %v162 = vunpack.c.l.s4 1966171168
        %v163 = vunpack.c.0.s8 %v162
        %v164 = vlaneseq
        %v165 = vshrl.u32 %v164, 7
        %v166 = vsub.s32 %v163, %v165
        %v167 = vrot.slane %v151, %v166
        %v169 = vunpack.c.l.s4 1966171168
        %v170 = vunpack.c.0.s8 %v169
        %v171 = vlaneseq
        %v172 = vshrl.u32 %v171, 7
        %v173 = vsub.s32 %v170, %v172
        %v174 = vrot.slane %v152, %v173
        %v176 = vunpack.c.l.s4 1966171168
        %v177 = vunpack.c.0.s8 %v176
        %v178 = vlaneseq
        %v179 = vshrl.u32 %v178, 7
        %v180 = vsub.s32 %v177, %v179
        %v181 = vrot.slane %v153, %v180
        %v182 = vcombine.high %v160, %v160
        %v183 = vcombine.high %v167, %v167
        %v184 = vcombine.high %v174, %v174
        %v185 = vcombine.high %v181, %v181
        %v186 = vlaneseq
        %v187 = vshrl.u32 %v186, 7
        %v188 = vsub.s32 0, %v187
        %v189 = vrot.slane %v135, %v188
        %191 = vbcast.lane.b32.xlu0 %v189, 256
        %v192 = vpop.permute.xlu0 %191
        %s194 = sor.u32 256, 8
        %195 = vbcast.lane.b32.xlu0 %v189, %s194
        %v196 = vpop.permute.xlu0 %195
        %s198 = sor.u32 256, 16
        %199 = vbcast.lane.b32.xlu0 %v189, %s198
        %v200 = vpop.permute.xlu0 %199
        %s202 = sor.u32 256, 24
        %203 = vbcast.lane.b32.xlu0 %v189, %s202
        %v204 = vpop.permute.xlu0 %203
        %s206 = sor.u32 256, 32
        %207 = vbcast.lane.b32.xlu0 %v189, %s206
        %v208 = vpop.permute.xlu0 %207
        %s210 = sor.u32 256, 40
        %211 = vbcast.lane.b32.xlu0 %v189, %s210
        %v212 = vpop.permute.xlu0 %211
        %s214 = sor.u32 256, 48
        %215 = vbcast.lane.b32.xlu0 %v189, %s214
        %v216 = vpop.permute.xlu0 %215
        %s218 = sor.u32 256, 56
        %219 = vbcast.lane.b32.xlu0 %v189, %s218
        %v220 = vpop.permute.xlu0 %219
        %s222 = sor.u32 256, 64
        %223 = vbcast.lane.b32.xlu0 %v189, %s222
        %v224 = vpop.permute.xlu0 %223
        %s226 = sor.u32 256, 72
        %227 = vbcast.lane.b32.xlu0 %v189, %s226
        %v228 = vpop.permute.xlu0 %227
        %s230 = sor.u32 256, 80
        %231 = vbcast.lane.b32.xlu0 %v189, %s230
        %v232 = vpop.permute.xlu0 %231
        %s234 = sor.u32 256, 88
        %235 = vbcast.lane.b32.xlu0 %v189, %s234
        %v236 = vpop.permute.xlu0 %235
        %s238 = sor.u32 256, 96
        %239 = vbcast.lane.b32.xlu0 %v189, %s238
        %v240 = vpop.permute.xlu0 %239
        %s242 = sor.u32 256, 104
        %243 = vbcast.lane.b32.xlu0 %v189, %s242
        %v244 = vpop.permute.xlu0 %243
        %s246 = sor.u32 256, 112
        %247 = vbcast.lane.b32.xlu0 %v189, %s246
        %v248 = vpop.permute.xlu0 %247
        %s250 = sor.u32 256, 120
        %251 = vbcast.lane.b32.xlu0 %v189, %s250
        %v252 = vpop.permute.xlu0 %251
        %v253 = vlaneseq
        %v254 = vshrl.u32 %v253, 7
        %v255 = vsub.s32 1, %v254
        %v256 = vrot.slane %v135, %v255
        %258 = vbcast.lane.b32.xlu0 %v256, 256
        %v259 = vpop.permute.xlu0 %258
        %s261 = sor.u32 256, 8
        %262 = vbcast.lane.b32.xlu0 %v256, %s261
        %v263 = vpop.permute.xlu0 %262
        %s265 = sor.u32 256, 16
        %266 = vbcast.lane.b32.xlu0 %v256, %s265
        %v267 = vpop.permute.xlu0 %266
        %s269 = sor.u32 256, 24
        %270 = vbcast.lane.b32.xlu0 %v256, %s269
        %v271 = vpop.permute.xlu0 %270
        %s273 = sor.u32 256, 32
        %274 = vbcast.lane.b32.xlu0 %v256, %s273
        %v275 = vpop.permute.xlu0 %274
        %s277 = sor.u32 256, 40
        %278 = vbcast.lane.b32.xlu0 %v256, %s277
        %v279 = vpop.permute.xlu0 %278
        %s281 = sor.u32 256, 48
        %282 = vbcast.lane.b32.xlu0 %v256, %s281
        %v283 = vpop.permute.xlu0 %282
        %s285 = sor.u32 256, 56
        %286 = vbcast.lane.b32.xlu0 %v256, %s285
        %v287 = vpop.permute.xlu0 %286
        %s289 = sor.u32 256, 64
        %290 = vbcast.lane.b32.xlu0 %v256, %s289
        %v291 = vpop.permute.xlu0 %290
        %s293 = sor.u32 256, 72
        %294 = vbcast.lane.b32.xlu0 %v256, %s293
        %v295 = vpop.permute.xlu0 %294
        %s297 = sor.u32 256, 80
        %298 = vbcast.lane.b32.xlu0 %v256, %s297
        %v299 = vpop.permute.xlu0 %298
        %s301 = sor.u32 256, 88
        %302 = vbcast.lane.b32.xlu0 %v256, %s301
        %v303 = vpop.permute.xlu0 %302
        %s305 = sor.u32 256, 96
        %306 = vbcast.lane.b32.xlu0 %v256, %s305
        %v307 = vpop.permute.xlu0 %306
        %s309 = sor.u32 256, 104
        %310 = vbcast.lane.b32.xlu0 %v256, %s309
        %v311 = vpop.permute.xlu0 %310
        %s313 = sor.u32 256, 112
        %314 = vbcast.lane.b32.xlu0 %v256, %s313
        %v315 = vpop.permute.xlu0 %314
        %s317 = sor.u32 256, 120
        %318 = vbcast.lane.b32.xlu0 %v256, %s317
        %v319 = vpop.permute.xlu0 %318
        %v320 = vlaneseq
        %v321 = vshrl.u32 %v320, 7
        %v322 = vsub.s32 2, %v321
        %v323 = vrot.slane %v135, %v322
        %325 = vbcast.lane.b32.xlu0 %v323, 256
        %v326 = vpop.permute.xlu0 %325
        %s328 = sor.u32 256, 8
        %329 = vbcast.lane.b32.xlu0 %v323, %s328
        %v330 = vpop.permute.xlu0 %329
        %s332 = sor.u32 256, 16
        %333 = vbcast.lane.b32.xlu0 %v323, %s332
        %v334 = vpop.permute.xlu0 %333
        %s336 = sor.u32 256, 24
        %337 = vbcast.lane.b32.xlu0 %v323, %s336
        %v338 = vpop.permute.xlu0 %337
        %s340 = sor.u32 256, 32
        %341 = vbcast.lane.b32.xlu0 %v323, %s340
        %v342 = vpop.permute.xlu0 %341
        %s344 = sor.u32 256, 40
        %345 = vbcast.lane.b32.xlu0 %v323, %s344
        %v346 = vpop.permute.xlu0 %345
        %s348 = sor.u32 256, 48
        %349 = vbcast.lane.b32.xlu0 %v323, %s348
        %v350 = vpop.permute.xlu0 %349
        %s352 = sor.u32 256, 56
        %353 = vbcast.lane.b32.xlu0 %v323, %s352
        %v354 = vpop.permute.xlu0 %353
        %s356 = sor.u32 256, 64
        %357 = vbcast.lane.b32.xlu0 %v323, %s356
        %v358 = vpop.permute.xlu0 %357
        %s360 = sor.u32 256, 72
        %361 = vbcast.lane.b32.xlu0 %v323, %s360
        %v362 = vpop.permute.xlu0 %361
        %s364 = sor.u32 256, 80
        %365 = vbcast.lane.b32.xlu0 %v323, %s364
        %v366 = vpop.permute.xlu0 %365
        %s368 = sor.u32 256, 88
        %369 = vbcast.lane.b32.xlu0 %v323, %s368
        %v370 = vpop.permute.xlu0 %369
        %s372 = sor.u32 256, 96
        %373 = vbcast.lane.b32.xlu0 %v323, %s372
        %v374 = vpop.permute.xlu0 %373
        %s376 = sor.u32 256, 104
        %377 = vbcast.lane.b32.xlu0 %v323, %s376
        %v378 = vpop.permute.xlu0 %377
        %s380 = sor.u32 256, 112
        %381 = vbcast.lane.b32.xlu0 %v323, %s380
        %v382 = vpop.permute.xlu0 %381
        %s384 = sor.u32 256, 120
        %385 = vbcast.lane.b32.xlu0 %v323, %s384
        %v386 = vpop.permute.xlu0 %385
        %v387 = vlaneseq
        %v388 = vshrl.u32 %v387, 7
        %v389 = vsub.s32 3, %v388
        %v390 = vrot.slane %v135, %v389
        %392 = vbcast.lane.b32.xlu0 %v390, 256
        %v393 = vpop.permute.xlu0 %392
        %s395 = sor.u32 256, 8
        %396 = vbcast.lane.b32.xlu0 %v390, %s395
        %v397 = vpop.permute.xlu0 %396
        %s399 = sor.u32 256, 16
        %400 = vbcast.lane.b32.xlu0 %v390, %s399
        %v401 = vpop.permute.xlu0 %400
        %s403 = sor.u32 256, 24
        %404 = vbcast.lane.b32.xlu0 %v390, %s403
        %v405 = vpop.permute.xlu0 %404
        %s407 = sor.u32 256, 32
        %408 = vbcast.lane.b32.xlu0 %v390, %s407
        %v409 = vpop.permute.xlu0 %408
        %s411 = sor.u32 256, 40
        %412 = vbcast.lane.b32.xlu0 %v390, %s411
        %v413 = vpop.permute.xlu0 %412
        %s415 = sor.u32 256, 48
        %416 = vbcast.lane.b32.xlu0 %v390, %s415
        %v417 = vpop.permute.xlu0 %416
        %s419 = sor.u32 256, 56
        %420 = vbcast.lane.b32.xlu0 %v390, %s419
        %v421 = vpop.permute.xlu0 %420
        %s423 = sor.u32 256, 64
        %424 = vbcast.lane.b32.xlu0 %v390, %s423
        %v425 = vpop.permute.xlu0 %424
        %s427 = sor.u32 256, 72
        %428 = vbcast.lane.b32.xlu0 %v390, %s427
        %v429 = vpop.permute.xlu0 %428
        %s431 = sor.u32 256, 80
        %432 = vbcast.lane.b32.xlu0 %v390, %s431
        %v433 = vpop.permute.xlu0 %432
        %s435 = sor.u32 256, 88
        %436 = vbcast.lane.b32.xlu0 %v390, %s435
        %v437 = vpop.permute.xlu0 %436
        %s439 = sor.u32 256, 96
        %440 = vbcast.lane.b32.xlu0 %v390, %s439
        %v441 = vpop.permute.xlu0 %440
        %s443 = sor.u32 256, 104
        %444 = vbcast.lane.b32.xlu0 %v390, %s443
        %v445 = vpop.permute.xlu0 %444
        %s447 = sor.u32 256, 112
        %448 = vbcast.lane.b32.xlu0 %v390, %s447
        %v449 = vpop.permute.xlu0 %448
        %s451 = sor.u32 256, 120
        %452 = vbcast.lane.b32.xlu0 %v390, %s451
        %v453 = vpop.permute.xlu0 %452
        %v454 = vlaneseq
        %v455 = vshrl.u32 %v454, 7
        %v456 = vsub.s32 4, %v455
        %v457 = vrot.slane %v135, %v456
        %459 = vbcast.lane.b32.xlu0 %v457, 256
        %v460 = vpop.permute.xlu0 %459
        %s462 = sor.u32 256, 8
        %463 = vbcast.lane.b32.xlu0 %v457, %s462
        %v464 = vpop.permute.xlu0 %463
        %s466 = sor.u32 256, 16
        %467 = vbcast.lane.b32.xlu0 %v457, %s466
        %v468 = vpop.permute.xlu0 %467
        %s470 = sor.u32 256, 24
        %471 = vbcast.lane.b32.xlu0 %v457, %s470
        %v472 = vpop.permute.xlu0 %471
        %s474 = sor.u32 256, 32
        %475 = vbcast.lane.b32.xlu0 %v457, %s474
        %v476 = vpop.permute.xlu0 %475
        %s478 = sor.u32 256, 40
        %479 = vbcast.lane.b32.xlu0 %v457, %s478
        %v480 = vpop.permute.xlu0 %479
        %s482 = sor.u32 256, 48
        %483 = vbcast.lane.b32.xlu0 %v457, %s482
        %v484 = vpop.permute.xlu0 %483
        %s486 = sor.u32 256, 56
        %487 = vbcast.lane.b32.xlu0 %v457, %s486
        %v488 = vpop.permute.xlu0 %487
        %s490 = sor.u32 256, 64
        %491 = vbcast.lane.b32.xlu0 %v457, %s490
        %v492 = vpop.permute.xlu0 %491
        %s494 = sor.u32 256, 72
        %495 = vbcast.lane.b32.xlu0 %v457, %s494
        %v496 = vpop.permute.xlu0 %495
        %s498 = sor.u32 256, 80
        %499 = vbcast.lane.b32.xlu0 %v457, %s498
        %v500 = vpop.permute.xlu0 %499
        %s502 = sor.u32 256, 88
        %503 = vbcast.lane.b32.xlu0 %v457, %s502
        %v504 = vpop.permute.xlu0 %503
        %s506 = sor.u32 256, 96
        %507 = vbcast.lane.b32.xlu0 %v457, %s506
        %v508 = vpop.permute.xlu0 %507
        %s510 = sor.u32 256, 104
        %511 = vbcast.lane.b32.xlu0 %v457, %s510
        %v512 = vpop.permute.xlu0 %511
        %s514 = sor.u32 256, 112
        %515 = vbcast.lane.b32.xlu0 %v457, %s514
        %v516 = vpop.permute.xlu0 %515
        %s518 = sor.u32 256, 120
        %519 = vbcast.lane.b32.xlu0 %v457, %s518
        %v520 = vpop.permute.xlu0 %519
        %v521 = vlaneseq
        %v522 = vshrl.u32 %v521, 7
        %v523 = vsub.s32 5, %v522
        %v524 = vrot.slane %v135, %v523
        %526 = vbcast.lane.b32.xlu0 %v524, 256
        %v527 = vpop.permute.xlu0 %526
        %s529 = sor.u32 256, 8
        %530 = vbcast.lane.b32.xlu0 %v524, %s529
        %v531 = vpop.permute.xlu0 %530
        %s533 = sor.u32 256, 16
        %534 = vbcast.lane.b32.xlu0 %v524, %s533
        %v535 = vpop.permute.xlu0 %534
        %s537 = sor.u32 256, 24
        %538 = vbcast.lane.b32.xlu0 %v524, %s537
        %v539 = vpop.permute.xlu0 %538
        %s541 = sor.u32 256, 32
        %542 = vbcast.lane.b32.xlu0 %v524, %s541
        %v543 = vpop.permute.xlu0 %542
        %s545 = sor.u32 256, 40
        %546 = vbcast.lane.b32.xlu0 %v524, %s545
        %v547 = vpop.permute.xlu0 %546
        %s549 = sor.u32 256, 48
        %550 = vbcast.lane.b32.xlu0 %v524, %s549
        %v551 = vpop.permute.xlu0 %550
        %s553 = sor.u32 256, 56
        %554 = vbcast.lane.b32.xlu0 %v524, %s553
        %v555 = vpop.permute.xlu0 %554
        %s557 = sor.u32 256, 64
        %558 = vbcast.lane.b32.xlu0 %v524, %s557
        %v559 = vpop.permute.xlu0 %558
        %s561 = sor.u32 256, 72
        %562 = vbcast.lane.b32.xlu0 %v524, %s561
        %v563 = vpop.permute.xlu0 %562
        %s565 = sor.u32 256, 80
        %566 = vbcast.lane.b32.xlu0 %v524, %s565
        %v567 = vpop.permute.xlu0 %566
        %s569 = sor.u32 256, 88
        %570 = vbcast.lane.b32.xlu0 %v524, %s569
        %v571 = vpop.permute.xlu0 %570
        %s573 = sor.u32 256, 96
        %574 = vbcast.lane.b32.xlu0 %v524, %s573
        %v575 = vpop.permute.xlu0 %574
        %s577 = sor.u32 256, 104
        %578 = vbcast.lane.b32.xlu0 %v524, %s577
        %v579 = vpop.permute.xlu0 %578
        %s581 = sor.u32 256, 112
        %582 = vbcast.lane.b32.xlu0 %v524, %s581
        %v583 = vpop.permute.xlu0 %582
        %s585 = sor.u32 256, 120
        %586 = vbcast.lane.b32.xlu0 %v524, %s585
        %v587 = vpop.permute.xlu0 %586
        %v588 = vlaneseq
        %v589 = vshrl.u32 %v588, 7
        %v590 = vsub.s32 6, %v589
        %v591 = vrot.slane %v135, %v590
        %593 = vbcast.lane.b32.xlu0 %v591, 256
        %v594 = vpop.permute.xlu0 %593
        %s596 = sor.u32 256, 8
        %597 = vbcast.lane.b32.xlu0 %v591, %s596
        %v598 = vpop.permute.xlu0 %597
        %s600 = sor.u32 256, 16
        %601 = vbcast.lane.b32.xlu0 %v591, %s600
        %v602 = vpop.permute.xlu0 %601
        %s604 = sor.u32 256, 24
        %605 = vbcast.lane.b32.xlu0 %v591, %s604
        %v606 = vpop.permute.xlu0 %605
        %s608 = sor.u32 256, 32
        %609 = vbcast.lane.b32.xlu0 %v591, %s608
        %v610 = vpop.permute.xlu0 %609
        %s612 = sor.u32 256, 40
        %613 = vbcast.lane.b32.xlu0 %v591, %s612
        %v614 = vpop.permute.xlu0 %613
        %s616 = sor.u32 256, 48
        %617 = vbcast.lane.b32.xlu0 %v591, %s616
        %v618 = vpop.permute.xlu0 %617
        %s620 = sor.u32 256, 56
        %621 = vbcast.lane.b32.xlu0 %v591, %s620
        %v622 = vpop.permute.xlu0 %621
        %s624 = sor.u32 256, 64
        %625 = vbcast.lane.b32.xlu0 %v591, %s624
        %v626 = vpop.permute.xlu0 %625
        %s628 = sor.u32 256, 72
        %629 = vbcast.lane.b32.xlu0 %v591, %s628
        %v630 = vpop.permute.xlu0 %629
        %s632 = sor.u32 256, 80
        %633 = vbcast.lane.b32.xlu0 %v591, %s632
        %v634 = vpop.permute.xlu0 %633
        %s636 = sor.u32 256, 88
        %637 = vbcast.lane.b32.xlu0 %v591, %s636
        %v638 = vpop.permute.xlu0 %637
        %s640 = sor.u32 256, 96
        %641 = vbcast.lane.b32.xlu0 %v591, %s640
        %v642 = vpop.permute.xlu0 %641
        %s644 = sor.u32 256, 104
        %645 = vbcast.lane.b32.xlu0 %v591, %s644
        %v646 = vpop.permute.xlu0 %645
        %s648 = sor.u32 256, 112
        %649 = vbcast.lane.b32.xlu0 %v591, %s648
        %v650 = vpop.permute.xlu0 %649
        %s652 = sor.u32 256, 120
        %653 = vbcast.lane.b32.xlu0 %v591, %s652
        %v654 = vpop.permute.xlu0 %653
        %v655 = vlaneseq
        %v656 = vshrl.u32 %v655, 7
        %v657 = vsub.s32 7, %v656
        %v658 = vrot.slane %v135, %v657
        %660 = vbcast.lane.b32.xlu0 %v658, 256
        %v661 = vpop.permute.xlu0 %660
        %s663 = sor.u32 256, 8
        %664 = vbcast.lane.b32.xlu0 %v658, %s663
        %v665 = vpop.permute.xlu0 %664
        %s667 = sor.u32 256, 16
        %668 = vbcast.lane.b32.xlu0 %v658, %s667
        %v669 = vpop.permute.xlu0 %668
        %s671 = sor.u32 256, 24
        %672 = vbcast.lane.b32.xlu0 %v658, %s671
        %v673 = vpop.permute.xlu0 %672
        %s675 = sor.u32 256, 32
        %676 = vbcast.lane.b32.xlu0 %v658, %s675
        %v677 = vpop.permute.xlu0 %676
        %s679 = sor.u32 256, 40
        %680 = vbcast.lane.b32.xlu0 %v658, %s679
        %v681 = vpop.permute.xlu0 %680
        %s683 = sor.u32 256, 48
        %684 = vbcast.lane.b32.xlu0 %v658, %s683
        %v685 = vpop.permute.xlu0 %684
        %s687 = sor.u32 256, 56
        %688 = vbcast.lane.b32.xlu0 %v658, %s687
        %v689 = vpop.permute.xlu0 %688
        %s691 = sor.u32 256, 64
        %692 = vbcast.lane.b32.xlu0 %v658, %s691
        %v693 = vpop.permute.xlu0 %692
        %s695 = sor.u32 256, 72
        %696 = vbcast.lane.b32.xlu0 %v658, %s695
        %v697 = vpop.permute.xlu0 %696
        %s699 = sor.u32 256, 80
        %700 = vbcast.lane.b32.xlu0 %v658, %s699
        %v701 = vpop.permute.xlu0 %700
        %s703 = sor.u32 256, 88
        %704 = vbcast.lane.b32.xlu0 %v658, %s703
        %v705 = vpop.permute.xlu0 %704
        %s707 = sor.u32 256, 96
        %708 = vbcast.lane.b32.xlu0 %v658, %s707
        %v709 = vpop.permute.xlu0 %708
        %s711 = sor.u32 256, 104
        %712 = vbcast.lane.b32.xlu0 %v658, %s711
        %v713 = vpop.permute.xlu0 %712
        %s715 = sor.u32 256, 112
        %716 = vbcast.lane.b32.xlu0 %v658, %s715
        %v717 = vpop.permute.xlu0 %716
        %s719 = sor.u32 256, 120
        %720 = vbcast.lane.b32.xlu0 %v658, %s719
        %v721 = vpop.permute.xlu0 %720
        %v722 = vlaneseq
        %v723 = vshrl.u32 %v722, 7
        %v724 = vsub.s32 0, %v723
        %v725 = vrot.slane %v160, %v724
        %v726 = vlaneseq
        %v727 = vshrl.u32 %v726, 7
        %v728 = vsub.s32 0, %v727
        %v729 = vrot.slane %v174, %v728
        %v730 = vlaneseq
        %v731 = vshrl.u32 %v730, 7
        %v732 = vsub.s32 0, %v731
        %v733 = vrot.slane %v182, %v732
        %v734 = vlaneseq
        %v735 = vshrl.u32 %v734, 7
        %v736 = vsub.s32 0, %v735
        %v737 = vrot.slane %v184, %v736
        %v738 = vlaneseq
        %v739 = vshrl.u32 %v738, 7
        %v740 = vsub.s32 0, %v739
        %v741 = vrot.slane %v167, %v740
        %v742 = vlaneseq
        %v743 = vshrl.u32 %v742, 7
        %v744 = vsub.s32 0, %v743
        %v745 = vrot.slane %v181, %v744
        %v746 = vlaneseq
        %v747 = vshrl.u32 %v746, 7
        %v748 = vsub.s32 0, %v747
        %v749 = vrot.slane %v183, %v748
        %v750 = vlaneseq
        %v751 = vshrl.u32 %v750, 7
        %v752 = vsub.s32 0, %v751
        %v753 = vrot.slane %v185, %v752
        %vm762 = vcmp.ge.f32.partialorder %v725, %v192
        %vm763 = vcmp.ge.f32.partialorder %v725, %v196
        %vm764 = vcmp.ge.f32.partialorder %v725, %v200
        %vm765 = vcmp.ge.f32.partialorder %v725, %v204
        %vm766 = vcmp.ge.f32.partialorder %v725, %v208
        %vm767 = vcmp.ge.f32.partialorder %v725, %v212
        %vm768 = vcmp.ge.f32.partialorder %v725, %v216
        %vm769 = vcmp.ge.f32.partialorder %v725, %v220
        %vm770 = vcmp.ge.f32.partialorder %v725, %v224
        %vm771 = vcmp.ge.f32.partialorder %v725, %v228
        %vm772 = vcmp.ge.f32.partialorder %v725, %v232
        %vm773 = vcmp.ge.f32.partialorder %v725, %v236
        %vm774 = vcmp.ge.f32.partialorder %v725, %v240
        %vm775 = vcmp.ge.f32.partialorder %v725, %v244
        %vm776 = vcmp.ge.f32.partialorder %v725, %v248
        %vm777 = vcmp.ge.f32.partialorder %v725, %v252
        %vm778 = vcmp.ge.f32.partialorder %v729, %v259
        %vm779 = vcmp.ge.f32.partialorder %v729, %v263
        %vm780 = vcmp.ge.f32.partialorder %v729, %v267
        %vm781 = vcmp.ge.f32.partialorder %v729, %v271
        %vm782 = vcmp.ge.f32.partialorder %v729, %v275
        %vm783 = vcmp.ge.f32.partialorder %v729, %v279
        %vm784 = vcmp.ge.f32.partialorder %v729, %v283
        %vm785 = vcmp.ge.f32.partialorder %v729, %v287
        %vm786 = vcmp.ge.f32.partialorder %v729, %v291
        %vm787 = vcmp.ge.f32.partialorder %v729, %v295
        %vm788 = vcmp.ge.f32.partialorder %v729, %v299
        %vm789 = vcmp.ge.f32.partialorder %v729, %v303
        %vm790 = vcmp.ge.f32.partialorder %v729, %v307
        %vm791 = vcmp.ge.f32.partialorder %v729, %v311
        %vm792 = vcmp.ge.f32.partialorder %v729, %v315
        %vm793 = vcmp.ge.f32.partialorder %v729, %v319
        %vm794 = vcmp.ge.f32.partialorder %v733, %v326
        %vm795 = vcmp.ge.f32.partialorder %v733, %v330
        %vm796 = vcmp.ge.f32.partialorder %v733, %v334
        %vm797 = vcmp.ge.f32.partialorder %v733, %v338
        %vm798 = vcmp.ge.f32.partialorder %v733, %v342
        %vm799 = vcmp.ge.f32.partialorder %v733, %v346
        %vm800 = vcmp.ge.f32.partialorder %v733, %v350
        %vm801 = vcmp.ge.f32.partialorder %v733, %v354
        %vm802 = vcmp.ge.f32.partialorder %v733, %v358
        %vm803 = vcmp.ge.f32.partialorder %v733, %v362
        %vm804 = vcmp.ge.f32.partialorder %v733, %v366
        %vm805 = vcmp.ge.f32.partialorder %v733, %v370
        %vm806 = vcmp.ge.f32.partialorder %v733, %v374
        %vm807 = vcmp.ge.f32.partialorder %v733, %v378
        %vm808 = vcmp.ge.f32.partialorder %v733, %v382
        %vm809 = vcmp.ge.f32.partialorder %v733, %v386
        %vm810 = vcmp.ge.f32.partialorder %v737, %v393
        %vm811 = vcmp.ge.f32.partialorder %v737, %v397
        %vm812 = vcmp.ge.f32.partialorder %v737, %v401
        %vm813 = vcmp.ge.f32.partialorder %v737, %v405
        %vm814 = vcmp.ge.f32.partialorder %v737, %v409
        %vm815 = vcmp.ge.f32.partialorder %v737, %v413
        %vm816 = vcmp.ge.f32.partialorder %v737, %v417
        %vm817 = vcmp.ge.f32.partialorder %v737, %v421
        %vm818 = vcmp.ge.f32.partialorder %v737, %v425
        %vm819 = vcmp.ge.f32.partialorder %v737, %v429
        %vm820 = vcmp.ge.f32.partialorder %v737, %v433
        %vm821 = vcmp.ge.f32.partialorder %v737, %v437
        %vm822 = vcmp.ge.f32.partialorder %v737, %v441
        %vm823 = vcmp.ge.f32.partialorder %v737, %v445
        %vm824 = vcmp.ge.f32.partialorder %v737, %v449
        %vm825 = vcmp.ge.f32.partialorder %v737, %v453
        %vm826 = vcmp.ge.f32.partialorder %v741, %v460
        %vm827 = vcmp.ge.f32.partialorder %v741, %v464
        %vm828 = vcmp.ge.f32.partialorder %v741, %v468
        %vm829 = vcmp.ge.f32.partialorder %v741, %v472
        %vm830 = vcmp.ge.f32.partialorder %v741, %v476
        %vm831 = vcmp.ge.f32.partialorder %v741, %v480
        %vm832 = vcmp.ge.f32.partialorder %v741, %v484
        %vm833 = vcmp.ge.f32.partialorder %v741, %v488
        %vm834 = vcmp.ge.f32.partialorder %v741, %v492
        %vm835 = vcmp.ge.f32.partialorder %v741, %v496
        %vm836 = vcmp.ge.f32.partialorder %v741, %v500
        %vm837 = vcmp.ge.f32.partialorder %v741, %v504
        %vm838 = vcmp.ge.f32.partialorder %v741, %v508
        %vm839 = vcmp.ge.f32.partialorder %v741, %v512
        %vm840 = vcmp.ge.f32.partialorder %v741, %v516
        %vm841 = vcmp.ge.f32.partialorder %v741, %v520
        %vm842 = vcmp.ge.f32.partialorder %v745, %v527
        %vm843 = vcmp.ge.f32.partialorder %v745, %v531
        %vm844 = vcmp.ge.f32.partialorder %v745, %v535
        %vm845 = vcmp.ge.f32.partialorder %v745, %v539
        %vm846 = vcmp.ge.f32.partialorder %v745, %v543
        %vm847 = vcmp.ge.f32.partialorder %v745, %v547
        %vm848 = vcmp.ge.f32.partialorder %v745, %v551
        %vm849 = vcmp.ge.f32.partialorder %v745, %v555
        %vm850 = vcmp.ge.f32.partialorder %v745, %v559
        %vm851 = vcmp.ge.f32.partialorder %v745, %v563
        %vm852 = vcmp.ge.f32.partialorder %v745, %v567
        %vm853 = vcmp.ge.f32.partialorder %v745, %v571
        %vm854 = vcmp.ge.f32.partialorder %v745, %v575
        %vm855 = vcmp.ge.f32.partialorder %v745, %v579
        %vm856 = vcmp.ge.f32.partialorder %v745, %v583
        %vm857 = vcmp.ge.f32.partialorder %v745, %v587
        %vm858 = vcmp.ge.f32.partialorder %v749, %v594
        %vm859 = vcmp.ge.f32.partialorder %v749, %v598
        %vm860 = vcmp.ge.f32.partialorder %v749, %v602
        %vm861 = vcmp.ge.f32.partialorder %v749, %v606
        %vm862 = vcmp.ge.f32.partialorder %v749, %v610
        %vm863 = vcmp.ge.f32.partialorder %v749, %v614
        %vm864 = vcmp.ge.f32.partialorder %v749, %v618
        %vm865 = vcmp.ge.f32.partialorder %v749, %v622
        %vm866 = vcmp.ge.f32.partialorder %v749, %v626
        %vm867 = vcmp.ge.f32.partialorder %v749, %v630
        %vm868 = vcmp.ge.f32.partialorder %v749, %v634
        %vm869 = vcmp.ge.f32.partialorder %v749, %v638
        %vm870 = vcmp.ge.f32.partialorder %v749, %v642
        %vm871 = vcmp.ge.f32.partialorder %v749, %v646
        %vm872 = vcmp.ge.f32.partialorder %v749, %v650
        %vm873 = vcmp.ge.f32.partialorder %v749, %v654
        %vm874 = vcmp.ge.f32.partialorder %v753, %v661
        %vm875 = vcmp.ge.f32.partialorder %v753, %v665
        %vm876 = vcmp.ge.f32.partialorder %v753, %v669
        %vm877 = vcmp.ge.f32.partialorder %v753, %v673
        %vm878 = vcmp.ge.f32.partialorder %v753, %v677
        %vm879 = vcmp.ge.f32.partialorder %v753, %v681
        %vm880 = vcmp.ge.f32.partialorder %v753, %v685
        %vm881 = vcmp.ge.f32.partialorder %v753, %v689
        %vm882 = vcmp.ge.f32.partialorder %v753, %v693
        %vm883 = vcmp.ge.f32.partialorder %v753, %v697
        %vm884 = vcmp.ge.f32.partialorder %v753, %v701
        %vm885 = vcmp.ge.f32.partialorder %v753, %v705
        %vm886 = vcmp.ge.f32.partialorder %v753, %v709
        %vm887 = vcmp.ge.f32.partialorder %v753, %v713
        %vm888 = vcmp.ge.f32.partialorder %v753, %v717
        %vm889 = vcmp.ge.f32.partialorder %v753, %v721
        %v890 = vsel %vm762, 1, 0
        %v891 = vsel %vm763, 1, 0
        %v892 = vsel %vm764, 1, 0
        %v893 = vsel %vm765, 1, 0
        %v894 = vsel %vm766, 1, 0
        %v895 = vsel %vm767, 1, 0
        %v896 = vsel %vm768, 1, 0
        %v897 = vsel %vm769, 1, 0
        %v898 = vsel %vm770, 1, 0
        %v899 = vsel %vm771, 1, 0
        %v900 = vsel %vm772, 1, 0
        %v901 = vsel %vm773, 1, 0
        %v902 = vsel %vm774, 1, 0
        %v903 = vsel %vm775, 1, 0
        %v904 = vsel %vm776, 1, 0
        %v905 = vsel %vm777, 1, 0
        %v906 = vsel %vm778, 1, 0
        %v907 = vsel %vm779, 1, 0
        %v908 = vsel %vm780, 1, 0
        %v909 = vsel %vm781, 1, 0
        %v910 = vsel %vm782, 1, 0
        %v911 = vsel %vm783, 1, 0
        %v912 = vsel %vm784, 1, 0
        %v913 = vsel %vm785, 1, 0
        %v914 = vsel %vm786, 1, 0
        %v915 = vsel %vm787, 1, 0
        %v916 = vsel %vm788, 1, 0
        %v917 = vsel %vm789, 1, 0
        %v918 = vsel %vm790, 1, 0
        %v919 = vsel %vm791, 1, 0
        %v920 = vsel %vm792, 1, 0
        %v921 = vsel %vm793, 1, 0
        %v922 = vsel %vm794, 1, 0
        %v923 = vsel %vm795, 1, 0
        %v924 = vsel %vm796, 1, 0
        %v925 = vsel %vm797, 1, 0
        %v926 = vsel %vm798, 1, 0
        %v927 = vsel %vm799, 1, 0
        %v928 = vsel %vm800, 1, 0
        %v929 = vsel %vm801, 1, 0
        %v930 = vsel %vm802, 1, 0
        %v931 = vsel %vm803, 1, 0
        %v932 = vsel %vm804, 1, 0
        %v933 = vsel %vm805, 1, 0
        %v934 = vsel %vm806, 1, 0
        %v935 = vsel %vm807, 1, 0
        %v936 = vsel %vm808, 1, 0
        %v937 = vsel %vm809, 1, 0
        %v938 = vsel %vm810, 1, 0
        %v939 = vsel %vm811, 1, 0
        %v940 = vsel %vm812, 1, 0
        %v941 = vsel %vm813, 1, 0
        %v942 = vsel %vm814, 1, 0
        %v943 = vsel %vm815, 1, 0
        %v944 = vsel %vm816, 1, 0
        %v945 = vsel %vm817, 1, 0
        %v946 = vsel %vm818, 1, 0
        %v947 = vsel %vm819, 1, 0
        %v948 = vsel %vm820, 1, 0
        %v949 = vsel %vm821, 1, 0
        %v950 = vsel %vm822, 1, 0
        %v951 = vsel %vm823, 1, 0
        %v952 = vsel %vm824, 1, 0
        %v953 = vsel %vm825, 1, 0
        %v954 = vsel %vm826, 1, 0
        %v955 = vsel %vm827, 1, 0
        %v956 = vsel %vm828, 1, 0
        %v957 = vsel %vm829, 1, 0
        %v958 = vsel %vm830, 1, 0
        %v959 = vsel %vm831, 1, 0
        %v960 = vsel %vm832, 1, 0
        %v961 = vsel %vm833, 1, 0
        %v962 = vsel %vm834, 1, 0
        %v963 = vsel %vm835, 1, 0
        %v964 = vsel %vm836, 1, 0
        %v965 = vsel %vm837, 1, 0
        %v966 = vsel %vm838, 1, 0
        %v967 = vsel %vm839, 1, 0
        %v968 = vsel %vm840, 1, 0
        %v969 = vsel %vm841, 1, 0
        %v970 = vsel %vm842, 1, 0
        %v971 = vsel %vm843, 1, 0
        %v972 = vsel %vm844, 1, 0
        %v973 = vsel %vm845, 1, 0
        %v974 = vsel %vm846, 1, 0
        %v975 = vsel %vm847, 1, 0
        %v976 = vsel %vm848, 1, 0
        %v977 = vsel %vm849, 1, 0
        %v978 = vsel %vm850, 1, 0
        %v979 = vsel %vm851, 1, 0
        %v980 = vsel %vm852, 1, 0
        %v981 = vsel %vm853, 1, 0
        %v982 = vsel %vm854, 1, 0
        %v983 = vsel %vm855, 1, 0
        %v984 = vsel %vm856, 1, 0
        %v985 = vsel %vm857, 1, 0
        %v986 = vsel %vm858, 1, 0
        %v987 = vsel %vm859, 1, 0
        %v988 = vsel %vm860, 1, 0
        %v989 = vsel %vm861, 1, 0
        %v990 = vsel %vm862, 1, 0
        %v991 = vsel %vm863, 1, 0
        %v992 = vsel %vm864, 1, 0
        %v993 = vsel %vm865, 1, 0
        %v994 = vsel %vm866, 1, 0
        %v995 = vsel %vm867, 1, 0
        %v996 = vsel %vm868, 1, 0
        %v997 = vsel %vm869, 1, 0
        %v998 = vsel %vm870, 1, 0
        %v999 = vsel %vm871, 1, 0
        %v1000 = vsel %vm872, 1, 0
        %v1001 = vsel %vm873, 1, 0
        %v1002 = vsel %vm874, 1, 0
        %v1003 = vsel %vm875, 1, 0
        %v1004 = vsel %vm876, 1, 0
        %v1005 = vsel %vm877, 1, 0
        %v1006 = vsel %vm878, 1, 0
        %v1007 = vsel %vm879, 1, 0
        %v1008 = vsel %vm880, 1, 0
        %v1009 = vsel %vm881, 1, 0
        %v1010 = vsel %vm882, 1, 0
        %v1011 = vsel %vm883, 1, 0
        %v1012 = vsel %vm884, 1, 0
        %v1013 = vsel %vm885, 1, 0
        %v1014 = vsel %vm886, 1, 0
        %v1015 = vsel %vm887, 1, 0
        %v1016 = vsel %vm888, 1, 0
        %v1017 = vsel %vm889, 1, 0
        %v1018 = vcvt.s32.f32 %v890
        %v1019 = vcvt.s32.f32 %v891
        %v1020 = vcvt.s32.f32 %v892
        %v1021 = vcvt.s32.f32 %v893
        %v1022 = vcvt.s32.f32 %v894
        %v1023 = vcvt.s32.f32 %v895
        %v1024 = vcvt.s32.f32 %v896
        %v1025 = vcvt.s32.f32 %v897
        %v1026 = vcvt.s32.f32 %v898
        %v1027 = vcvt.s32.f32 %v899
        %v1028 = vcvt.s32.f32 %v900
        %v1029 = vcvt.s32.f32 %v901
        %v1030 = vcvt.s32.f32 %v902
        %v1031 = vcvt.s32.f32 %v903
        %v1032 = vcvt.s32.f32 %v904
        %v1033 = vcvt.s32.f32 %v905
        %v1034 = vcvt.s32.f32 %v906
        %v1035 = vcvt.s32.f32 %v907
        %v1036 = vcvt.s32.f32 %v908
        %v1037 = vcvt.s32.f32 %v909
        %v1038 = vcvt.s32.f32 %v910
        %v1039 = vcvt.s32.f32 %v911
        %v1040 = vcvt.s32.f32 %v912
        %v1041 = vcvt.s32.f32 %v913
        %v1042 = vcvt.s32.f32 %v914
        %v1043 = vcvt.s32.f32 %v915
        %v1044 = vcvt.s32.f32 %v916
        %v1045 = vcvt.s32.f32 %v917
        %v1046 = vcvt.s32.f32 %v918
        %v1047 = vcvt.s32.f32 %v919
        %v1048 = vcvt.s32.f32 %v920
        %v1049 = vcvt.s32.f32 %v921
        %v1050 = vcvt.s32.f32 %v922
        %v1051 = vcvt.s32.f32 %v923
        %v1052 = vcvt.s32.f32 %v924
        %v1053 = vcvt.s32.f32 %v925
        %v1054 = vcvt.s32.f32 %v926
        %v1055 = vcvt.s32.f32 %v927
        %v1056 = vcvt.s32.f32 %v928
        %v1057 = vcvt.s32.f32 %v929
        %v1058 = vcvt.s32.f32 %v930
        %v1059 = vcvt.s32.f32 %v931
        %v1060 = vcvt.s32.f32 %v932
        %v1061 = vcvt.s32.f32 %v933
        %v1062 = vcvt.s32.f32 %v934
        %v1063 = vcvt.s32.f32 %v935
        %v1064 = vcvt.s32.f32 %v936
        %v1065 = vcvt.s32.f32 %v937
        %v1066 = vcvt.s32.f32 %v938
        %v1067 = vcvt.s32.f32 %v939
        %v1068 = vcvt.s32.f32 %v940
        %v1069 = vcvt.s32.f32 %v941
        %v1070 = vcvt.s32.f32 %v942
        %v1071 = vcvt.s32.f32 %v943
        %v1072 = vcvt.s32.f32 %v944
        %v1073 = vcvt.s32.f32 %v945
        %v1074 = vcvt.s32.f32 %v946
        %v1075 = vcvt.s32.f32 %v947
        %v1076 = vcvt.s32.f32 %v948
        %v1077 = vcvt.s32.f32 %v949
        %v1078 = vcvt.s32.f32 %v950
        %v1079 = vcvt.s32.f32 %v951
        %v1080 = vcvt.s32.f32 %v952
        %v1081 = vcvt.s32.f32 %v953
        %v1082 = vcvt.s32.f32 %v954
        %v1083 = vcvt.s32.f32 %v955
        %v1084 = vcvt.s32.f32 %v956
        %v1085 = vcvt.s32.f32 %v957
        %v1086 = vcvt.s32.f32 %v958
        %v1087 = vcvt.s32.f32 %v959
        %v1088 = vcvt.s32.f32 %v960
        %v1089 = vcvt.s32.f32 %v961
        %v1090 = vcvt.s32.f32 %v962
        %v1091 = vcvt.s32.f32 %v963
        %v1092 = vcvt.s32.f32 %v964
        %v1093 = vcvt.s32.f32 %v965
        %v1094 = vcvt.s32.f32 %v966
        %v1095 = vcvt.s32.f32 %v967
        %v1096 = vcvt.s32.f32 %v968
        %v1097 = vcvt.s32.f32 %v969
        %v1098 = vcvt.s32.f32 %v970
        %v1099 = vcvt.s32.f32 %v971
        %v1100 = vcvt.s32.f32 %v972
        %v1101 = vcvt.s32.f32 %v973
        %v1102 = vcvt.s32.f32 %v974
        %v1103 = vcvt.s32.f32 %v975
        %v1104 = vcvt.s32.f32 %v976
        %v1105 = vcvt.s32.f32 %v977
        %v1106 = vcvt.s32.f32 %v978
        %v1107 = vcvt.s32.f32 %v979
        %v1108 = vcvt.s32.f32 %v980
        %v1109 = vcvt.s32.f32 %v981
        %v1110 = vcvt.s32.f32 %v982
        %v1111 = vcvt.s32.f32 %v983
        %v1112 = vcvt.s32.f32 %v984
        %v1113 = vcvt.s32.f32 %v985
        %v1114 = vcvt.s32.f32 %v986
        %v1115 = vcvt.s32.f32 %v987
        %v1116 = vcvt.s32.f32 %v988
        %v1117 = vcvt.s32.f32 %v989
        %v1118 = vcvt.s32.f32 %v990
        %v1119 = vcvt.s32.f32 %v991
        %v1120 = vcvt.s32.f32 %v992
        %v1121 = vcvt.s32.f32 %v993
        %v1122 = vcvt.s32.f32 %v994
        %v1123 = vcvt.s32.f32 %v995
        %v1124 = vcvt.s32.f32 %v996
        %v1125 = vcvt.s32.f32 %v997
        %v1126 = vcvt.s32.f32 %v998
        %v1127 = vcvt.s32.f32 %v999
        %v1128 = vcvt.s32.f32 %v1000
        %v1129 = vcvt.s32.f32 %v1001
        %v1130 = vcvt.s32.f32 %v1002
        %v1131 = vcvt.s32.f32 %v1003
        %v1132 = vcvt.s32.f32 %v1004
        %v1133 = vcvt.s32.f32 %v1005
        %v1134 = vcvt.s32.f32 %v1006
        %v1135 = vcvt.s32.f32 %v1007
        %v1136 = vcvt.s32.f32 %v1008
        %v1137 = vcvt.s32.f32 %v1009
        %v1138 = vcvt.s32.f32 %v1010
        %v1139 = vcvt.s32.f32 %v1011
        %v1140 = vcvt.s32.f32 %v1012
        %v1141 = vcvt.s32.f32 %v1013
        %v1142 = vcvt.s32.f32 %v1014
        %v1143 = vcvt.s32.f32 %v1015
        %v1144 = vcvt.s32.f32 %v1016
        %v1145 = vcvt.s32.f32 %v1017
        %1146 = vadd.xlane.f32.xlu0 %v1018
        %v1147 = vpop.xlane.xlu0 %1146
        %1148 = vadd.xlane.f32.xlu0 %v1019
        %v1149 = vpop.xlane.xlu0 %1148
        %1150 = vadd.xlane.f32.xlu0 %v1020
        %v1151 = vpop.xlane.xlu0 %1150
        %1152 = vadd.xlane.f32.xlu0 %v1021
        %v1153 = vpop.xlane.xlu0 %1152
        %1154 = vadd.xlane.f32.xlu0 %v1022
        %v1155 = vpop.xlane.xlu0 %1154
        %1156 = vadd.xlane.f32.xlu0 %v1023
        %v1157 = vpop.xlane.xlu0 %1156
        %1158 = vadd.xlane.f32.xlu0 %v1024
        %v1159 = vpop.xlane.xlu0 %1158
        %1160 = vadd.xlane.f32.xlu0 %v1025
        %v1161 = vpop.xlane.xlu0 %1160
        %1162 = vadd.xlane.f32.xlu0 %v1026
        %v1163 = vpop.xlane.xlu0 %1162
        %1164 = vadd.xlane.f32.xlu0 %v1027
        %v1165 = vpop.xlane.xlu0 %1164
        %1166 = vadd.xlane.f32.xlu0 %v1028
        %v1167 = vpop.xlane.xlu0 %1166
        %1168 = vadd.xlane.f32.xlu0 %v1029
        %v1169 = vpop.xlane.xlu0 %1168
        %1170 = vadd.xlane.f32.xlu0 %v1030
        %v1171 = vpop.xlane.xlu0 %1170
        %1172 = vadd.xlane.f32.xlu0 %v1031
        %v1173 = vpop.xlane.xlu0 %1172
        %1174 = vadd.xlane.f32.xlu0 %v1032
        %v1175 = vpop.xlane.xlu0 %1174
        %1176 = vadd.xlane.f32.xlu0 %v1033
        %v1177 = vpop.xlane.xlu0 %1176
        %1178 = vadd.xlane.f32.xlu0 %v1034
        %v1179 = vpop.xlane.xlu0 %1178
        %1180 = vadd.xlane.f32.xlu0 %v1035
        %v1181 = vpop.xlane.xlu0 %1180
        %1182 = vadd.xlane.f32.xlu0 %v1036
        %v1183 = vpop.xlane.xlu0 %1182
        %1184 = vadd.xlane.f32.xlu0 %v1037
        %v1185 = vpop.xlane.xlu0 %1184
        %1186 = vadd.xlane.f32.xlu0 %v1038
        %v1187 = vpop.xlane.xlu0 %1186
        %1188 = vadd.xlane.f32.xlu0 %v1039
        %v1189 = vpop.xlane.xlu0 %1188
        %1190 = vadd.xlane.f32.xlu0 %v1040
        %v1191 = vpop.xlane.xlu0 %1190
        %1192 = vadd.xlane.f32.xlu0 %v1041
        %v1193 = vpop.xlane.xlu0 %1192
        %1194 = vadd.xlane.f32.xlu0 %v1042
        %v1195 = vpop.xlane.xlu0 %1194
        %1196 = vadd.xlane.f32.xlu0 %v1043
        %v1197 = vpop.xlane.xlu0 %1196
        %1198 = vadd.xlane.f32.xlu0 %v1044
        %v1199 = vpop.xlane.xlu0 %1198
        %1200 = vadd.xlane.f32.xlu0 %v1045
        %v1201 = vpop.xlane.xlu0 %1200
        %1202 = vadd.xlane.f32.xlu0 %v1046
        %v1203 = vpop.xlane.xlu0 %1202
        %1204 = vadd.xlane.f32.xlu0 %v1047
        %v1205 = vpop.xlane.xlu0 %1204
        %1206 = vadd.xlane.f32.xlu0 %v1048
        %v1207 = vpop.xlane.xlu0 %1206
        %1208 = vadd.xlane.f32.xlu0 %v1049
        %v1209 = vpop.xlane.xlu0 %1208
        %1210 = vadd.xlane.f32.xlu0 %v1050
        %v1211 = vpop.xlane.xlu0 %1210
        %1212 = vadd.xlane.f32.xlu0 %v1051
        %v1213 = vpop.xlane.xlu0 %1212
        %1214 = vadd.xlane.f32.xlu0 %v1052
        %v1215 = vpop.xlane.xlu0 %1214
        %1216 = vadd.xlane.f32.xlu0 %v1053
        %v1217 = vpop.xlane.xlu0 %1216
        %1218 = vadd.xlane.f32.xlu0 %v1054
        %v1219 = vpop.xlane.xlu0 %1218
        %1220 = vadd.xlane.f32.xlu0 %v1055
        %v1221 = vpop.xlane.xlu0 %1220
        %1222 = vadd.xlane.f32.xlu0 %v1056
        %v1223 = vpop.xlane.xlu0 %1222
        %1224 = vadd.xlane.f32.xlu0 %v1057
        %v1225 = vpop.xlane.xlu0 %1224
        %1226 = vadd.xlane.f32.xlu0 %v1058
        %v1227 = vpop.xlane.xlu0 %1226
        %1228 = vadd.xlane.f32.xlu0 %v1059
        %v1229 = vpop.xlane.xlu0 %1228
        %1230 = vadd.xlane.f32.xlu0 %v1060
        %v1231 = vpop.xlane.xlu0 %1230
        %1232 = vadd.xlane.f32.xlu0 %v1061
        %v1233 = vpop.xlane.xlu0 %1232
        %1234 = vadd.xlane.f32.xlu0 %v1062
        %v1235 = vpop.xlane.xlu0 %1234
        %1236 = vadd.xlane.f32.xlu0 %v1063
        %v1237 = vpop.xlane.xlu0 %1236
        %1238 = vadd.xlane.f32.xlu0 %v1064
        %v1239 = vpop.xlane.xlu0 %1238
        %1240 = vadd.xlane.f32.xlu0 %v1065
        %v1241 = vpop.xlane.xlu0 %1240
        %1242 = vadd.xlane.f32.xlu0 %v1066
        %v1243 = vpop.xlane.xlu0 %1242
        %1244 = vadd.xlane.f32.xlu0 %v1067
        %v1245 = vpop.xlane.xlu0 %1244
        %1246 = vadd.xlane.f32.xlu0 %v1068
        %v1247 = vpop.xlane.xlu0 %1246
        %1248 = vadd.xlane.f32.xlu0 %v1069
        %v1249 = vpop.xlane.xlu0 %1248
        %1250 = vadd.xlane.f32.xlu0 %v1070
        %v1251 = vpop.xlane.xlu0 %1250
        %1252 = vadd.xlane.f32.xlu0 %v1071
        %v1253 = vpop.xlane.xlu0 %1252
        %1254 = vadd.xlane.f32.xlu0 %v1072
        %v1255 = vpop.xlane.xlu0 %1254
        %1256 = vadd.xlane.f32.xlu0 %v1073
        %v1257 = vpop.xlane.xlu0 %1256
        %1258 = vadd.xlane.f32.xlu0 %v1074
        %v1259 = vpop.xlane.xlu0 %1258
        %1260 = vadd.xlane.f32.xlu0 %v1075
        %v1261 = vpop.xlane.xlu0 %1260
        %1262 = vadd.xlane.f32.xlu0 %v1076
        %v1263 = vpop.xlane.xlu0 %1262
        %1264 = vadd.xlane.f32.xlu0 %v1077
        %v1265 = vpop.xlane.xlu0 %1264
        %1266 = vadd.xlane.f32.xlu0 %v1078
        %v1267 = vpop.xlane.xlu0 %1266
        %1268 = vadd.xlane.f32.xlu0 %v1079
        %v1269 = vpop.xlane.xlu0 %1268
        %1270 = vadd.xlane.f32.xlu0 %v1080
        %v1271 = vpop.xlane.xlu0 %1270
        %1272 = vadd.xlane.f32.xlu0 %v1081
        %v1273 = vpop.xlane.xlu0 %1272
        %1274 = vadd.xlane.f32.xlu0 %v1082
        %v1275 = vpop.xlane.xlu0 %1274
        %1276 = vadd.xlane.f32.xlu0 %v1083
        %v1277 = vpop.xlane.xlu0 %1276
        %1278 = vadd.xlane.f32.xlu0 %v1084
        %v1279 = vpop.xlane.xlu0 %1278
        %1280 = vadd.xlane.f32.xlu0 %v1085
        %v1281 = vpop.xlane.xlu0 %1280
        %1282 = vadd.xlane.f32.xlu0 %v1086
        %v1283 = vpop.xlane.xlu0 %1282
        %1284 = vadd.xlane.f32.xlu0 %v1087
        %v1285 = vpop.xlane.xlu0 %1284
        %1286 = vadd.xlane.f32.xlu0 %v1088
        %v1287 = vpop.xlane.xlu0 %1286
        %1288 = vadd.xlane.f32.xlu0 %v1089
        %v1289 = vpop.xlane.xlu0 %1288
        %1290 = vadd.xlane.f32.xlu0 %v1090
        %v1291 = vpop.xlane.xlu0 %1290
        %1292 = vadd.xlane.f32.xlu0 %v1091
        %v1293 = vpop.xlane.xlu0 %1292
        %1294 = vadd.xlane.f32.xlu0 %v1092
        %v1295 = vpop.xlane.xlu0 %1294
        %1296 = vadd.xlane.f32.xlu0 %v1093
        %v1297 = vpop.xlane.xlu0 %1296
        %1298 = vadd.xlane.f32.xlu0 %v1094
        %v1299 = vpop.xlane.xlu0 %1298
        %1300 = vadd.xlane.f32.xlu0 %v1095
        %v1301 = vpop.xlane.xlu0 %1300
        %1302 = vadd.xlane.f32.xlu0 %v1096
        %v1303 = vpop.xlane.xlu0 %1302
        %1304 = vadd.xlane.f32.xlu0 %v1097
        %v1305 = vpop.xlane.xlu0 %1304
        %1306 = vadd.xlane.f32.xlu0 %v1098
        %v1307 = vpop.xlane.xlu0 %1306
        %1308 = vadd.xlane.f32.xlu0 %v1099
        %v1309 = vpop.xlane.xlu0 %1308
        %1310 = vadd.xlane.f32.xlu0 %v1100
        %v1311 = vpop.xlane.xlu0 %1310
        %1312 = vadd.xlane.f32.xlu0 %v1101
        %v1313 = vpop.xlane.xlu0 %1312
        %1314 = vadd.xlane.f32.xlu0 %v1102
        %v1315 = vpop.xlane.xlu0 %1314
        %1316 = vadd.xlane.f32.xlu0 %v1103
        %v1317 = vpop.xlane.xlu0 %1316
        %1318 = vadd.xlane.f32.xlu0 %v1104
        %v1319 = vpop.xlane.xlu0 %1318
        %1320 = vadd.xlane.f32.xlu0 %v1105
        %v1321 = vpop.xlane.xlu0 %1320
        %1322 = vadd.xlane.f32.xlu0 %v1106
        %v1323 = vpop.xlane.xlu0 %1322
        %1324 = vadd.xlane.f32.xlu0 %v1107
        %v1325 = vpop.xlane.xlu0 %1324
        %1326 = vadd.xlane.f32.xlu0 %v1108
        %v1327 = vpop.xlane.xlu0 %1326
        %1328 = vadd.xlane.f32.xlu0 %v1109
        %v1329 = vpop.xlane.xlu0 %1328
        %1330 = vadd.xlane.f32.xlu0 %v1110
        %v1331 = vpop.xlane.xlu0 %1330
        %1332 = vadd.xlane.f32.xlu0 %v1111
        %v1333 = vpop.xlane.xlu0 %1332
        %1334 = vadd.xlane.f32.xlu0 %v1112
        %v1335 = vpop.xlane.xlu0 %1334
        %1336 = vadd.xlane.f32.xlu0 %v1113
        %v1337 = vpop.xlane.xlu0 %1336
        %1338 = vadd.xlane.f32.xlu0 %v1114
        %v1339 = vpop.xlane.xlu0 %1338
        %1340 = vadd.xlane.f32.xlu0 %v1115
        %v1341 = vpop.xlane.xlu0 %1340
        %1342 = vadd.xlane.f32.xlu0 %v1116
        %v1343 = vpop.xlane.xlu0 %1342
        %1344 = vadd.xlane.f32.xlu0 %v1117
        %v1345 = vpop.xlane.xlu0 %1344
        %1346 = vadd.xlane.f32.xlu0 %v1118
        %v1347 = vpop.xlane.xlu0 %1346
        %1348 = vadd.xlane.f32.xlu0 %v1119
        %v1349 = vpop.xlane.xlu0 %1348
        %1350 = vadd.xlane.f32.xlu0 %v1120
        %v1351 = vpop.xlane.xlu0 %1350
        %1352 = vadd.xlane.f32.xlu0 %v1121
        %v1353 = vpop.xlane.xlu0 %1352
        %1354 = vadd.xlane.f32.xlu0 %v1122
        %v1355 = vpop.xlane.xlu0 %1354
        %1356 = vadd.xlane.f32.xlu0 %v1123
        %v1357 = vpop.xlane.xlu0 %1356
        %1358 = vadd.xlane.f32.xlu0 %v1124
        %v1359 = vpop.xlane.xlu0 %1358
        %1360 = vadd.xlane.f32.xlu0 %v1125
        %v1361 = vpop.xlane.xlu0 %1360
        %1362 = vadd.xlane.f32.xlu0 %v1126
        %v1363 = vpop.xlane.xlu0 %1362
        %1364 = vadd.xlane.f32.xlu0 %v1127
        %v1365 = vpop.xlane.xlu0 %1364
        %1366 = vadd.xlane.f32.xlu0 %v1128
        %v1367 = vpop.xlane.xlu0 %1366
        %1368 = vadd.xlane.f32.xlu0 %v1129
        %v1369 = vpop.xlane.xlu0 %1368
        %1370 = vadd.xlane.f32.xlu0 %v1130
        %v1371 = vpop.xlane.xlu0 %1370
        %1372 = vadd.xlane.f32.xlu0 %v1131
        %v1373 = vpop.xlane.xlu0 %1372
        %1374 = vadd.xlane.f32.xlu0 %v1132
        %v1375 = vpop.xlane.xlu0 %1374
        %1376 = vadd.xlane.f32.xlu0 %v1133
        %v1377 = vpop.xlane.xlu0 %1376
        %1378 = vadd.xlane.f32.xlu0 %v1134
        %v1379 = vpop.xlane.xlu0 %1378
        %1380 = vadd.xlane.f32.xlu0 %v1135
        %v1381 = vpop.xlane.xlu0 %1380
        %1382 = vadd.xlane.f32.xlu0 %v1136
        %v1383 = vpop.xlane.xlu0 %1382
        %1384 = vadd.xlane.f32.xlu0 %v1137
        %v1385 = vpop.xlane.xlu0 %1384
        %1386 = vadd.xlane.f32.xlu0 %v1138
        %v1387 = vpop.xlane.xlu0 %1386
        %1388 = vadd.xlane.f32.xlu0 %v1139
        %v1389 = vpop.xlane.xlu0 %1388
        %1390 = vadd.xlane.f32.xlu0 %v1140
        %v1391 = vpop.xlane.xlu0 %1390
        %1392 = vadd.xlane.f32.xlu0 %v1141
        %v1393 = vpop.xlane.xlu0 %1392
        %1394 = vadd.xlane.f32.xlu0 %v1142
        %v1395 = vpop.xlane.xlu0 %1394
        %1396 = vadd.xlane.f32.xlu0 %v1143
        %v1397 = vpop.xlane.xlu0 %1396
        %1398 = vadd.xlane.f32.xlu0 %v1144
        %v1399 = vpop.xlane.xlu0 %1398
        %1400 = vadd.xlane.f32.xlu0 %v1145
        %v1401 = vpop.xlane.xlu0 %1400
        %v1402 = vmul.f32 %v1018, %v725
        %v1403 = vmul.f32 %v1019, %v725
        %v1404 = vmul.f32 %v1020, %v725
        %v1405 = vmul.f32 %v1021, %v725
        %v1406 = vmul.f32 %v1022, %v725
        %v1407 = vmul.f32 %v1023, %v725
        %v1408 = vmul.f32 %v1024, %v725
        %v1409 = vmul.f32 %v1025, %v725
        %v1410 = vmul.f32 %v1026, %v725
        %v1411 = vmul.f32 %v1027, %v725
        %v1412 = vmul.f32 %v1028, %v725
        %v1413 = vmul.f32 %v1029, %v725
        %v1414 = vmul.f32 %v1030, %v725
        %v1415 = vmul.f32 %v1031, %v725
        %v1416 = vmul.f32 %v1032, %v725
        %v1417 = vmul.f32 %v1033, %v725
        %v1418 = vmul.f32 %v1034, %v729
        %v1419 = vmul.f32 %v1035, %v729
        %v1420 = vmul.f32 %v1036, %v729
        %v1421 = vmul.f32 %v1037, %v729
        %v1422 = vmul.f32 %v1038, %v729
        %v1423 = vmul.f32 %v1039, %v729
        %v1424 = vmul.f32 %v1040, %v729
        %v1425 = vmul.f32 %v1041, %v729
        %v1426 = vmul.f32 %v1042, %v729
        %v1427 = vmul.f32 %v1043, %v729
        %v1428 = vmul.f32 %v1044, %v729
        %v1429 = vmul.f32 %v1045, %v729
        %v1430 = vmul.f32 %v1046, %v729
        %v1431 = vmul.f32 %v1047, %v729
        %v1432 = vmul.f32 %v1048, %v729
        %v1433 = vmul.f32 %v1049, %v729
        %v1434 = vmul.f32 %v1050, %v733
        %v1435 = vmul.f32 %v1051, %v733
        %v1436 = vmul.f32 %v1052, %v733
        %v1437 = vmul.f32 %v1053, %v733
        %v1438 = vmul.f32 %v1054, %v733
        %v1439 = vmul.f32 %v1055, %v733
        %v1440 = vmul.f32 %v1056, %v733
        %v1441 = vmul.f32 %v1057, %v733
        %v1442 = vmul.f32 %v1058, %v733
        %v1443 = vmul.f32 %v1059, %v733
        %v1444 = vmul.f32 %v1060, %v733
        %v1445 = vmul.f32 %v1061, %v733
        %v1446 = vmul.f32 %v1062, %v733
        %v1447 = vmul.f32 %v1063, %v733
        %v1448 = vmul.f32 %v1064, %v733
        %v1449 = vmul.f32 %v1065, %v733
        %v1450 = vmul.f32 %v1066, %v737
        %v1451 = vmul.f32 %v1067, %v737
        %v1452 = vmul.f32 %v1068, %v737
        %v1453 = vmul.f32 %v1069, %v737
        %v1454 = vmul.f32 %v1070, %v737
        %v1455 = vmul.f32 %v1071, %v737
        %v1456 = vmul.f32 %v1072, %v737
        %v1457 = vmul.f32 %v1073, %v737
        %v1458 = vmul.f32 %v1074, %v737
        %v1459 = vmul.f32 %v1075, %v737
        %v1460 = vmul.f32 %v1076, %v737
        %v1461 = vmul.f32 %v1077, %v737
        %v1462 = vmul.f32 %v1078, %v737
        %v1463 = vmul.f32 %v1079, %v737
        %v1464 = vmul.f32 %v1080, %v737
        %v1465 = vmul.f32 %v1081, %v737
        %v1466 = vmul.f32 %v1082, %v741
        %v1467 = vmul.f32 %v1083, %v741
        %v1468 = vmul.f32 %v1084, %v741
        %v1469 = vmul.f32 %v1085, %v741
        %v1470 = vmul.f32 %v1086, %v741
        %v1471 = vmul.f32 %v1087, %v741
        %v1472 = vmul.f32 %v1088, %v741
        %v1473 = vmul.f32 %v1089, %v741
        %v1474 = vmul.f32 %v1090, %v741
        %v1475 = vmul.f32 %v1091, %v741
        %v1476 = vmul.f32 %v1092, %v741
        %v1477 = vmul.f32 %v1093, %v741
        %v1478 = vmul.f32 %v1094, %v741
        %v1479 = vmul.f32 %v1095, %v741
        %v1480 = vmul.f32 %v1096, %v741
        %v1481 = vmul.f32 %v1097, %v741
        %v1482 = vmul.f32 %v1098, %v745
        %v1483 = vmul.f32 %v1099, %v745
        %v1484 = vmul.f32 %v1100, %v745
        %v1485 = vmul.f32 %v1101, %v745
        %v1486 = vmul.f32 %v1102, %v745
        %v1487 = vmul.f32 %v1103, %v745
        %v1488 = vmul.f32 %v1104, %v745
        %v1489 = vmul.f32 %v1105, %v745
        %v1490 = vmul.f32 %v1106, %v745
        %v1491 = vmul.f32 %v1107, %v745
        %v1492 = vmul.f32 %v1108, %v745
        %v1493 = vmul.f32 %v1109, %v745
        %v1494 = vmul.f32 %v1110, %v745
        %v1495 = vmul.f32 %v1111, %v745
        %v1496 = vmul.f32 %v1112, %v745
        %v1497 = vmul.f32 %v1113, %v745
        %v1498 = vmul.f32 %v1114, %v749
        %v1499 = vmul.f32 %v1115, %v749
        %v1500 = vmul.f32 %v1116, %v749
        %v1501 = vmul.f32 %v1117, %v749
        %v1502 = vmul.f32 %v1118, %v749
        %v1503 = vmul.f32 %v1119, %v749
        %v1504 = vmul.f32 %v1120, %v749
        %v1505 = vmul.f32 %v1121, %v749
        %v1506 = vmul.f32 %v1122, %v749
        %v1507 = vmul.f32 %v1123, %v749
        %v1508 = vmul.f32 %v1124, %v749
        %v1509 = vmul.f32 %v1125, %v749
        %v1510 = vmul.f32 %v1126, %v749
        %v1511 = vmul.f32 %v1127, %v749
        %v1512 = vmul.f32 %v1128, %v749
        %v1513 = vmul.f32 %v1129, %v749
        %v1514 = vmul.f32 %v1130, %v753
        %v1515 = vmul.f32 %v1131, %v753
        %v1516 = vmul.f32 %v1132, %v753
        %v1517 = vmul.f32 %v1133, %v753
        %v1518 = vmul.f32 %v1134, %v753
        %v1519 = vmul.f32 %v1135, %v753
        %v1520 = vmul.f32 %v1136, %v753
        %v1521 = vmul.f32 %v1137, %v753
        %v1522 = vmul.f32 %v1138, %v753
        %v1523 = vmul.f32 %v1139, %v753
        %v1524 = vmul.f32 %v1140, %v753
        %v1525 = vmul.f32 %v1141, %v753
        %v1526 = vmul.f32 %v1142, %v753
        %v1527 = vmul.f32 %v1143, %v753
        %v1528 = vmul.f32 %v1144, %v753
        %v1529 = vmul.f32 %v1145, %v753
        %1530 = vadd.xlane.f32.xlu0 %v1402
        %v1531 = vpop.xlane.xlu0 %1530
        %1532 = vadd.xlane.f32.xlu0 %v1403
        %v1533 = vpop.xlane.xlu0 %1532
        %1534 = vadd.xlane.f32.xlu0 %v1404
        %v1535 = vpop.xlane.xlu0 %1534
        %1536 = vadd.xlane.f32.xlu0 %v1405
        %v1537 = vpop.xlane.xlu0 %1536
        %1538 = vadd.xlane.f32.xlu0 %v1406
        %v1539 = vpop.xlane.xlu0 %1538
        %1540 = vadd.xlane.f32.xlu0 %v1407
        %v1541 = vpop.xlane.xlu0 %1540
        %1542 = vadd.xlane.f32.xlu0 %v1408
        %v1543 = vpop.xlane.xlu0 %1542
        %1544 = vadd.xlane.f32.xlu0 %v1409
        %v1545 = vpop.xlane.xlu0 %1544
        %1546 = vadd.xlane.f32.xlu0 %v1410
        %v1547 = vpop.xlane.xlu0 %1546
        %1548 = vadd.xlane.f32.xlu0 %v1411
        %v1549 = vpop.xlane.xlu0 %1548
        %1550 = vadd.xlane.f32.xlu0 %v1412
        %v1551 = vpop.xlane.xlu0 %1550
        %1552 = vadd.xlane.f32.xlu0 %v1413
        %v1553 = vpop.xlane.xlu0 %1552
        %1554 = vadd.xlane.f32.xlu0 %v1414
        %v1555 = vpop.xlane.xlu0 %1554
        %1556 = vadd.xlane.f32.xlu0 %v1415
        %v1557 = vpop.xlane.xlu0 %1556
        %1558 = vadd.xlane.f32.xlu0 %v1416
        %v1559 = vpop.xlane.xlu0 %1558
        %1560 = vadd.xlane.f32.xlu0 %v1417
        %v1561 = vpop.xlane.xlu0 %1560
        %1562 = vadd.xlane.f32.xlu0 %v1418
        %v1563 = vpop.xlane.xlu0 %1562
        %1564 = vadd.xlane.f32.xlu0 %v1419
        %v1565 = vpop.xlane.xlu0 %1564
        %1566 = vadd.xlane.f32.xlu0 %v1420
        %v1567 = vpop.xlane.xlu0 %1566
        %1568 = vadd.xlane.f32.xlu0 %v1421
        %v1569 = vpop.xlane.xlu0 %1568
        %1570 = vadd.xlane.f32.xlu0 %v1422
        %v1571 = vpop.xlane.xlu0 %1570
        %1572 = vadd.xlane.f32.xlu0 %v1423
        %v1573 = vpop.xlane.xlu0 %1572
        %1574 = vadd.xlane.f32.xlu0 %v1424
        %v1575 = vpop.xlane.xlu0 %1574
        %1576 = vadd.xlane.f32.xlu0 %v1425
        %v1577 = vpop.xlane.xlu0 %1576
        %1578 = vadd.xlane.f32.xlu0 %v1426
        %v1579 = vpop.xlane.xlu0 %1578
        %1580 = vadd.xlane.f32.xlu0 %v1427
        %v1581 = vpop.xlane.xlu0 %1580
        %1582 = vadd.xlane.f32.xlu0 %v1428
        %v1583 = vpop.xlane.xlu0 %1582
        %1584 = vadd.xlane.f32.xlu0 %v1429
        %v1585 = vpop.xlane.xlu0 %1584
        %1586 = vadd.xlane.f32.xlu0 %v1430
        %v1587 = vpop.xlane.xlu0 %1586
        %1588 = vadd.xlane.f32.xlu0 %v1431
        %v1589 = vpop.xlane.xlu0 %1588
        %1590 = vadd.xlane.f32.xlu0 %v1432
        %v1591 = vpop.xlane.xlu0 %1590
        %1592 = vadd.xlane.f32.xlu0 %v1433
        %v1593 = vpop.xlane.xlu0 %1592
        %1594 = vadd.xlane.f32.xlu0 %v1434
        %v1595 = vpop.xlane.xlu0 %1594
        %1596 = vadd.xlane.f32.xlu0 %v1435
        %v1597 = vpop.xlane.xlu0 %1596
        %1598 = vadd.xlane.f32.xlu0 %v1436
        %v1599 = vpop.xlane.xlu0 %1598
        %1600 = vadd.xlane.f32.xlu0 %v1437
        %v1601 = vpop.xlane.xlu0 %1600
        %1602 = vadd.xlane.f32.xlu0 %v1438
        %v1603 = vpop.xlane.xlu0 %1602
        %1604 = vadd.xlane.f32.xlu0 %v1439
        %v1605 = vpop.xlane.xlu0 %1604
        %1606 = vadd.xlane.f32.xlu0 %v1440
        %v1607 = vpop.xlane.xlu0 %1606
        %1608 = vadd.xlane.f32.xlu0 %v1441
        %v1609 = vpop.xlane.xlu0 %1608
        %1610 = vadd.xlane.f32.xlu0 %v1442
        %v1611 = vpop.xlane.xlu0 %1610
        %1612 = vadd.xlane.f32.xlu0 %v1443
        %v1613 = vpop.xlane.xlu0 %1612
        %1614 = vadd.xlane.f32.xlu0 %v1444
        %v1615 = vpop.xlane.xlu0 %1614
        %1616 = vadd.xlane.f32.xlu0 %v1445
        %v1617 = vpop.xlane.xlu0 %1616
        %1618 = vadd.xlane.f32.xlu0 %v1446
        %v1619 = vpop.xlane.xlu0 %1618
        %1620 = vadd.xlane.f32.xlu0 %v1447
        %v1621 = vpop.xlane.xlu0 %1620
        %1622 = vadd.xlane.f32.xlu0 %v1448
        %v1623 = vpop.xlane.xlu0 %1622
        %1624 = vadd.xlane.f32.xlu0 %v1449
        %v1625 = vpop.xlane.xlu0 %1624
        %1626 = vadd.xlane.f32.xlu0 %v1450
        %v1627 = vpop.xlane.xlu0 %1626
        %1628 = vadd.xlane.f32.xlu0 %v1451
        %v1629 = vpop.xlane.xlu0 %1628
        %1630 = vadd.xlane.f32.xlu0 %v1452
        %v1631 = vpop.xlane.xlu0 %1630
        %1632 = vadd.xlane.f32.xlu0 %v1453
        %v1633 = vpop.xlane.xlu0 %1632
        %1634 = vadd.xlane.f32.xlu0 %v1454
        %v1635 = vpop.xlane.xlu0 %1634
        %1636 = vadd.xlane.f32.xlu0 %v1455
        %v1637 = vpop.xlane.xlu0 %1636
        %1638 = vadd.xlane.f32.xlu0 %v1456
        %v1639 = vpop.xlane.xlu0 %1638
        %1640 = vadd.xlane.f32.xlu0 %v1457
        %v1641 = vpop.xlane.xlu0 %1640
        %1642 = vadd.xlane.f32.xlu0 %v1458
        %v1643 = vpop.xlane.xlu0 %1642
        %1644 = vadd.xlane.f32.xlu0 %v1459
        %v1645 = vpop.xlane.xlu0 %1644
        %1646 = vadd.xlane.f32.xlu0 %v1460
        %v1647 = vpop.xlane.xlu0 %1646
        %1648 = vadd.xlane.f32.xlu0 %v1461
        %v1649 = vpop.xlane.xlu0 %1648
        %1650 = vadd.xlane.f32.xlu0 %v1462
        %v1651 = vpop.xlane.xlu0 %1650
        %1652 = vadd.xlane.f32.xlu0 %v1463
        %v1653 = vpop.xlane.xlu0 %1652
        %1654 = vadd.xlane.f32.xlu0 %v1464
        %v1655 = vpop.xlane.xlu0 %1654
        %1656 = vadd.xlane.f32.xlu0 %v1465
        %v1657 = vpop.xlane.xlu0 %1656
        %1658 = vadd.xlane.f32.xlu0 %v1466
        %v1659 = vpop.xlane.xlu0 %1658
        %1660 = vadd.xlane.f32.xlu0 %v1467
        %v1661 = vpop.xlane.xlu0 %1660
        %1662 = vadd.xlane.f32.xlu0 %v1468
        %v1663 = vpop.xlane.xlu0 %1662
        %1664 = vadd.xlane.f32.xlu0 %v1469
        %v1665 = vpop.xlane.xlu0 %1664
        %1666 = vadd.xlane.f32.xlu0 %v1470
        %v1667 = vpop.xlane.xlu0 %1666
        %1668 = vadd.xlane.f32.xlu0 %v1471
        %v1669 = vpop.xlane.xlu0 %1668
        %1670 = vadd.xlane.f32.xlu0 %v1472
        %v1671 = vpop.xlane.xlu0 %1670
        %1672 = vadd.xlane.f32.xlu0 %v1473
        %v1673 = vpop.xlane.xlu0 %1672
        %1674 = vadd.xlane.f32.xlu0 %v1474
        %v1675 = vpop.xlane.xlu0 %1674
        %1676 = vadd.xlane.f32.xlu0 %v1475
        %v1677 = vpop.xlane.xlu0 %1676
        %1678 = vadd.xlane.f32.xlu0 %v1476
        %v1679 = vpop.xlane.xlu0 %1678
        %1680 = vadd.xlane.f32.xlu0 %v1477
        %v1681 = vpop.xlane.xlu0 %1680
        %1682 = vadd.xlane.f32.xlu0 %v1478
        %v1683 = vpop.xlane.xlu0 %1682
        %1684 = vadd.xlane.f32.xlu0 %v1479
        %v1685 = vpop.xlane.xlu0 %1684
        %1686 = vadd.xlane.f32.xlu0 %v1480
        %v1687 = vpop.xlane.xlu0 %1686
        %1688 = vadd.xlane.f32.xlu0 %v1481
        %v1689 = vpop.xlane.xlu0 %1688
        %1690 = vadd.xlane.f32.xlu0 %v1482
        %v1691 = vpop.xlane.xlu0 %1690
        %1692 = vadd.xlane.f32.xlu0 %v1483
        %v1693 = vpop.xlane.xlu0 %1692
        %1694 = vadd.xlane.f32.xlu0 %v1484
        %v1695 = vpop.xlane.xlu0 %1694
        %1696 = vadd.xlane.f32.xlu0 %v1485
        %v1697 = vpop.xlane.xlu0 %1696
        %1698 = vadd.xlane.f32.xlu0 %v1486
        %v1699 = vpop.xlane.xlu0 %1698
        %1700 = vadd.xlane.f32.xlu0 %v1487
        %v1701 = vpop.xlane.xlu0 %1700
        %1702 = vadd.xlane.f32.xlu0 %v1488
        %v1703 = vpop.xlane.xlu0 %1702
        %1704 = vadd.xlane.f32.xlu0 %v1489
        %v1705 = vpop.xlane.xlu0 %1704
        %1706 = vadd.xlane.f32.xlu0 %v1490
        %v1707 = vpop.xlane.xlu0 %1706
        %1708 = vadd.xlane.f32.xlu0 %v1491
        %v1709 = vpop.xlane.xlu0 %1708
        %1710 = vadd.xlane.f32.xlu0 %v1492
        %v1711 = vpop.xlane.xlu0 %1710
        %1712 = vadd.xlane.f32.xlu0 %v1493
        %v1713 = vpop.xlane.xlu0 %1712
        %1714 = vadd.xlane.f32.xlu0 %v1494
        %v1715 = vpop.xlane.xlu0 %1714
        %1716 = vadd.xlane.f32.xlu0 %v1495
        %v1717 = vpop.xlane.xlu0 %1716
        %1718 = vadd.xlane.f32.xlu0 %v1496
        %v1719 = vpop.xlane.xlu0 %1718
        %1720 = vadd.xlane.f32.xlu0 %v1497
        %v1721 = vpop.xlane.xlu0 %1720
        %1722 = vadd.xlane.f32.xlu0 %v1498
        %v1723 = vpop.xlane.xlu0 %1722
        %1724 = vadd.xlane.f32.xlu0 %v1499
        %v1725 = vpop.xlane.xlu0 %1724
        %1726 = vadd.xlane.f32.xlu0 %v1500
        %v1727 = vpop.xlane.xlu0 %1726
        %1728 = vadd.xlane.f32.xlu0 %v1501
        %v1729 = vpop.xlane.xlu0 %1728
        %1730 = vadd.xlane.f32.xlu0 %v1502
        %v1731 = vpop.xlane.xlu0 %1730
        %1732 = vadd.xlane.f32.xlu0 %v1503
        %v1733 = vpop.xlane.xlu0 %1732
        %1734 = vadd.xlane.f32.xlu0 %v1504
        %v1735 = vpop.xlane.xlu0 %1734
        %1736 = vadd.xlane.f32.xlu0 %v1505
        %v1737 = vpop.xlane.xlu0 %1736
        %1738 = vadd.xlane.f32.xlu0 %v1506
        %v1739 = vpop.xlane.xlu0 %1738
        %1740 = vadd.xlane.f32.xlu0 %v1507
        %v1741 = vpop.xlane.xlu0 %1740
        %1742 = vadd.xlane.f32.xlu0 %v1508
        %v1743 = vpop.xlane.xlu0 %1742
        %1744 = vadd.xlane.f32.xlu0 %v1509
        %v1745 = vpop.xlane.xlu0 %1744
        %1746 = vadd.xlane.f32.xlu0 %v1510
        %v1747 = vpop.xlane.xlu0 %1746
        %1748 = vadd.xlane.f32.xlu0 %v1511
        %v1749 = vpop.xlane.xlu0 %1748
        %1750 = vadd.xlane.f32.xlu0 %v1512
        %v1751 = vpop.xlane.xlu0 %1750
        %1752 = vadd.xlane.f32.xlu0 %v1513
        %v1753 = vpop.xlane.xlu0 %1752
        %1754 = vadd.xlane.f32.xlu0 %v1514
        %v1755 = vpop.xlane.xlu0 %1754
        %1756 = vadd.xlane.f32.xlu0 %v1515
        %v1757 = vpop.xlane.xlu0 %1756
        %1758 = vadd.xlane.f32.xlu0 %v1516
        %v1759 = vpop.xlane.xlu0 %1758
        %1760 = vadd.xlane.f32.xlu0 %v1517
        %v1761 = vpop.xlane.xlu0 %1760
        %1762 = vadd.xlane.f32.xlu0 %v1518
        %v1763 = vpop.xlane.xlu0 %1762
        %1764 = vadd.xlane.f32.xlu0 %v1519
        %v1765 = vpop.xlane.xlu0 %1764
        %1766 = vadd.xlane.f32.xlu0 %v1520
        %v1767 = vpop.xlane.xlu0 %1766
        %1768 = vadd.xlane.f32.xlu0 %v1521
        %v1769 = vpop.xlane.xlu0 %1768
        %1770 = vadd.xlane.f32.xlu0 %v1522
        %v1771 = vpop.xlane.xlu0 %1770
        %1772 = vadd.xlane.f32.xlu0 %v1523
        %v1773 = vpop.xlane.xlu0 %1772
        %1774 = vadd.xlane.f32.xlu0 %v1524
        %v1775 = vpop.xlane.xlu0 %1774
        %1776 = vadd.xlane.f32.xlu0 %v1525
        %v1777 = vpop.xlane.xlu0 %1776
        %1778 = vadd.xlane.f32.xlu0 %v1526
        %v1779 = vpop.xlane.xlu0 %1778
        %1780 = vadd.xlane.f32.xlu0 %v1527
        %v1781 = vpop.xlane.xlu0 %1780
        %1782 = vadd.xlane.f32.xlu0 %v1528
        %v1783 = vpop.xlane.xlu0 %1782
        %1784 = vadd.xlane.f32.xlu0 %v1529
        %v1785 = vpop.xlane.xlu0 %1784
        %v1786 = vlaneseq
        %v1787 = vshrl.u32 %v1786, 7
        %v1788 = vsub.s32 0, %v1787
        %v1789 = vrot.slane %v135, %v1788
        %1791 = vbcast.lane.b32.xlu0 %v1789, 256
        %v1792 = vpop.permute.xlu0 %1791
        %s1794 = sor.u32 256, 8
        %1795 = vbcast.lane.b32.xlu0 %v1789, %s1794
        %v1796 = vpop.permute.xlu0 %1795
        %s1798 = sor.u32 256, 16
        %1799 = vbcast.lane.b32.xlu0 %v1789, %s1798
        %v1800 = vpop.permute.xlu0 %1799
        %s1802 = sor.u32 256, 24
        %1803 = vbcast.lane.b32.xlu0 %v1789, %s1802
        %v1804 = vpop.permute.xlu0 %1803
        %s1806 = sor.u32 256, 32
        %1807 = vbcast.lane.b32.xlu0 %v1789, %s1806
        %v1808 = vpop.permute.xlu0 %1807
        %s1810 = sor.u32 256, 40
        %1811 = vbcast.lane.b32.xlu0 %v1789, %s1810
        %v1812 = vpop.permute.xlu0 %1811
        %s1814 = sor.u32 256, 48
        %1815 = vbcast.lane.b32.xlu0 %v1789, %s1814
        %v1816 = vpop.permute.xlu0 %1815
        %s1818 = sor.u32 256, 56
        %1819 = vbcast.lane.b32.xlu0 %v1789, %s1818
        %v1820 = vpop.permute.xlu0 %1819
        %s1822 = sor.u32 256, 64
        %1823 = vbcast.lane.b32.xlu0 %v1789, %s1822
        %v1824 = vpop.permute.xlu0 %1823
        %s1826 = sor.u32 256, 72
        %1827 = vbcast.lane.b32.xlu0 %v1789, %s1826
        %v1828 = vpop.permute.xlu0 %1827
        %s1830 = sor.u32 256, 80
        %1831 = vbcast.lane.b32.xlu0 %v1789, %s1830
        %v1832 = vpop.permute.xlu0 %1831
        %s1834 = sor.u32 256, 88
        %1835 = vbcast.lane.b32.xlu0 %v1789, %s1834
        %v1836 = vpop.permute.xlu0 %1835
        %s1838 = sor.u32 256, 96
        %1839 = vbcast.lane.b32.xlu0 %v1789, %s1838
        %v1840 = vpop.permute.xlu0 %1839
        %s1842 = sor.u32 256, 104
        %1843 = vbcast.lane.b32.xlu0 %v1789, %s1842
        %v1844 = vpop.permute.xlu0 %1843
        %s1846 = sor.u32 256, 112
        %1847 = vbcast.lane.b32.xlu0 %v1789, %s1846
        %v1848 = vpop.permute.xlu0 %1847
        %s1850 = sor.u32 256, 120
        %1851 = vbcast.lane.b32.xlu0 %v1789, %s1850
        %v1852 = vpop.permute.xlu0 %1851
        %v1853 = vlaneseq
        %v1854 = vshrl.u32 %v1853, 7
        %v1855 = vsub.s32 1, %v1854
        %v1856 = vrot.slane %v135, %v1855
        %1858 = vbcast.lane.b32.xlu0 %v1856, 256
        %v1859 = vpop.permute.xlu0 %1858
        %s1861 = sor.u32 256, 8
        %1862 = vbcast.lane.b32.xlu0 %v1856, %s1861
        %v1863 = vpop.permute.xlu0 %1862
        %s1865 = sor.u32 256, 16
        %1866 = vbcast.lane.b32.xlu0 %v1856, %s1865
        %v1867 = vpop.permute.xlu0 %1866
        %s1869 = sor.u32 256, 24
        %1870 = vbcast.lane.b32.xlu0 %v1856, %s1869
        %v1871 = vpop.permute.xlu0 %1870
        %s1873 = sor.u32 256, 32
        %1874 = vbcast.lane.b32.xlu0 %v1856, %s1873
        %v1875 = vpop.permute.xlu0 %1874
        %s1877 = sor.u32 256, 40
        %1878 = vbcast.lane.b32.xlu0 %v1856, %s1877
        %v1879 = vpop.permute.xlu0 %1878
        %s1881 = sor.u32 256, 48
        %1882 = vbcast.lane.b32.xlu0 %v1856, %s1881
        %v1883 = vpop.permute.xlu0 %1882
        %s1885 = sor.u32 256, 56
        %1886 = vbcast.lane.b32.xlu0 %v1856, %s1885
        %v1887 = vpop.permute.xlu0 %1886
        %s1889 = sor.u32 256, 64
        %1890 = vbcast.lane.b32.xlu0 %v1856, %s1889
        %v1891 = vpop.permute.xlu0 %1890
        %s1893 = sor.u32 256, 72
        %1894 = vbcast.lane.b32.xlu0 %v1856, %s1893
        %v1895 = vpop.permute.xlu0 %1894
        %s1897 = sor.u32 256, 80
        %1898 = vbcast.lane.b32.xlu0 %v1856, %s1897
        %v1899 = vpop.permute.xlu0 %1898
        %s1901 = sor.u32 256, 88
        %1902 = vbcast.lane.b32.xlu0 %v1856, %s1901
        %v1903 = vpop.permute.xlu0 %1902
        %s1905 = sor.u32 256, 96
        %1906 = vbcast.lane.b32.xlu0 %v1856, %s1905
        %v1907 = vpop.permute.xlu0 %1906
        %s1909 = sor.u32 256, 104
        %1910 = vbcast.lane.b32.xlu0 %v1856, %s1909
        %v1911 = vpop.permute.xlu0 %1910
        %s1913 = sor.u32 256, 112
        %1914 = vbcast.lane.b32.xlu0 %v1856, %s1913
        %v1915 = vpop.permute.xlu0 %1914
        %s1917 = sor.u32 256, 120
        %1918 = vbcast.lane.b32.xlu0 %v1856, %s1917
        %v1919 = vpop.permute.xlu0 %1918
        %v1920 = vlaneseq
        %v1921 = vshrl.u32 %v1920, 7
        %v1922 = vsub.s32 2, %v1921
        %v1923 = vrot.slane %v135, %v1922
        %1925 = vbcast.lane.b32.xlu0 %v1923, 256
        %v1926 = vpop.permute.xlu0 %1925
        %s1928 = sor.u32 256, 8
        %1929 = vbcast.lane.b32.xlu0 %v1923, %s1928
        %v1930 = vpop.permute.xlu0 %1929
        %s1932 = sor.u32 256, 16
        %1933 = vbcast.lane.b32.xlu0 %v1923, %s1932
        %v1934 = vpop.permute.xlu0 %1933
        %s1936 = sor.u32 256, 24
        %1937 = vbcast.lane.b32.xlu0 %v1923, %s1936
        %v1938 = vpop.permute.xlu0 %1937
        %s1940 = sor.u32 256, 32
        %1941 = vbcast.lane.b32.xlu0 %v1923, %s1940
        %v1942 = vpop.permute.xlu0 %1941
        %s1944 = sor.u32 256, 40
        %1945 = vbcast.lane.b32.xlu0 %v1923, %s1944
        %v1946 = vpop.permute.xlu0 %1945
        %s1948 = sor.u32 256, 48
        %1949 = vbcast.lane.b32.xlu0 %v1923, %s1948
        %v1950 = vpop.permute.xlu0 %1949
        %s1952 = sor.u32 256, 56
        %1953 = vbcast.lane.b32.xlu0 %v1923, %s1952
        %v1954 = vpop.permute.xlu0 %1953
        %s1956 = sor.u32 256, 64
        %1957 = vbcast.lane.b32.xlu0 %v1923, %s1956
        %v1958 = vpop.permute.xlu0 %1957
        %s1960 = sor.u32 256, 72
        %1961 = vbcast.lane.b32.xlu0 %v1923, %s1960
        %v1962 = vpop.permute.xlu0 %1961
        %s1964 = sor.u32 256, 80
        %1965 = vbcast.lane.b32.xlu0 %v1923, %s1964
        %v1966 = vpop.permute.xlu0 %1965
        %s1968 = sor.u32 256, 88
        %1969 = vbcast.lane.b32.xlu0 %v1923, %s1968
        %v1970 = vpop.permute.xlu0 %1969
        %s1972 = sor.u32 256, 96
        %1973 = vbcast.lane.b32.xlu0 %v1923, %s1972
        %v1974 = vpop.permute.xlu0 %1973
        %s1976 = sor.u32 256, 104
        %1977 = vbcast.lane.b32.xlu0 %v1923, %s1976
        %v1978 = vpop.permute.xlu0 %1977
        %s1980 = sor.u32 256, 112
        %1981 = vbcast.lane.b32.xlu0 %v1923, %s1980
        %v1982 = vpop.permute.xlu0 %1981
        %s1984 = sor.u32 256, 120
        %1985 = vbcast.lane.b32.xlu0 %v1923, %s1984
        %v1986 = vpop.permute.xlu0 %1985
        %v1987 = vlaneseq
        %v1988 = vshrl.u32 %v1987, 7
        %v1989 = vsub.s32 3, %v1988
        %v1990 = vrot.slane %v135, %v1989
        %1992 = vbcast.lane.b32.xlu0 %v1990, 256
        %v1993 = vpop.permute.xlu0 %1992
        %s1995 = sor.u32 256, 8
        %1996 = vbcast.lane.b32.xlu0 %v1990, %s1995
        %v1997 = vpop.permute.xlu0 %1996
        %s1999 = sor.u32 256, 16
        %2000 = vbcast.lane.b32.xlu0 %v1990, %s1999
        %v2001 = vpop.permute.xlu0 %2000
        %s2003 = sor.u32 256, 24
        %2004 = vbcast.lane.b32.xlu0 %v1990, %s2003
        %v2005 = vpop.permute.xlu0 %2004
        %s2007 = sor.u32 256, 32
        %2008 = vbcast.lane.b32.xlu0 %v1990, %s2007
        %v2009 = vpop.permute.xlu0 %2008
        %s2011 = sor.u32 256, 40
        %2012 = vbcast.lane.b32.xlu0 %v1990, %s2011
        %v2013 = vpop.permute.xlu0 %2012
        %s2015 = sor.u32 256, 48
        %2016 = vbcast.lane.b32.xlu0 %v1990, %s2015
        %v2017 = vpop.permute.xlu0 %2016
        %s2019 = sor.u32 256, 56
        %2020 = vbcast.lane.b32.xlu0 %v1990, %s2019
        %v2021 = vpop.permute.xlu0 %2020
        %s2023 = sor.u32 256, 64
        %2024 = vbcast.lane.b32.xlu0 %v1990, %s2023
        %v2025 = vpop.permute.xlu0 %2024
        %s2027 = sor.u32 256, 72
        %2028 = vbcast.lane.b32.xlu0 %v1990, %s2027
        %v2029 = vpop.permute.xlu0 %2028
        %s2031 = sor.u32 256, 80
        %2032 = vbcast.lane.b32.xlu0 %v1990, %s2031
        %v2033 = vpop.permute.xlu0 %2032
        %s2035 = sor.u32 256, 88
        %2036 = vbcast.lane.b32.xlu0 %v1990, %s2035
        %v2037 = vpop.permute.xlu0 %2036
        %s2039 = sor.u32 256, 96
        %2040 = vbcast.lane.b32.xlu0 %v1990, %s2039
        %v2041 = vpop.permute.xlu0 %2040
        %s2043 = sor.u32 256, 104
        %2044 = vbcast.lane.b32.xlu0 %v1990, %s2043
        %v2045 = vpop.permute.xlu0 %2044
        %s2047 = sor.u32 256, 112
        %2048 = vbcast.lane.b32.xlu0 %v1990, %s2047
        %v2049 = vpop.permute.xlu0 %2048
        %s2051 = sor.u32 256, 120
        %2052 = vbcast.lane.b32.xlu0 %v1990, %s2051
        %v2053 = vpop.permute.xlu0 %2052
        %v2054 = vlaneseq
        %v2055 = vshrl.u32 %v2054, 7
        %v2056 = vsub.s32 4, %v2055
        %v2057 = vrot.slane %v135, %v2056
        %2059 = vbcast.lane.b32.xlu0 %v2057, 256
        %v2060 = vpop.permute.xlu0 %2059
        %s2062 = sor.u32 256, 8
        %2063 = vbcast.lane.b32.xlu0 %v2057, %s2062
        %v2064 = vpop.permute.xlu0 %2063
        %s2066 = sor.u32 256, 16
        %2067 = vbcast.lane.b32.xlu0 %v2057, %s2066
        %v2068 = vpop.permute.xlu0 %2067
        %s2070 = sor.u32 256, 24
        %2071 = vbcast.lane.b32.xlu0 %v2057, %s2070
        %v2072 = vpop.permute.xlu0 %2071
        %s2074 = sor.u32 256, 32
        %2075 = vbcast.lane.b32.xlu0 %v2057, %s2074
        %v2076 = vpop.permute.xlu0 %2075
        %s2078 = sor.u32 256, 40
        %2079 = vbcast.lane.b32.xlu0 %v2057, %s2078
        %v2080 = vpop.permute.xlu0 %2079
        %s2082 = sor.u32 256, 48
        %2083 = vbcast.lane.b32.xlu0 %v2057, %s2082
        %v2084 = vpop.permute.xlu0 %2083
        %s2086 = sor.u32 256, 56
        %2087 = vbcast.lane.b32.xlu0 %v2057, %s2086
        %v2088 = vpop.permute.xlu0 %2087
        %s2090 = sor.u32 256, 64
        %2091 = vbcast.lane.b32.xlu0 %v2057, %s2090
        %v2092 = vpop.permute.xlu0 %2091
        %s2094 = sor.u32 256, 72
        %2095 = vbcast.lane.b32.xlu0 %v2057, %s2094
        %v2096 = vpop.permute.xlu0 %2095
        %s2098 = sor.u32 256, 80
        %2099 = vbcast.lane.b32.xlu0 %v2057, %s2098
        %v2100 = vpop.permute.xlu0 %2099
        %s2102 = sor.u32 256, 88
        %2103 = vbcast.lane.b32.xlu0 %v2057, %s2102
        %v2104 = vpop.permute.xlu0 %2103
        %s2106 = sor.u32 256, 96
        %2107 = vbcast.lane.b32.xlu0 %v2057, %s2106
        %v2108 = vpop.permute.xlu0 %2107
        %s2110 = sor.u32 256, 104
        %2111 = vbcast.lane.b32.xlu0 %v2057, %s2110
        %v2112 = vpop.permute.xlu0 %2111
        %s2114 = sor.u32 256, 112
        %2115 = vbcast.lane.b32.xlu0 %v2057, %s2114
        %v2116 = vpop.permute.xlu0 %2115
        %s2118 = sor.u32 256, 120
        %2119 = vbcast.lane.b32.xlu0 %v2057, %s2118
        %v2120 = vpop.permute.xlu0 %2119
        %v2121 = vlaneseq
        %v2122 = vshrl.u32 %v2121, 7
        %v2123 = vsub.s32 5, %v2122
        %v2124 = vrot.slane %v135, %v2123
        %2126 = vbcast.lane.b32.xlu0 %v2124, 256
        %v2127 = vpop.permute.xlu0 %2126
        %s2129 = sor.u32 256, 8
        %2130 = vbcast.lane.b32.xlu0 %v2124, %s2129
        %v2131 = vpop.permute.xlu0 %2130
        %s2133 = sor.u32 256, 16
        %2134 = vbcast.lane.b32.xlu0 %v2124, %s2133
        %v2135 = vpop.permute.xlu0 %2134
        %s2137 = sor.u32 256, 24
        %2138 = vbcast.lane.b32.xlu0 %v2124, %s2137
        %v2139 = vpop.permute.xlu0 %2138
        %s2141 = sor.u32 256, 32
        %2142 = vbcast.lane.b32.xlu0 %v2124, %s2141
        %v2143 = vpop.permute.xlu0 %2142
        %s2145 = sor.u32 256, 40
        %2146 = vbcast.lane.b32.xlu0 %v2124, %s2145
        %v2147 = vpop.permute.xlu0 %2146
        %s2149 = sor.u32 256, 48
        %2150 = vbcast.lane.b32.xlu0 %v2124, %s2149
        %v2151 = vpop.permute.xlu0 %2150
        %s2153 = sor.u32 256, 56
        %2154 = vbcast.lane.b32.xlu0 %v2124, %s2153
        %v2155 = vpop.permute.xlu0 %2154
        %s2157 = sor.u32 256, 64
        %2158 = vbcast.lane.b32.xlu0 %v2124, %s2157
        %v2159 = vpop.permute.xlu0 %2158
        %s2161 = sor.u32 256, 72
        %2162 = vbcast.lane.b32.xlu0 %v2124, %s2161
        %v2163 = vpop.permute.xlu0 %2162
        %s2165 = sor.u32 256, 80
        %2166 = vbcast.lane.b32.xlu0 %v2124, %s2165
        %v2167 = vpop.permute.xlu0 %2166
        %s2169 = sor.u32 256, 88
        %2170 = vbcast.lane.b32.xlu0 %v2124, %s2169
        %v2171 = vpop.permute.xlu0 %2170
        %s2173 = sor.u32 256, 96
        %2174 = vbcast.lane.b32.xlu0 %v2124, %s2173
        %v2175 = vpop.permute.xlu0 %2174
        %s2177 = sor.u32 256, 104
        %2178 = vbcast.lane.b32.xlu0 %v2124, %s2177
        %v2179 = vpop.permute.xlu0 %2178
        %s2181 = sor.u32 256, 112
        %2182 = vbcast.lane.b32.xlu0 %v2124, %s2181
        %v2183 = vpop.permute.xlu0 %2182
        %s2185 = sor.u32 256, 120
        %2186 = vbcast.lane.b32.xlu0 %v2124, %s2185
        %v2187 = vpop.permute.xlu0 %2186
        %v2188 = vlaneseq
        %v2189 = vshrl.u32 %v2188, 7
        %v2190 = vsub.s32 6, %v2189
        %v2191 = vrot.slane %v135, %v2190
        %2193 = vbcast.lane.b32.xlu0 %v2191, 256
        %v2194 = vpop.permute.xlu0 %2193
        %s2196 = sor.u32 256, 8
        %2197 = vbcast.lane.b32.xlu0 %v2191, %s2196
        %v2198 = vpop.permute.xlu0 %2197
        %s2200 = sor.u32 256, 16
        %2201 = vbcast.lane.b32.xlu0 %v2191, %s2200
        %v2202 = vpop.permute.xlu0 %2201
        %s2204 = sor.u32 256, 24
        %2205 = vbcast.lane.b32.xlu0 %v2191, %s2204
        %v2206 = vpop.permute.xlu0 %2205
        %s2208 = sor.u32 256, 32
        %2209 = vbcast.lane.b32.xlu0 %v2191, %s2208
        %v2210 = vpop.permute.xlu0 %2209
        %s2212 = sor.u32 256, 40
        %2213 = vbcast.lane.b32.xlu0 %v2191, %s2212
        %v2214 = vpop.permute.xlu0 %2213
        %s2216 = sor.u32 256, 48
        %2217 = vbcast.lane.b32.xlu0 %v2191, %s2216
        %v2218 = vpop.permute.xlu0 %2217
        %s2220 = sor.u32 256, 56
        %2221 = vbcast.lane.b32.xlu0 %v2191, %s2220
        %v2222 = vpop.permute.xlu0 %2221
        %s2224 = sor.u32 256, 64
        %2225 = vbcast.lane.b32.xlu0 %v2191, %s2224
        %v2226 = vpop.permute.xlu0 %2225
        %s2228 = sor.u32 256, 72
        %2229 = vbcast.lane.b32.xlu0 %v2191, %s2228
        %v2230 = vpop.permute.xlu0 %2229
        %s2232 = sor.u32 256, 80
        %2233 = vbcast.lane.b32.xlu0 %v2191, %s2232
        %v2234 = vpop.permute.xlu0 %2233
        %s2236 = sor.u32 256, 88
        %2237 = vbcast.lane.b32.xlu0 %v2191, %s2236
        %v2238 = vpop.permute.xlu0 %2237
        %s2240 = sor.u32 256, 96
        %2241 = vbcast.lane.b32.xlu0 %v2191, %s2240
        %v2242 = vpop.permute.xlu0 %2241
        %s2244 = sor.u32 256, 104
        %2245 = vbcast.lane.b32.xlu0 %v2191, %s2244
        %v2246 = vpop.permute.xlu0 %2245
        %s2248 = sor.u32 256, 112
        %2249 = vbcast.lane.b32.xlu0 %v2191, %s2248
        %v2250 = vpop.permute.xlu0 %2249
        %s2252 = sor.u32 256, 120
        %2253 = vbcast.lane.b32.xlu0 %v2191, %s2252
        %v2254 = vpop.permute.xlu0 %2253
        %v2255 = vlaneseq
        %v2256 = vshrl.u32 %v2255, 7
        %v2257 = vsub.s32 7, %v2256
        %v2258 = vrot.slane %v135, %v2257
        %2260 = vbcast.lane.b32.xlu0 %v2258, 256
        %v2261 = vpop.permute.xlu0 %2260
        %s2263 = sor.u32 256, 8
        %2264 = vbcast.lane.b32.xlu0 %v2258, %s2263
        %v2265 = vpop.permute.xlu0 %2264
        %s2267 = sor.u32 256, 16
        %2268 = vbcast.lane.b32.xlu0 %v2258, %s2267
        %v2269 = vpop.permute.xlu0 %2268
        %s2271 = sor.u32 256, 24
        %2272 = vbcast.lane.b32.xlu0 %v2258, %s2271
        %v2273 = vpop.permute.xlu0 %2272
        %s2275 = sor.u32 256, 32
        %2276 = vbcast.lane.b32.xlu0 %v2258, %s2275
        %v2277 = vpop.permute.xlu0 %2276
        %s2279 = sor.u32 256, 40
        %2280 = vbcast.lane.b32.xlu0 %v2258, %s2279
        %v2281 = vpop.permute.xlu0 %2280
        %s2283 = sor.u32 256, 48
        %2284 = vbcast.lane.b32.xlu0 %v2258, %s2283
        %v2285 = vpop.permute.xlu0 %2284
        %s2287 = sor.u32 256, 56
        %2288 = vbcast.lane.b32.xlu0 %v2258, %s2287
        %v2289 = vpop.permute.xlu0 %2288
        %s2291 = sor.u32 256, 64
        %2292 = vbcast.lane.b32.xlu0 %v2258, %s2291
        %v2293 = vpop.permute.xlu0 %2292
        %s2295 = sor.u32 256, 72
        %2296 = vbcast.lane.b32.xlu0 %v2258, %s2295
        %v2297 = vpop.permute.xlu0 %2296
        %s2299 = sor.u32 256, 80
        %2300 = vbcast.lane.b32.xlu0 %v2258, %s2299
        %v2301 = vpop.permute.xlu0 %2300
        %s2303 = sor.u32 256, 88
        %2304 = vbcast.lane.b32.xlu0 %v2258, %s2303
        %v2305 = vpop.permute.xlu0 %2304
        %s2307 = sor.u32 256, 96
        %2308 = vbcast.lane.b32.xlu0 %v2258, %s2307
        %v2309 = vpop.permute.xlu0 %2308
        %s2311 = sor.u32 256, 104
        %2312 = vbcast.lane.b32.xlu0 %v2258, %s2311
        %v2313 = vpop.permute.xlu0 %2312
        %s2315 = sor.u32 256, 112
        %2316 = vbcast.lane.b32.xlu0 %v2258, %s2315
        %v2317 = vpop.permute.xlu0 %2316
        %s2319 = sor.u32 256, 120
        %2320 = vbcast.lane.b32.xlu0 %v2258, %s2319
        %v2321 = vpop.permute.xlu0 %2320
        %v2450 = vmul.f32 %v1147, %v1792
        %v2451 = vmul.f32 %v1149, %v1796
        %v2452 = vmul.f32 %v1151, %v1800
        %v2453 = vmul.f32 %v1153, %v1804
        %v2454 = vmul.f32 %v1155, %v1808
        %v2455 = vmul.f32 %v1157, %v1812
        %v2456 = vmul.f32 %v1159, %v1816
        %v2457 = vmul.f32 %v1161, %v1820
        %v2458 = vmul.f32 %v1163, %v1824
        %v2459 = vmul.f32 %v1165, %v1828
        %v2460 = vmul.f32 %v1167, %v1832
        %v2461 = vmul.f32 %v1169, %v1836
        %v2462 = vmul.f32 %v1171, %v1840
        %v2463 = vmul.f32 %v1173, %v1844
        %v2464 = vmul.f32 %v1175, %v1848
        %v2465 = vmul.f32 %v1177, %v1852
        %v2466 = vmul.f32 %v1179, %v1859
        %v2467 = vmul.f32 %v1181, %v1863
        %v2468 = vmul.f32 %v1183, %v1867
        %v2469 = vmul.f32 %v1185, %v1871
        %v2470 = vmul.f32 %v1187, %v1875
        %v2471 = vmul.f32 %v1189, %v1879
        %v2472 = vmul.f32 %v1191, %v1883
        %v2473 = vmul.f32 %v1193, %v1887
        %v2474 = vmul.f32 %v1195, %v1891
        %v2475 = vmul.f32 %v1197, %v1895
        %v2476 = vmul.f32 %v1199, %v1899
        %v2477 = vmul.f32 %v1201, %v1903
        %v2478 = vmul.f32 %v1203, %v1907
        %v2479 = vmul.f32 %v1205, %v1911
        %v2480 = vmul.f32 %v1207, %v1915
        %v2481 = vmul.f32 %v1209, %v1919
        %v2482 = vmul.f32 %v1211, %v1926
        %v2483 = vmul.f32 %v1213, %v1930
        %v2484 = vmul.f32 %v1215, %v1934
        %v2485 = vmul.f32 %v1217, %v1938
        %v2486 = vmul.f32 %v1219, %v1942
        %v2487 = vmul.f32 %v1221, %v1946
        %v2488 = vmul.f32 %v1223, %v1950
        %v2489 = vmul.f32 %v1225, %v1954
        %v2490 = vmul.f32 %v1227, %v1958
        %v2491 = vmul.f32 %v1229, %v1962
        %v2492 = vmul.f32 %v1231, %v1966
        %v2493 = vmul.f32 %v1233, %v1970
        %v2494 = vmul.f32 %v1235, %v1974
        %v2495 = vmul.f32 %v1237, %v1978
        %v2496 = vmul.f32 %v1239, %v1982
        %v2497 = vmul.f32 %v1241, %v1986
        %v2498 = vmul.f32 %v1243, %v1993
        %v2499 = vmul.f32 %v1245, %v1997
        %v2500 = vmul.f32 %v1247, %v2001
        %v2501 = vmul.f32 %v1249, %v2005
        %v2502 = vmul.f32 %v1251, %v2009
        %v2503 = vmul.f32 %v1253, %v2013
        %v2504 = vmul.f32 %v1255, %v2017
        %v2505 = vmul.f32 %v1257, %v2021
        %v2506 = vmul.f32 %v1259, %v2025
        %v2507 = vmul.f32 %v1261, %v2029
        %v2508 = vmul.f32 %v1263, %v2033
        %v2509 = vmul.f32 %v1265, %v2037
        %v2510 = vmul.f32 %v1267, %v2041
        %v2511 = vmul.f32 %v1269, %v2045
        %v2512 = vmul.f32 %v1271, %v2049
        %v2513 = vmul.f32 %v1273, %v2053
        %v2514 = vmul.f32 %v1275, %v2060
        %v2515 = vmul.f32 %v1277, %v2064
        %v2516 = vmul.f32 %v1279, %v2068
        %v2517 = vmul.f32 %v1281, %v2072
        %v2518 = vmul.f32 %v1283, %v2076
        %v2519 = vmul.f32 %v1285, %v2080
        %v2520 = vmul.f32 %v1287, %v2084
        %v2521 = vmul.f32 %v1289, %v2088
        %v2522 = vmul.f32 %v1291, %v2092
        %v2523 = vmul.f32 %v1293, %v2096
        %v2524 = vmul.f32 %v1295, %v2100
        %v2525 = vmul.f32 %v1297, %v2104
        %v2526 = vmul.f32 %v1299, %v2108
        %v2527 = vmul.f32 %v1301, %v2112
        %v2528 = vmul.f32 %v1303, %v2116
        %v2529 = vmul.f32 %v1305, %v2120
        %v2530 = vmul.f32 %v1307, %v2127
        %v2531 = vmul.f32 %v1309, %v2131
        %v2532 = vmul.f32 %v1311, %v2135
        %v2533 = vmul.f32 %v1313, %v2139
        %v2534 = vmul.f32 %v1315, %v2143
        %v2535 = vmul.f32 %v1317, %v2147
        %v2536 = vmul.f32 %v1319, %v2151
        %v2537 = vmul.f32 %v1321, %v2155
        %v2538 = vmul.f32 %v1323, %v2159
        %v2539 = vmul.f32 %v1325, %v2163
        %v2540 = vmul.f32 %v1327, %v2167
        %v2541 = vmul.f32 %v1329, %v2171
        %v2542 = vmul.f32 %v1331, %v2175
        %v2543 = vmul.f32 %v1333, %v2179
        %v2544 = vmul.f32 %v1335, %v2183
        %v2545 = vmul.f32 %v1337, %v2187
        %v2546 = vmul.f32 %v1339, %v2194
        %v2547 = vmul.f32 %v1341, %v2198
        %v2548 = vmul.f32 %v1343, %v2202
        %v2549 = vmul.f32 %v1345, %v2206
        %v2550 = vmul.f32 %v1347, %v2210
        %v2551 = vmul.f32 %v1349, %v2214
        %v2552 = vmul.f32 %v1351, %v2218
        %v2553 = vmul.f32 %v1353, %v2222
        %v2554 = vmul.f32 %v1355, %v2226
        %v2555 = vmul.f32 %v1357, %v2230
        %v2556 = vmul.f32 %v1359, %v2234
        %v2557 = vmul.f32 %v1361, %v2238
        %v2558 = vmul.f32 %v1363, %v2242
        %v2559 = vmul.f32 %v1365, %v2246
        %v2560 = vmul.f32 %v1367, %v2250
        %v2561 = vmul.f32 %v1369, %v2254
        %v2562 = vmul.f32 %v1371, %v2261
        %v2563 = vmul.f32 %v1373, %v2265
        %v2564 = vmul.f32 %v1375, %v2269
        %v2565 = vmul.f32 %v1377, %v2273
        %v2566 = vmul.f32 %v1379, %v2277
        %v2567 = vmul.f32 %v1381, %v2281
        %v2568 = vmul.f32 %v1383, %v2285
        %v2569 = vmul.f32 %v1385, %v2289
        %v2570 = vmul.f32 %v1387, %v2293
        %v2571 = vmul.f32 %v1389, %v2297
        %v2572 = vmul.f32 %v1391, %v2301
        %v2573 = vmul.f32 %v1393, %v2305
        %v2574 = vmul.f32 %v1395, %v2309
        %v2575 = vmul.f32 %v1397, %v2313
        %v2576 = vmul.f32 %v1399, %v2317
        %v2577 = vmul.f32 %v1401, %v2321
        %v2578 = vadd.f32 %v2450, 1.0
        %v2579 = vadd.f32 %v2451, 1.0
        %v2580 = vadd.f32 %v2452, 1.0
        %v2581 = vadd.f32 %v2453, 1.0
        %v2582 = vadd.f32 %v2454, 1.0
        %v2583 = vadd.f32 %v2455, 1.0
        %v2584 = vadd.f32 %v2456, 1.0
        %v2585 = vadd.f32 %v2457, 1.0
        %v2586 = vadd.f32 %v2458, 1.0
        %v2587 = vadd.f32 %v2459, 1.0
        %v2588 = vadd.f32 %v2460, 1.0
        %v2589 = vadd.f32 %v2461, 1.0
        %v2590 = vadd.f32 %v2462, 1.0
        %v2591 = vadd.f32 %v2463, 1.0
        %v2592 = vadd.f32 %v2464, 1.0
        %v2593 = vadd.f32 %v2465, 1.0
        %v2594 = vadd.f32 %v2466, 1.0
        %v2595 = vadd.f32 %v2467, 1.0
        %v2596 = vadd.f32 %v2468, 1.0
        %v2597 = vadd.f32 %v2469, 1.0
        %v2598 = vadd.f32 %v2470, 1.0
        %v2599 = vadd.f32 %v2471, 1.0
        %v2600 = vadd.f32 %v2472, 1.0
        %v2601 = vadd.f32 %v2473, 1.0
        %v2602 = vadd.f32 %v2474, 1.0
        %v2603 = vadd.f32 %v2475, 1.0
        %v2604 = vadd.f32 %v2476, 1.0
        %v2605 = vadd.f32 %v2477, 1.0
        %v2606 = vadd.f32 %v2478, 1.0
        %v2607 = vadd.f32 %v2479, 1.0
        %v2608 = vadd.f32 %v2480, 1.0
        %v2609 = vadd.f32 %v2481, 1.0
        %v2610 = vadd.f32 %v2482, 1.0
        %v2611 = vadd.f32 %v2483, 1.0
        %v2612 = vadd.f32 %v2484, 1.0
        %v2613 = vadd.f32 %v2485, 1.0
        %v2614 = vadd.f32 %v2486, 1.0
        %v2615 = vadd.f32 %v2487, 1.0
        %v2616 = vadd.f32 %v2488, 1.0
        %v2617 = vadd.f32 %v2489, 1.0
        %v2618 = vadd.f32 %v2490, 1.0
        %v2619 = vadd.f32 %v2491, 1.0
        %v2620 = vadd.f32 %v2492, 1.0
        %v2621 = vadd.f32 %v2493, 1.0
        %v2622 = vadd.f32 %v2494, 1.0
        %v2623 = vadd.f32 %v2495, 1.0
        %v2624 = vadd.f32 %v2496, 1.0
        %v2625 = vadd.f32 %v2497, 1.0
        %v2626 = vadd.f32 %v2498, 1.0
        %v2627 = vadd.f32 %v2499, 1.0
        %v2628 = vadd.f32 %v2500, 1.0
        %v2629 = vadd.f32 %v2501, 1.0
        %v2630 = vadd.f32 %v2502, 1.0
        %v2631 = vadd.f32 %v2503, 1.0
        %v2632 = vadd.f32 %v2504, 1.0
        %v2633 = vadd.f32 %v2505, 1.0
        %v2634 = vadd.f32 %v2506, 1.0
        %v2635 = vadd.f32 %v2507, 1.0
        %v2636 = vadd.f32 %v2508, 1.0
        %v2637 = vadd.f32 %v2509, 1.0
        %v2638 = vadd.f32 %v2510, 1.0
        %v2639 = vadd.f32 %v2511, 1.0
        %v2640 = vadd.f32 %v2512, 1.0
        %v2641 = vadd.f32 %v2513, 1.0
        %v2642 = vadd.f32 %v2514, 1.0
        %v2643 = vadd.f32 %v2515, 1.0
        %v2644 = vadd.f32 %v2516, 1.0
        %v2645 = vadd.f32 %v2517, 1.0
        %v2646 = vadd.f32 %v2518, 1.0
        %v2647 = vadd.f32 %v2519, 1.0
        %v2648 = vadd.f32 %v2520, 1.0
        %v2649 = vadd.f32 %v2521, 1.0
        %v2650 = vadd.f32 %v2522, 1.0
        %v2651 = vadd.f32 %v2523, 1.0
        %v2652 = vadd.f32 %v2524, 1.0
        %v2653 = vadd.f32 %v2525, 1.0
        %v2654 = vadd.f32 %v2526, 1.0
        %v2655 = vadd.f32 %v2527, 1.0
        %v2656 = vadd.f32 %v2528, 1.0
        %v2657 = vadd.f32 %v2529, 1.0
        %v2658 = vadd.f32 %v2530, 1.0
        %v2659 = vadd.f32 %v2531, 1.0
        %v2660 = vadd.f32 %v2532, 1.0
        %v2661 = vadd.f32 %v2533, 1.0
        %v2662 = vadd.f32 %v2534, 1.0
        %v2663 = vadd.f32 %v2535, 1.0
        %v2664 = vadd.f32 %v2536, 1.0
        %v2665 = vadd.f32 %v2537, 1.0
        %v2666 = vadd.f32 %v2538, 1.0
        %v2667 = vadd.f32 %v2539, 1.0
        %v2668 = vadd.f32 %v2540, 1.0
        %v2669 = vadd.f32 %v2541, 1.0
        %v2670 = vadd.f32 %v2542, 1.0
        %v2671 = vadd.f32 %v2543, 1.0
        %v2672 = vadd.f32 %v2544, 1.0
        %v2673 = vadd.f32 %v2545, 1.0
        %v2674 = vadd.f32 %v2546, 1.0
        %v2675 = vadd.f32 %v2547, 1.0
        %v2676 = vadd.f32 %v2548, 1.0
        %v2677 = vadd.f32 %v2549, 1.0
        %v2678 = vadd.f32 %v2550, 1.0
        %v2679 = vadd.f32 %v2551, 1.0
        %v2680 = vadd.f32 %v2552, 1.0
        %v2681 = vadd.f32 %v2553, 1.0
        %v2682 = vadd.f32 %v2554, 1.0
        %v2683 = vadd.f32 %v2555, 1.0
        %v2684 = vadd.f32 %v2556, 1.0
        %v2685 = vadd.f32 %v2557, 1.0
        %v2686 = vadd.f32 %v2558, 1.0
        %v2687 = vadd.f32 %v2559, 1.0
        %v2688 = vadd.f32 %v2560, 1.0
        %v2689 = vadd.f32 %v2561, 1.0
        %v2690 = vadd.f32 %v2562, 1.0
        %v2691 = vadd.f32 %v2563, 1.0
        %v2692 = vadd.f32 %v2564, 1.0
        %v2693 = vadd.f32 %v2565, 1.0
        %v2694 = vadd.f32 %v2566, 1.0
        %v2695 = vadd.f32 %v2567, 1.0
        %v2696 = vadd.f32 %v2568, 1.0
        %v2697 = vadd.f32 %v2569, 1.0
        %v2698 = vadd.f32 %v2570, 1.0
        %v2699 = vadd.f32 %v2571, 1.0
        %v2700 = vadd.f32 %v2572, 1.0
        %v2701 = vadd.f32 %v2573, 1.0
        %v2702 = vadd.f32 %v2574, 1.0
        %v2703 = vadd.f32 %v2575, 1.0
        %v2704 = vadd.f32 %v2576, 1.0
        %v2705 = vadd.f32 %v2577, 1.0
        %vm2706 = vcmp.gt.f32.partialorder %v2578, %v1531
        %vm2707 = vcmp.gt.f32.partialorder %v2579, %v1533
        %vm2708 = vcmp.gt.f32.partialorder %v2580, %v1535
        %vm2709 = vcmp.gt.f32.partialorder %v2581, %v1537
        %vm2710 = vcmp.gt.f32.partialorder %v2582, %v1539
        %vm2711 = vcmp.gt.f32.partialorder %v2583, %v1541
        %vm2712 = vcmp.gt.f32.partialorder %v2584, %v1543
        %vm2713 = vcmp.gt.f32.partialorder %v2585, %v1545
        %vm2714 = vcmp.gt.f32.partialorder %v2586, %v1547
        %vm2715 = vcmp.gt.f32.partialorder %v2587, %v1549
        %vm2716 = vcmp.gt.f32.partialorder %v2588, %v1551
        %vm2717 = vcmp.gt.f32.partialorder %v2589, %v1553
        %vm2718 = vcmp.gt.f32.partialorder %v2590, %v1555
        %vm2719 = vcmp.gt.f32.partialorder %v2591, %v1557
        %vm2720 = vcmp.gt.f32.partialorder %v2592, %v1559
        %vm2721 = vcmp.gt.f32.partialorder %v2593, %v1561
        %vm2722 = vcmp.gt.f32.partialorder %v2594, %v1563
        %vm2723 = vcmp.gt.f32.partialorder %v2595, %v1565
        %vm2724 = vcmp.gt.f32.partialorder %v2596, %v1567
        %vm2725 = vcmp.gt.f32.partialorder %v2597, %v1569
        %vm2726 = vcmp.gt.f32.partialorder %v2598, %v1571
        %vm2727 = vcmp.gt.f32.partialorder %v2599, %v1573
        %vm2728 = vcmp.gt.f32.partialorder %v2600, %v1575
        %vm2729 = vcmp.gt.f32.partialorder %v2601, %v1577
        %vm2730 = vcmp.gt.f32.partialorder %v2602, %v1579
        %vm2731 = vcmp.gt.f32.partialorder %v2603, %v1581
        %vm2732 = vcmp.gt.f32.partialorder %v2604, %v1583
        %vm2733 = vcmp.gt.f32.partialorder %v2605, %v1585
        %vm2734 = vcmp.gt.f32.partialorder %v2606, %v1587
        %vm2735 = vcmp.gt.f32.partialorder %v2607, %v1589
        %vm2736 = vcmp.gt.f32.partialorder %v2608, %v1591
        %vm2737 = vcmp.gt.f32.partialorder %v2609, %v1593
        %vm2738 = vcmp.gt.f32.partialorder %v2610, %v1595
        %vm2739 = vcmp.gt.f32.partialorder %v2611, %v1597
        %vm2740 = vcmp.gt.f32.partialorder %v2612, %v1599
        %vm2741 = vcmp.gt.f32.partialorder %v2613, %v1601
        %vm2742 = vcmp.gt.f32.partialorder %v2614, %v1603
        %vm2743 = vcmp.gt.f32.partialorder %v2615, %v1605
        %vm2744 = vcmp.gt.f32.partialorder %v2616, %v1607
        %vm2745 = vcmp.gt.f32.partialorder %v2617, %v1609
        %vm2746 = vcmp.gt.f32.partialorder %v2618, %v1611
        %vm2747 = vcmp.gt.f32.partialorder %v2619, %v1613
        %vm2748 = vcmp.gt.f32.partialorder %v2620, %v1615
        %vm2749 = vcmp.gt.f32.partialorder %v2621, %v1617
        %vm2750 = vcmp.gt.f32.partialorder %v2622, %v1619
        %vm2751 = vcmp.gt.f32.partialorder %v2623, %v1621
        %vm2752 = vcmp.gt.f32.partialorder %v2624, %v1623
        %vm2753 = vcmp.gt.f32.partialorder %v2625, %v1625
        %vm2754 = vcmp.gt.f32.partialorder %v2626, %v1627
        %vm2755 = vcmp.gt.f32.partialorder %v2627, %v1629
        %vm2756 = vcmp.gt.f32.partialorder %v2628, %v1631
        %vm2757 = vcmp.gt.f32.partialorder %v2629, %v1633
        %vm2758 = vcmp.gt.f32.partialorder %v2630, %v1635
        %vm2759 = vcmp.gt.f32.partialorder %v2631, %v1637
        %vm2760 = vcmp.gt.f32.partialorder %v2632, %v1639
        %vm2761 = vcmp.gt.f32.partialorder %v2633, %v1641
        %vm2762 = vcmp.gt.f32.partialorder %v2634, %v1643
        %vm2763 = vcmp.gt.f32.partialorder %v2635, %v1645
        %vm2764 = vcmp.gt.f32.partialorder %v2636, %v1647
        %vm2765 = vcmp.gt.f32.partialorder %v2637, %v1649
        %vm2766 = vcmp.gt.f32.partialorder %v2638, %v1651
        %vm2767 = vcmp.gt.f32.partialorder %v2639, %v1653
        %vm2768 = vcmp.gt.f32.partialorder %v2640, %v1655
        %vm2769 = vcmp.gt.f32.partialorder %v2641, %v1657
        %vm2770 = vcmp.gt.f32.partialorder %v2642, %v1659
        %vm2771 = vcmp.gt.f32.partialorder %v2643, %v1661
        %vm2772 = vcmp.gt.f32.partialorder %v2644, %v1663
        %vm2773 = vcmp.gt.f32.partialorder %v2645, %v1665
        %vm2774 = vcmp.gt.f32.partialorder %v2646, %v1667
        %vm2775 = vcmp.gt.f32.partialorder %v2647, %v1669
        %vm2776 = vcmp.gt.f32.partialorder %v2648, %v1671
        %vm2777 = vcmp.gt.f32.partialorder %v2649, %v1673
        %vm2778 = vcmp.gt.f32.partialorder %v2650, %v1675
        %vm2779 = vcmp.gt.f32.partialorder %v2651, %v1677
        %vm2780 = vcmp.gt.f32.partialorder %v2652, %v1679
        %vm2781 = vcmp.gt.f32.partialorder %v2653, %v1681
        %vm2782 = vcmp.gt.f32.partialorder %v2654, %v1683
        %vm2783 = vcmp.gt.f32.partialorder %v2655, %v1685
        %vm2784 = vcmp.gt.f32.partialorder %v2656, %v1687
        %vm2785 = vcmp.gt.f32.partialorder %v2657, %v1689
        %vm2786 = vcmp.gt.f32.partialorder %v2658, %v1691
        %vm2787 = vcmp.gt.f32.partialorder %v2659, %v1693
        %vm2788 = vcmp.gt.f32.partialorder %v2660, %v1695
        %vm2789 = vcmp.gt.f32.partialorder %v2661, %v1697
        %vm2790 = vcmp.gt.f32.partialorder %v2662, %v1699
        %vm2791 = vcmp.gt.f32.partialorder %v2663, %v1701
        %vm2792 = vcmp.gt.f32.partialorder %v2664, %v1703
        %vm2793 = vcmp.gt.f32.partialorder %v2665, %v1705
        %vm2794 = vcmp.gt.f32.partialorder %v2666, %v1707
        %vm2795 = vcmp.gt.f32.partialorder %v2667, %v1709
        %vm2796 = vcmp.gt.f32.partialorder %v2668, %v1711
        %vm2797 = vcmp.gt.f32.partialorder %v2669, %v1713
        %vm2798 = vcmp.gt.f32.partialorder %v2670, %v1715
        %vm2799 = vcmp.gt.f32.partialorder %v2671, %v1717
        %vm2800 = vcmp.gt.f32.partialorder %v2672, %v1719
        %vm2801 = vcmp.gt.f32.partialorder %v2673, %v1721
        %vm2802 = vcmp.gt.f32.partialorder %v2674, %v1723
        %vm2803 = vcmp.gt.f32.partialorder %v2675, %v1725
        %vm2804 = vcmp.gt.f32.partialorder %v2676, %v1727
        %vm2805 = vcmp.gt.f32.partialorder %v2677, %v1729
        %vm2806 = vcmp.gt.f32.partialorder %v2678, %v1731
        %vm2807 = vcmp.gt.f32.partialorder %v2679, %v1733
        %vm2808 = vcmp.gt.f32.partialorder %v2680, %v1735
        %vm2809 = vcmp.gt.f32.partialorder %v2681, %v1737
        %vm2810 = vcmp.gt.f32.partialorder %v2682, %v1739
        %vm2811 = vcmp.gt.f32.partialorder %v2683, %v1741
        %vm2812 = vcmp.gt.f32.partialorder %v2684, %v1743
        %vm2813 = vcmp.gt.f32.partialorder %v2685, %v1745
        %vm2814 = vcmp.gt.f32.partialorder %v2686, %v1747
        %vm2815 = vcmp.gt.f32.partialorder %v2687, %v1749
        %vm2816 = vcmp.gt.f32.partialorder %v2688, %v1751
        %vm2817 = vcmp.gt.f32.partialorder %v2689, %v1753
        %vm2818 = vcmp.gt.f32.partialorder %v2690, %v1755
        %vm2819 = vcmp.gt.f32.partialorder %v2691, %v1757
        %vm2820 = vcmp.gt.f32.partialorder %v2692, %v1759
        %vm2821 = vcmp.gt.f32.partialorder %v2693, %v1761
        %vm2822 = vcmp.gt.f32.partialorder %v2694, %v1763
        %vm2823 = vcmp.gt.f32.partialorder %v2695, %v1765
        %vm2824 = vcmp.gt.f32.partialorder %v2696, %v1767
        %vm2825 = vcmp.gt.f32.partialorder %v2697, %v1769
        %vm2826 = vcmp.gt.f32.partialorder %v2698, %v1771
        %vm2827 = vcmp.gt.f32.partialorder %v2699, %v1773
        %vm2828 = vcmp.gt.f32.partialorder %v2700, %v1775
        %vm2829 = vcmp.gt.f32.partialorder %v2701, %v1777
        %vm2830 = vcmp.gt.f32.partialorder %v2702, %v1779
        %vm2831 = vcmp.gt.f32.partialorder %v2703, %v1781
        %vm2832 = vcmp.gt.f32.partialorder %v2704, %v1783
        %vm2833 = vcmp.gt.f32.partialorder %v2705, %v1785
        %v2834 = vsel %vm2706, 1, 0
        %v2835 = vsel %vm2707, 1, 0
        %v2836 = vsel %vm2708, 1, 0
        %v2837 = vsel %vm2709, 1, 0
        %v2838 = vsel %vm2710, 1, 0
        %v2839 = vsel %vm2711, 1, 0
        %v2840 = vsel %vm2712, 1, 0
        %v2841 = vsel %vm2713, 1, 0
        %v2842 = vsel %vm2714, 1, 0
        %v2843 = vsel %vm2715, 1, 0
        %v2844 = vsel %vm2716, 1, 0
        %v2845 = vsel %vm2717, 1, 0
        %v2846 = vsel %vm2718, 1, 0
        %v2847 = vsel %vm2719, 1, 0
        %v2848 = vsel %vm2720, 1, 0
        %v2849 = vsel %vm2721, 1, 0
        %v2850 = vsel %vm2722, 1, 0
        %v2851 = vsel %vm2723, 1, 0
        %v2852 = vsel %vm2724, 1, 0
        %v2853 = vsel %vm2725, 1, 0
        %v2854 = vsel %vm2726, 1, 0
        %v2855 = vsel %vm2727, 1, 0
        %v2856 = vsel %vm2728, 1, 0
        %v2857 = vsel %vm2729, 1, 0
        %v2858 = vsel %vm2730, 1, 0
        %v2859 = vsel %vm2731, 1, 0
        %v2860 = vsel %vm2732, 1, 0
        %v2861 = vsel %vm2733, 1, 0
        %v2862 = vsel %vm2734, 1, 0
        %v2863 = vsel %vm2735, 1, 0
        %v2864 = vsel %vm2736, 1, 0
        %v2865 = vsel %vm2737, 1, 0
        %v2866 = vsel %vm2738, 1, 0
        %v2867 = vsel %vm2739, 1, 0
        %v2868 = vsel %vm2740, 1, 0
        %v2869 = vsel %vm2741, 1, 0
        %v2870 = vsel %vm2742, 1, 0
        %v2871 = vsel %vm2743, 1, 0
        %v2872 = vsel %vm2744, 1, 0
        %v2873 = vsel %vm2745, 1, 0
        %v2874 = vsel %vm2746, 1, 0
        %v2875 = vsel %vm2747, 1, 0
        %v2876 = vsel %vm2748, 1, 0
        %v2877 = vsel %vm2749, 1, 0
        %v2878 = vsel %vm2750, 1, 0
        %v2879 = vsel %vm2751, 1, 0
        %v2880 = vsel %vm2752, 1, 0
        %v2881 = vsel %vm2753, 1, 0
        %v2882 = vsel %vm2754, 1, 0
        %v2883 = vsel %vm2755, 1, 0
        %v2884 = vsel %vm2756, 1, 0
        %v2885 = vsel %vm2757, 1, 0
        %v2886 = vsel %vm2758, 1, 0
        %v2887 = vsel %vm2759, 1, 0
        %v2888 = vsel %vm2760, 1, 0
        %v2889 = vsel %vm2761, 1, 0
        %v2890 = vsel %vm2762, 1, 0
        %v2891 = vsel %vm2763, 1, 0
        %v2892 = vsel %vm2764, 1, 0
        %v2893 = vsel %vm2765, 1, 0
        %v2894 = vsel %vm2766, 1, 0
        %v2895 = vsel %vm2767, 1, 0
        %v2896 = vsel %vm2768, 1, 0
        %v2897 = vsel %vm2769, 1, 0
        %v2898 = vsel %vm2770, 1, 0
        %v2899 = vsel %vm2771, 1, 0
        %v2900 = vsel %vm2772, 1, 0
        %v2901 = vsel %vm2773, 1, 0
        %v2902 = vsel %vm2774, 1, 0
        %v2903 = vsel %vm2775, 1, 0
        %v2904 = vsel %vm2776, 1, 0
        %v2905 = vsel %vm2777, 1, 0
        %v2906 = vsel %vm2778, 1, 0
        %v2907 = vsel %vm2779, 1, 0
        %v2908 = vsel %vm2780, 1, 0
        %v2909 = vsel %vm2781, 1, 0
        %v2910 = vsel %vm2782, 1, 0
        %v2911 = vsel %vm2783, 1, 0
        %v2912 = vsel %vm2784, 1, 0
        %v2913 = vsel %vm2785, 1, 0
        %v2914 = vsel %vm2786, 1, 0
        %v2915 = vsel %vm2787, 1, 0
        %v2916 = vsel %vm2788, 1, 0
        %v2917 = vsel %vm2789, 1, 0
        %v2918 = vsel %vm2790, 1, 0
        %v2919 = vsel %vm2791, 1, 0
        %v2920 = vsel %vm2792, 1, 0
        %v2921 = vsel %vm2793, 1, 0
        %v2922 = vsel %vm2794, 1, 0
        %v2923 = vsel %vm2795, 1, 0
        %v2924 = vsel %vm2796, 1, 0
        %v2925 = vsel %vm2797, 1, 0
        %v2926 = vsel %vm2798, 1, 0
        %v2927 = vsel %vm2799, 1, 0
        %v2928 = vsel %vm2800, 1, 0
        %v2929 = vsel %vm2801, 1, 0
        %v2930 = vsel %vm2802, 1, 0
        %v2931 = vsel %vm2803, 1, 0
        %v2932 = vsel %vm2804, 1, 0
        %v2933 = vsel %vm2805, 1, 0
        %v2934 = vsel %vm2806, 1, 0
        %v2935 = vsel %vm2807, 1, 0
        %v2936 = vsel %vm2808, 1, 0
        %v2937 = vsel %vm2809, 1, 0
        %v2938 = vsel %vm2810, 1, 0
        %v2939 = vsel %vm2811, 1, 0
        %v2940 = vsel %vm2812, 1, 0
        %v2941 = vsel %vm2813, 1, 0
        %v2942 = vsel %vm2814, 1, 0
        %v2943 = vsel %vm2815, 1, 0
        %v2944 = vsel %vm2816, 1, 0
        %v2945 = vsel %vm2817, 1, 0
        %v2946 = vsel %vm2818, 1, 0
        %v2947 = vsel %vm2819, 1, 0
        %v2948 = vsel %vm2820, 1, 0
        %v2949 = vsel %vm2821, 1, 0
        %v2950 = vsel %vm2822, 1, 0
        %v2951 = vsel %vm2823, 1, 0
        %v2952 = vsel %vm2824, 1, 0
        %v2953 = vsel %vm2825, 1, 0
        %v2954 = vsel %vm2826, 1, 0
        %v2955 = vsel %vm2827, 1, 0
        %v2956 = vsel %vm2828, 1, 0
        %v2957 = vsel %vm2829, 1, 0
        %v2958 = vsel %vm2830, 1, 0
        %v2959 = vsel %vm2831, 1, 0
        %v2960 = vsel %vm2832, 1, 0
        %v2961 = vsel %vm2833, 1, 0
        %v2962 = vcvt.s32.f32 %v2834
        %v2963 = vcvt.s32.f32 %v2835
        %v2964 = vcvt.s32.f32 %v2836
        %v2965 = vcvt.s32.f32 %v2837
        %v2966 = vcvt.s32.f32 %v2838
        %v2967 = vcvt.s32.f32 %v2839
        %v2968 = vcvt.s32.f32 %v2840
        %v2969 = vcvt.s32.f32 %v2841
        %v2970 = vcvt.s32.f32 %v2842
        %v2971 = vcvt.s32.f32 %v2843
        %v2972 = vcvt.s32.f32 %v2844
        %v2973 = vcvt.s32.f32 %v2845
        %v2974 = vcvt.s32.f32 %v2846
        %v2975 = vcvt.s32.f32 %v2847
        %v2976 = vcvt.s32.f32 %v2848
        %v2977 = vcvt.s32.f32 %v2849
        %v2978 = vcvt.s32.f32 %v2850
        %v2979 = vcvt.s32.f32 %v2851
        %v2980 = vcvt.s32.f32 %v2852
        %v2981 = vcvt.s32.f32 %v2853
        %v2982 = vcvt.s32.f32 %v2854
        %v2983 = vcvt.s32.f32 %v2855
        %v2984 = vcvt.s32.f32 %v2856
        %v2985 = vcvt.s32.f32 %v2857
        %v2986 = vcvt.s32.f32 %v2858
        %v2987 = vcvt.s32.f32 %v2859
        %v2988 = vcvt.s32.f32 %v2860
        %v2989 = vcvt.s32.f32 %v2861
        %v2990 = vcvt.s32.f32 %v2862
        %v2991 = vcvt.s32.f32 %v2863
        %v2992 = vcvt.s32.f32 %v2864
        %v2993 = vcvt.s32.f32 %v2865
        %v2994 = vcvt.s32.f32 %v2866
        %v2995 = vcvt.s32.f32 %v2867
        %v2996 = vcvt.s32.f32 %v2868
        %v2997 = vcvt.s32.f32 %v2869
        %v2998 = vcvt.s32.f32 %v2870
        %v2999 = vcvt.s32.f32 %v2871
        %v3000 = vcvt.s32.f32 %v2872
        %v3001 = vcvt.s32.f32 %v2873
        %v3002 = vcvt.s32.f32 %v2874
        %v3003 = vcvt.s32.f32 %v2875
        %v3004 = vcvt.s32.f32 %v2876
        %v3005 = vcvt.s32.f32 %v2877
        %v3006 = vcvt.s32.f32 %v2878
        %v3007 = vcvt.s32.f32 %v2879
        %v3008 = vcvt.s32.f32 %v2880
        %v3009 = vcvt.s32.f32 %v2881
        %v3010 = vcvt.s32.f32 %v2882
        %v3011 = vcvt.s32.f32 %v2883
        %v3012 = vcvt.s32.f32 %v2884
        %v3013 = vcvt.s32.f32 %v2885
        %v3014 = vcvt.s32.f32 %v2886
        %v3015 = vcvt.s32.f32 %v2887
        %v3016 = vcvt.s32.f32 %v2888
        %v3017 = vcvt.s32.f32 %v2889
        %v3018 = vcvt.s32.f32 %v2890
        %v3019 = vcvt.s32.f32 %v2891
        %v3020 = vcvt.s32.f32 %v2892
        %v3021 = vcvt.s32.f32 %v2893
        %v3022 = vcvt.s32.f32 %v2894
        %v3023 = vcvt.s32.f32 %v2895
        %v3024 = vcvt.s32.f32 %v2896
        %v3025 = vcvt.s32.f32 %v2897
        %v3026 = vcvt.s32.f32 %v2898
        %v3027 = vcvt.s32.f32 %v2899
        %v3028 = vcvt.s32.f32 %v2900
        %v3029 = vcvt.s32.f32 %v2901
        %v3030 = vcvt.s32.f32 %v2902
        %v3031 = vcvt.s32.f32 %v2903
        %v3032 = vcvt.s32.f32 %v2904
        %v3033 = vcvt.s32.f32 %v2905
        %v3034 = vcvt.s32.f32 %v2906
        %v3035 = vcvt.s32.f32 %v2907
        %v3036 = vcvt.s32.f32 %v2908
        %v3037 = vcvt.s32.f32 %v2909
        %v3038 = vcvt.s32.f32 %v2910
        %v3039 = vcvt.s32.f32 %v2911
        %v3040 = vcvt.s32.f32 %v2912
        %v3041 = vcvt.s32.f32 %v2913
        %v3042 = vcvt.s32.f32 %v2914
        %v3043 = vcvt.s32.f32 %v2915
        %v3044 = vcvt.s32.f32 %v2916
        %v3045 = vcvt.s32.f32 %v2917
        %v3046 = vcvt.s32.f32 %v2918
        %v3047 = vcvt.s32.f32 %v2919
        %v3048 = vcvt.s32.f32 %v2920
        %v3049 = vcvt.s32.f32 %v2921
        %v3050 = vcvt.s32.f32 %v2922
        %v3051 = vcvt.s32.f32 %v2923
        %v3052 = vcvt.s32.f32 %v2924
        %v3053 = vcvt.s32.f32 %v2925
        %v3054 = vcvt.s32.f32 %v2926
        %v3055 = vcvt.s32.f32 %v2927
        %v3056 = vcvt.s32.f32 %v2928
        %v3057 = vcvt.s32.f32 %v2929
        %v3058 = vcvt.s32.f32 %v2930
        %v3059 = vcvt.s32.f32 %v2931
        %v3060 = vcvt.s32.f32 %v2932
        %v3061 = vcvt.s32.f32 %v2933
        %v3062 = vcvt.s32.f32 %v2934
        %v3063 = vcvt.s32.f32 %v2935
        %v3064 = vcvt.s32.f32 %v2936
        %v3065 = vcvt.s32.f32 %v2937
        %v3066 = vcvt.s32.f32 %v2938
        %v3067 = vcvt.s32.f32 %v2939
        %v3068 = vcvt.s32.f32 %v2940
        %v3069 = vcvt.s32.f32 %v2941
        %v3070 = vcvt.s32.f32 %v2942
        %v3071 = vcvt.s32.f32 %v2943
        %v3072 = vcvt.s32.f32 %v2944
        %v3073 = vcvt.s32.f32 %v2945
        %v3074 = vcvt.s32.f32 %v2946
        %v3075 = vcvt.s32.f32 %v2947
        %v3076 = vcvt.s32.f32 %v2948
        %v3077 = vcvt.s32.f32 %v2949
        %v3078 = vcvt.s32.f32 %v2950
        %v3079 = vcvt.s32.f32 %v2951
        %v3080 = vcvt.s32.f32 %v2952
        %v3081 = vcvt.s32.f32 %v2953
        %v3082 = vcvt.s32.f32 %v2954
        %v3083 = vcvt.s32.f32 %v2955
        %v3084 = vcvt.s32.f32 %v2956
        %v3085 = vcvt.s32.f32 %v2957
        %v3086 = vcvt.s32.f32 %v2958
        %v3087 = vcvt.s32.f32 %v2959
        %v3088 = vcvt.s32.f32 %v2960
        %v3089 = vcvt.s32.f32 %v2961
        %v3090 = vmul.f32 %v2962, %v1147
        %v3091 = vmul.f32 %v2963, %v1149
        %v3092 = vmul.f32 %v2964, %v1151
        %v3093 = vmul.f32 %v2965, %v1153
        %v3094 = vmul.f32 %v2966, %v1155
        %v3095 = vmul.f32 %v2967, %v1157
        %v3096 = vmul.f32 %v2968, %v1159
        %v3097 = vmul.f32 %v2969, %v1161
        %v3098 = vmul.f32 %v2970, %v1163
        %v3099 = vmul.f32 %v2971, %v1165
        %v3100 = vmul.f32 %v2972, %v1167
        %v3101 = vmul.f32 %v2973, %v1169
        %v3102 = vmul.f32 %v2974, %v1171
        %v3103 = vmul.f32 %v2975, %v1173
        %v3104 = vmul.f32 %v2976, %v1175
        %v3105 = vmul.f32 %v2977, %v1177
        %v3106 = vmul.f32 %v2978, %v1179
        %v3107 = vmul.f32 %v2979, %v1181
        %v3108 = vmul.f32 %v2980, %v1183
        %v3109 = vmul.f32 %v2981, %v1185
        %v3110 = vmul.f32 %v2982, %v1187
        %v3111 = vmul.f32 %v2983, %v1189
        %v3112 = vmul.f32 %v2984, %v1191
        %v3113 = vmul.f32 %v2985, %v1193
        %v3114 = vmul.f32 %v2986, %v1195
        %v3115 = vmul.f32 %v2987, %v1197
        %v3116 = vmul.f32 %v2988, %v1199
        %v3117 = vmul.f32 %v2989, %v1201
        %v3118 = vmul.f32 %v2990, %v1203
        %v3119 = vmul.f32 %v2991, %v1205
        %v3120 = vmul.f32 %v2992, %v1207
        %v3121 = vmul.f32 %v2993, %v1209
        %v3122 = vmul.f32 %v2994, %v1211
        %v3123 = vmul.f32 %v2995, %v1213
        %v3124 = vmul.f32 %v2996, %v1215
        %v3125 = vmul.f32 %v2997, %v1217
        %v3126 = vmul.f32 %v2998, %v1219
        %v3127 = vmul.f32 %v2999, %v1221
        %v3128 = vmul.f32 %v3000, %v1223
        %v3129 = vmul.f32 %v3001, %v1225
        %v3130 = vmul.f32 %v3002, %v1227
        %v3131 = vmul.f32 %v3003, %v1229
        %v3132 = vmul.f32 %v3004, %v1231
        %v3133 = vmul.f32 %v3005, %v1233
        %v3134 = vmul.f32 %v3006, %v1235
        %v3135 = vmul.f32 %v3007, %v1237
        %v3136 = vmul.f32 %v3008, %v1239
        %v3137 = vmul.f32 %v3009, %v1241
        %v3138 = vmul.f32 %v3010, %v1243
        %v3139 = vmul.f32 %v3011, %v1245
        %v3140 = vmul.f32 %v3012, %v1247
        %v3141 = vmul.f32 %v3013, %v1249
        %v3142 = vmul.f32 %v3014, %v1251
        %v3143 = vmul.f32 %v3015, %v1253
        %v3144 = vmul.f32 %v3016, %v1255
        %v3145 = vmul.f32 %v3017, %v1257
        %v3146 = vmul.f32 %v3018, %v1259
        %v3147 = vmul.f32 %v3019, %v1261
        %v3148 = vmul.f32 %v3020, %v1263
        %v3149 = vmul.f32 %v3021, %v1265
        %v3150 = vmul.f32 %v3022, %v1267
        %v3151 = vmul.f32 %v3023, %v1269
        %v3152 = vmul.f32 %v3024, %v1271
        %v3153 = vmul.f32 %v3025, %v1273
        %v3154 = vmul.f32 %v3026, %v1275
        %v3155 = vmul.f32 %v3027, %v1277
        %v3156 = vmul.f32 %v3028, %v1279
        %v3157 = vmul.f32 %v3029, %v1281
        %v3158 = vmul.f32 %v3030, %v1283
        %v3159 = vmul.f32 %v3031, %v1285
        %v3160 = vmul.f32 %v3032, %v1287
        %v3161 = vmul.f32 %v3033, %v1289
        %v3162 = vmul.f32 %v3034, %v1291
        %v3163 = vmul.f32 %v3035, %v1293
        %v3164 = vmul.f32 %v3036, %v1295
        %v3165 = vmul.f32 %v3037, %v1297
        %v3166 = vmul.f32 %v3038, %v1299
        %v3167 = vmul.f32 %v3039, %v1301
        %v3168 = vmul.f32 %v3040, %v1303
        %v3169 = vmul.f32 %v3041, %v1305
        %v3170 = vmul.f32 %v3042, %v1307
        %v3171 = vmul.f32 %v3043, %v1309
        %v3172 = vmul.f32 %v3044, %v1311
        %v3173 = vmul.f32 %v3045, %v1313
        %v3174 = vmul.f32 %v3046, %v1315
        %v3175 = vmul.f32 %v3047, %v1317
        %v3176 = vmul.f32 %v3048, %v1319
        %v3177 = vmul.f32 %v3049, %v1321
        %v3178 = vmul.f32 %v3050, %v1323
        %v3179 = vmul.f32 %v3051, %v1325
        %v3180 = vmul.f32 %v3052, %v1327
        %v3181 = vmul.f32 %v3053, %v1329
        %v3182 = vmul.f32 %v3054, %v1331
        %v3183 = vmul.f32 %v3055, %v1333
        %v3184 = vmul.f32 %v3056, %v1335
        %v3185 = vmul.f32 %v3057, %v1337
        %v3186 = vmul.f32 %v3058, %v1339
        %v3187 = vmul.f32 %v3059, %v1341
        %v3188 = vmul.f32 %v3060, %v1343
        %v3189 = vmul.f32 %v3061, %v1345
        %v3190 = vmul.f32 %v3062, %v1347
        %v3191 = vmul.f32 %v3063, %v1349
        %v3192 = vmul.f32 %v3064, %v1351
        %v3193 = vmul.f32 %v3065, %v1353
        %v3194 = vmul.f32 %v3066, %v1355
        %v3195 = vmul.f32 %v3067, %v1357
        %v3196 = vmul.f32 %v3068, %v1359
        %v3197 = vmul.f32 %v3069, %v1361
        %v3198 = vmul.f32 %v3070, %v1363
        %v3199 = vmul.f32 %v3071, %v1365
        %v3200 = vmul.f32 %v3072, %v1367
        %v3201 = vmul.f32 %v3073, %v1369
        %v3202 = vmul.f32 %v3074, %v1371
        %v3203 = vmul.f32 %v3075, %v1373
        %v3204 = vmul.f32 %v3076, %v1375
        %v3205 = vmul.f32 %v3077, %v1377
        %v3206 = vmul.f32 %v3078, %v1379
        %v3207 = vmul.f32 %v3079, %v1381
        %v3208 = vmul.f32 %v3080, %v1383
        %v3209 = vmul.f32 %v3081, %v1385
        %v3210 = vmul.f32 %v3082, %v1387
        %v3211 = vmul.f32 %v3083, %v1389
        %v3212 = vmul.f32 %v3084, %v1391
        %v3213 = vmul.f32 %v3085, %v1393
        %v3214 = vmul.f32 %v3086, %v1395
        %v3215 = vmul.f32 %v3087, %v1397
        %v3216 = vmul.f32 %v3088, %v1399
        %v3217 = vmul.f32 %v3089, %v1401
        %3346 = vset.pattern.permute.xlu0 0
        %3347 = vperm.xlu0 %3346, %v3090
        %v3348 = vpop.permute.xlu0 %3347
        %3349 = vset.pattern.permute.xlu0 0
        %3350 = vperm.xlu0 %3349, %v3091
        %v3351 = vpop.permute.xlu0 %3350
        %3352 = vset.pattern.permute.xlu0 0
        %3353 = vperm.xlu0 %3352, %v3092
        %v3354 = vpop.permute.xlu0 %3353
        %3355 = vset.pattern.permute.xlu0 0
        %3356 = vperm.xlu0 %3355, %v3093
        %v3357 = vpop.permute.xlu0 %3356
        %3358 = vset.pattern.permute.xlu0 0
        %3359 = vperm.xlu0 %3358, %v3094
        %v3360 = vpop.permute.xlu0 %3359
        %3361 = vset.pattern.permute.xlu0 0
        %3362 = vperm.xlu0 %3361, %v3095
        %v3363 = vpop.permute.xlu0 %3362
        %3364 = vset.pattern.permute.xlu0 0
        %3365 = vperm.xlu0 %3364, %v3096
        %v3366 = vpop.permute.xlu0 %3365
        %3367 = vset.pattern.permute.xlu0 0
        %3368 = vperm.xlu0 %3367, %v3097
        %v3369 = vpop.permute.xlu0 %3368
        %3370 = vset.pattern.permute.xlu0 0
        %3371 = vperm.xlu0 %3370, %v3098
        %v3372 = vpop.permute.xlu0 %3371
        %3373 = vset.pattern.permute.xlu0 0
        %3374 = vperm.xlu0 %3373, %v3099
        %v3375 = vpop.permute.xlu0 %3374
        %3376 = vset.pattern.permute.xlu0 0
        %3377 = vperm.xlu0 %3376, %v3100
        %v3378 = vpop.permute.xlu0 %3377
        %3379 = vset.pattern.permute.xlu0 0
        %3380 = vperm.xlu0 %3379, %v3101
        %v3381 = vpop.permute.xlu0 %3380
        %3382 = vset.pattern.permute.xlu0 0
        %3383 = vperm.xlu0 %3382, %v3102
        %v3384 = vpop.permute.xlu0 %3383
        %3385 = vset.pattern.permute.xlu0 0
        %3386 = vperm.xlu0 %3385, %v3103
        %v3387 = vpop.permute.xlu0 %3386
        %3388 = vset.pattern.permute.xlu0 0
        %3389 = vperm.xlu0 %3388, %v3104
        %v3390 = vpop.permute.xlu0 %3389
        %3391 = vset.pattern.permute.xlu0 0
        %3392 = vperm.xlu0 %3391, %v3105
        %v3393 = vpop.permute.xlu0 %3392
        %3394 = vset.pattern.permute.xlu0 0
        %3395 = vperm.xlu0 %3394, %v3106
        %v3396 = vpop.permute.xlu0 %3395
        %3397 = vset.pattern.permute.xlu0 0
        %3398 = vperm.xlu0 %3397, %v3107
        %v3399 = vpop.permute.xlu0 %3398
        %3400 = vset.pattern.permute.xlu0 0
        %3401 = vperm.xlu0 %3400, %v3108
        %v3402 = vpop.permute.xlu0 %3401
        %3403 = vset.pattern.permute.xlu0 0
        %3404 = vperm.xlu0 %3403, %v3109
        %v3405 = vpop.permute.xlu0 %3404
        %3406 = vset.pattern.permute.xlu0 0
        %3407 = vperm.xlu0 %3406, %v3110
        %v3408 = vpop.permute.xlu0 %3407
        %3409 = vset.pattern.permute.xlu0 0
        %3410 = vperm.xlu0 %3409, %v3111
        %v3411 = vpop.permute.xlu0 %3410
        %3412 = vset.pattern.permute.xlu0 0
        %3413 = vperm.xlu0 %3412, %v3112
        %v3414 = vpop.permute.xlu0 %3413
        %3415 = vset.pattern.permute.xlu0 0
        %3416 = vperm.xlu0 %3415, %v3113
        %v3417 = vpop.permute.xlu0 %3416
        %3418 = vset.pattern.permute.xlu0 0
        %3419 = vperm.xlu0 %3418, %v3114
        %v3420 = vpop.permute.xlu0 %3419
        %3421 = vset.pattern.permute.xlu0 0
        %3422 = vperm.xlu0 %3421, %v3115
        %v3423 = vpop.permute.xlu0 %3422
        %3424 = vset.pattern.permute.xlu0 0
        %3425 = vperm.xlu0 %3424, %v3116
        %v3426 = vpop.permute.xlu0 %3425
        %3427 = vset.pattern.permute.xlu0 0
        %3428 = vperm.xlu0 %3427, %v3117
        %v3429 = vpop.permute.xlu0 %3428
        %3430 = vset.pattern.permute.xlu0 0
        %3431 = vperm.xlu0 %3430, %v3118
        %v3432 = vpop.permute.xlu0 %3431
        %3433 = vset.pattern.permute.xlu0 0
        %3434 = vperm.xlu0 %3433, %v3119
        %v3435 = vpop.permute.xlu0 %3434
        %3436 = vset.pattern.permute.xlu0 0
        %3437 = vperm.xlu0 %3436, %v3120
        %v3438 = vpop.permute.xlu0 %3437
        %3439 = vset.pattern.permute.xlu0 0
        %3440 = vperm.xlu0 %3439, %v3121
        %v3441 = vpop.permute.xlu0 %3440
        %3442 = vset.pattern.permute.xlu0 0
        %3443 = vperm.xlu0 %3442, %v3122
        %v3444 = vpop.permute.xlu0 %3443
        %3445 = vset.pattern.permute.xlu0 0
        %3446 = vperm.xlu0 %3445, %v3123
        %v3447 = vpop.permute.xlu0 %3446
        %3448 = vset.pattern.permute.xlu0 0
        %3449 = vperm.xlu0 %3448, %v3124
        %v3450 = vpop.permute.xlu0 %3449
        %3451 = vset.pattern.permute.xlu0 0
        %3452 = vperm.xlu0 %3451, %v3125
        %v3453 = vpop.permute.xlu0 %3452
        %3454 = vset.pattern.permute.xlu0 0
        %3455 = vperm.xlu0 %3454, %v3126
        %v3456 = vpop.permute.xlu0 %3455
        %3457 = vset.pattern.permute.xlu0 0
        %3458 = vperm.xlu0 %3457, %v3127
        %v3459 = vpop.permute.xlu0 %3458
        %3460 = vset.pattern.permute.xlu0 0
        %3461 = vperm.xlu0 %3460, %v3128
        %v3462 = vpop.permute.xlu0 %3461
        %3463 = vset.pattern.permute.xlu0 0
        %3464 = vperm.xlu0 %3463, %v3129
        %v3465 = vpop.permute.xlu0 %3464
        %3466 = vset.pattern.permute.xlu0 0
        %3467 = vperm.xlu0 %3466, %v3130
        %v3468 = vpop.permute.xlu0 %3467
        %3469 = vset.pattern.permute.xlu0 0
        %3470 = vperm.xlu0 %3469, %v3131
        %v3471 = vpop.permute.xlu0 %3470
        %3472 = vset.pattern.permute.xlu0 0
        %3473 = vperm.xlu0 %3472, %v3132
        %v3474 = vpop.permute.xlu0 %3473
        %3475 = vset.pattern.permute.xlu0 0
        %3476 = vperm.xlu0 %3475, %v3133
        %v3477 = vpop.permute.xlu0 %3476
        %3478 = vset.pattern.permute.xlu0 0
        %3479 = vperm.xlu0 %3478, %v3134
        %v3480 = vpop.permute.xlu0 %3479
        %3481 = vset.pattern.permute.xlu0 0
        %3482 = vperm.xlu0 %3481, %v3135
        %v3483 = vpop.permute.xlu0 %3482
        %3484 = vset.pattern.permute.xlu0 0
        %3485 = vperm.xlu0 %3484, %v3136
        %v3486 = vpop.permute.xlu0 %3485
        %3487 = vset.pattern.permute.xlu0 0
        %3488 = vperm.xlu0 %3487, %v3137
        %v3489 = vpop.permute.xlu0 %3488
        %3490 = vset.pattern.permute.xlu0 0
        %3491 = vperm.xlu0 %3490, %v3138
        %v3492 = vpop.permute.xlu0 %3491
        %3493 = vset.pattern.permute.xlu0 0
        %3494 = vperm.xlu0 %3493, %v3139
        %v3495 = vpop.permute.xlu0 %3494
        %3496 = vset.pattern.permute.xlu0 0
        %3497 = vperm.xlu0 %3496, %v3140
        %v3498 = vpop.permute.xlu0 %3497
        %3499 = vset.pattern.permute.xlu0 0
        %3500 = vperm.xlu0 %3499, %v3141
        %v3501 = vpop.permute.xlu0 %3500
        %3502 = vset.pattern.permute.xlu0 0
        %3503 = vperm.xlu0 %3502, %v3142
        %v3504 = vpop.permute.xlu0 %3503
        %3505 = vset.pattern.permute.xlu0 0
        %3506 = vperm.xlu0 %3505, %v3143
        %v3507 = vpop.permute.xlu0 %3506
        %3508 = vset.pattern.permute.xlu0 0
        %3509 = vperm.xlu0 %3508, %v3144
        %v3510 = vpop.permute.xlu0 %3509
        %3511 = vset.pattern.permute.xlu0 0
        %3512 = vperm.xlu0 %3511, %v3145
        %v3513 = vpop.permute.xlu0 %3512
        %3514 = vset.pattern.permute.xlu0 0
        %3515 = vperm.xlu0 %3514, %v3146
        %v3516 = vpop.permute.xlu0 %3515
        %3517 = vset.pattern.permute.xlu0 0
        %3518 = vperm.xlu0 %3517, %v3147
        %v3519 = vpop.permute.xlu0 %3518
        %3520 = vset.pattern.permute.xlu0 0
        %3521 = vperm.xlu0 %3520, %v3148
        %v3522 = vpop.permute.xlu0 %3521
        %3523 = vset.pattern.permute.xlu0 0
        %3524 = vperm.xlu0 %3523, %v3149
        %v3525 = vpop.permute.xlu0 %3524
        %3526 = vset.pattern.permute.xlu0 0
        %3527 = vperm.xlu0 %3526, %v3150
        %v3528 = vpop.permute.xlu0 %3527
        %3529 = vset.pattern.permute.xlu0 0
        %3530 = vperm.xlu0 %3529, %v3151
        %v3531 = vpop.permute.xlu0 %3530
        %3532 = vset.pattern.permute.xlu0 0
        %3533 = vperm.xlu0 %3532, %v3152
        %v3534 = vpop.permute.xlu0 %3533
        %3535 = vset.pattern.permute.xlu0 0
        %3536 = vperm.xlu0 %3535, %v3153
        %v3537 = vpop.permute.xlu0 %3536
        %3538 = vset.pattern.permute.xlu0 0
        %3539 = vperm.xlu0 %3538, %v3154
        %v3540 = vpop.permute.xlu0 %3539
        %3541 = vset.pattern.permute.xlu0 0
        %3542 = vperm.xlu0 %3541, %v3155
        %v3543 = vpop.permute.xlu0 %3542
        %3544 = vset.pattern.permute.xlu0 0
        %3545 = vperm.xlu0 %3544, %v3156
        %v3546 = vpop.permute.xlu0 %3545
        %3547 = vset.pattern.permute.xlu0 0
        %3548 = vperm.xlu0 %3547, %v3157
        %v3549 = vpop.permute.xlu0 %3548
        %3550 = vset.pattern.permute.xlu0 0
        %3551 = vperm.xlu0 %3550, %v3158
        %v3552 = vpop.permute.xlu0 %3551
        %3553 = vset.pattern.permute.xlu0 0
        %3554 = vperm.xlu0 %3553, %v3159
        %v3555 = vpop.permute.xlu0 %3554
        %3556 = vset.pattern.permute.xlu0 0
        %3557 = vperm.xlu0 %3556, %v3160
        %v3558 = vpop.permute.xlu0 %3557
        %3559 = vset.pattern.permute.xlu0 0
        %3560 = vperm.xlu0 %3559, %v3161
        %v3561 = vpop.permute.xlu0 %3560
        %3562 = vset.pattern.permute.xlu0 0
        %3563 = vperm.xlu0 %3562, %v3162
        %v3564 = vpop.permute.xlu0 %3563
        %3565 = vset.pattern.permute.xlu0 0
        %3566 = vperm.xlu0 %3565, %v3163
        %v3567 = vpop.permute.xlu0 %3566
        %3568 = vset.pattern.permute.xlu0 0
        %3569 = vperm.xlu0 %3568, %v3164
        %v3570 = vpop.permute.xlu0 %3569
        %3571 = vset.pattern.permute.xlu0 0
        %3572 = vperm.xlu0 %3571, %v3165
        %v3573 = vpop.permute.xlu0 %3572
        %3574 = vset.pattern.permute.xlu0 0
        %3575 = vperm.xlu0 %3574, %v3166
        %v3576 = vpop.permute.xlu0 %3575
        %3577 = vset.pattern.permute.xlu0 0
        %3578 = vperm.xlu0 %3577, %v3167
        %v3579 = vpop.permute.xlu0 %3578
        %3580 = vset.pattern.permute.xlu0 0
        %3581 = vperm.xlu0 %3580, %v3168
        %v3582 = vpop.permute.xlu0 %3581
        %3583 = vset.pattern.permute.xlu0 0
        %3584 = vperm.xlu0 %3583, %v3169
        %v3585 = vpop.permute.xlu0 %3584
        %3586 = vset.pattern.permute.xlu0 0
        %3587 = vperm.xlu0 %3586, %v3170
        %v3588 = vpop.permute.xlu0 %3587
        %3589 = vset.pattern.permute.xlu0 0
        %3590 = vperm.xlu0 %3589, %v3171
        %v3591 = vpop.permute.xlu0 %3590
        %3592 = vset.pattern.permute.xlu0 0
        %3593 = vperm.xlu0 %3592, %v3172
        %v3594 = vpop.permute.xlu0 %3593
        %3595 = vset.pattern.permute.xlu0 0
        %3596 = vperm.xlu0 %3595, %v3173
        %v3597 = vpop.permute.xlu0 %3596
        %3598 = vset.pattern.permute.xlu0 0
        %3599 = vperm.xlu0 %3598, %v3174
        %v3600 = vpop.permute.xlu0 %3599
        %3601 = vset.pattern.permute.xlu0 0
        %3602 = vperm.xlu0 %3601, %v3175
        %v3603 = vpop.permute.xlu0 %3602
        %3604 = vset.pattern.permute.xlu0 0
        %3605 = vperm.xlu0 %3604, %v3176
        %v3606 = vpop.permute.xlu0 %3605
        %3607 = vset.pattern.permute.xlu0 0
        %3608 = vperm.xlu0 %3607, %v3177
        %v3609 = vpop.permute.xlu0 %3608
        %3610 = vset.pattern.permute.xlu0 0
        %3611 = vperm.xlu0 %3610, %v3178
        %v3612 = vpop.permute.xlu0 %3611
        %3613 = vset.pattern.permute.xlu0 0
        %3614 = vperm.xlu0 %3613, %v3179
        %v3615 = vpop.permute.xlu0 %3614
        %3616 = vset.pattern.permute.xlu0 0
        %3617 = vperm.xlu0 %3616, %v3180
        %v3618 = vpop.permute.xlu0 %3617
        %3619 = vset.pattern.permute.xlu0 0
        %3620 = vperm.xlu0 %3619, %v3181
        %v3621 = vpop.permute.xlu0 %3620
        %3622 = vset.pattern.permute.xlu0 0
        %3623 = vperm.xlu0 %3622, %v3182
        %v3624 = vpop.permute.xlu0 %3623
        %3625 = vset.pattern.permute.xlu0 0
        %3626 = vperm.xlu0 %3625, %v3183
        %v3627 = vpop.permute.xlu0 %3626
        %3628 = vset.pattern.permute.xlu0 0
        %3629 = vperm.xlu0 %3628, %v3184
        %v3630 = vpop.permute.xlu0 %3629
        %3631 = vset.pattern.permute.xlu0 0
        %3632 = vperm.xlu0 %3631, %v3185
        %v3633 = vpop.permute.xlu0 %3632
        %3634 = vset.pattern.permute.xlu0 0
        %3635 = vperm.xlu0 %3634, %v3186
        %v3636 = vpop.permute.xlu0 %3635
        %3637 = vset.pattern.permute.xlu0 0
        %3638 = vperm.xlu0 %3637, %v3187
        %v3639 = vpop.permute.xlu0 %3638
        %3640 = vset.pattern.permute.xlu0 0
        %3641 = vperm.xlu0 %3640, %v3188
        %v3642 = vpop.permute.xlu0 %3641
        %3643 = vset.pattern.permute.xlu0 0
        %3644 = vperm.xlu0 %3643, %v3189
        %v3645 = vpop.permute.xlu0 %3644
        %3646 = vset.pattern.permute.xlu0 0
        %3647 = vperm.xlu0 %3646, %v3190
        %v3648 = vpop.permute.xlu0 %3647
        %3649 = vset.pattern.permute.xlu0 0
        %3650 = vperm.xlu0 %3649, %v3191
        %v3651 = vpop.permute.xlu0 %3650
        %3652 = vset.pattern.permute.xlu0 0
        %3653 = vperm.xlu0 %3652, %v3192
        %v3654 = vpop.permute.xlu0 %3653
        %3655 = vset.pattern.permute.xlu0 0
        %3656 = vperm.xlu0 %3655, %v3193
        %v3657 = vpop.permute.xlu0 %3656
        %3658 = vset.pattern.permute.xlu0 0
        %3659 = vperm.xlu0 %3658, %v3194
        %v3660 = vpop.permute.xlu0 %3659
        %3661 = vset.pattern.permute.xlu0 0
        %3662 = vperm.xlu0 %3661, %v3195
        %v3663 = vpop.permute.xlu0 %3662
        %3664 = vset.pattern.permute.xlu0 0
        %3665 = vperm.xlu0 %3664, %v3196
        %v3666 = vpop.permute.xlu0 %3665
        %3667 = vset.pattern.permute.xlu0 0
        %3668 = vperm.xlu0 %3667, %v3197
        %v3669 = vpop.permute.xlu0 %3668
        %3670 = vset.pattern.permute.xlu0 0
        %3671 = vperm.xlu0 %3670, %v3198
        %v3672 = vpop.permute.xlu0 %3671
        %3673 = vset.pattern.permute.xlu0 0
        %3674 = vperm.xlu0 %3673, %v3199
        %v3675 = vpop.permute.xlu0 %3674
        %3676 = vset.pattern.permute.xlu0 0
        %3677 = vperm.xlu0 %3676, %v3200
        %v3678 = vpop.permute.xlu0 %3677
        %3679 = vset.pattern.permute.xlu0 0
        %3680 = vperm.xlu0 %3679, %v3201
        %v3681 = vpop.permute.xlu0 %3680
        %3682 = vset.pattern.permute.xlu0 0
        %3683 = vperm.xlu0 %3682, %v3202
        %v3684 = vpop.permute.xlu0 %3683
        %3685 = vset.pattern.permute.xlu0 0
        %3686 = vperm.xlu0 %3685, %v3203
        %v3687 = vpop.permute.xlu0 %3686
        %3688 = vset.pattern.permute.xlu0 0
        %3689 = vperm.xlu0 %3688, %v3204
        %v3690 = vpop.permute.xlu0 %3689
        %3691 = vset.pattern.permute.xlu0 0
        %3692 = vperm.xlu0 %3691, %v3205
        %v3693 = vpop.permute.xlu0 %3692
        %3694 = vset.pattern.permute.xlu0 0
        %3695 = vperm.xlu0 %3694, %v3206
        %v3696 = vpop.permute.xlu0 %3695
        %3697 = vset.pattern.permute.xlu0 0
        %3698 = vperm.xlu0 %3697, %v3207
        %v3699 = vpop.permute.xlu0 %3698
        %3700 = vset.pattern.permute.xlu0 0
        %3701 = vperm.xlu0 %3700, %v3208
        %v3702 = vpop.permute.xlu0 %3701
        %3703 = vset.pattern.permute.xlu0 0
        %3704 = vperm.xlu0 %3703, %v3209
        %v3705 = vpop.permute.xlu0 %3704
        %3706 = vset.pattern.permute.xlu0 0
        %3707 = vperm.xlu0 %3706, %v3210
        %v3708 = vpop.permute.xlu0 %3707
        %3709 = vset.pattern.permute.xlu0 0
        %3710 = vperm.xlu0 %3709, %v3211
        %v3711 = vpop.permute.xlu0 %3710
        %3712 = vset.pattern.permute.xlu0 0
        %3713 = vperm.xlu0 %3712, %v3212
        %v3714 = vpop.permute.xlu0 %3713
        %3715 = vset.pattern.permute.xlu0 0
        %3716 = vperm.xlu0 %3715, %v3213
        %v3717 = vpop.permute.xlu0 %3716
        %3718 = vset.pattern.permute.xlu0 0
        %3719 = vperm.xlu0 %3718, %v3214
        %v3720 = vpop.permute.xlu0 %3719
        %3721 = vset.pattern.permute.xlu0 0
        %3722 = vperm.xlu0 %3721, %v3215
        %v3723 = vpop.permute.xlu0 %3722
        %3724 = vset.pattern.permute.xlu0 0
        %3725 = vperm.xlu0 %3724, %v3216
        %v3726 = vpop.permute.xlu0 %3725
        %3727 = vset.pattern.permute.xlu0 0
        %3728 = vperm.xlu0 %3727, %v3217
        %v3729 = vpop.permute.xlu0 %3728
        %v3730 = vlaneseq
        %v3731 = vand.u32 %v3730, 127
        %v3732 = vlaneseq
        %v3733 = vshrl.u32 %v3732, 7
        %v3734 = vsub.s32 %v3731, %v3733
        %v3735 = vrot.slane %v3348, %v3734
        %v3736 = vadd.s32 %v3731, 4294967288
        %v3737 = vlaneseq
        %v3738 = vshrl.u32 %v3737, 7
        %v3739 = vsub.s32 %v3736, %v3738
        %v3740 = vrot.slane %v3351, %v3739
        %vm3741 = vcmask 130112
        %v3742 = vsel %vm3741, %v3740, %v3735
        %v3743 = vadd.s32 %v3731, 4294967280
        %v3744 = vlaneseq
        %v3745 = vshrl.u32 %v3744, 7
        %v3746 = vsub.s32 %v3743, %v3745
        %v3747 = vrot.slane %v3354, %v3746
        %vm3748 = vcmask 195712
        %v3749 = vsel %vm3748, %v3747, %v3742
        %v3750 = vadd.s32 %v3731, 4294967272
        %v3751 = vlaneseq
        %v3752 = vshrl.u32 %v3751, 7
        %v3753 = vsub.s32 %v3750, %v3752
        %v3754 = vrot.slane %v3357, %v3753
        %vm3755 = vcmask 261312
        %v3756 = vsel %vm3755, %v3754, %v3749
        %v3757 = vadd.s32 %v3731, 4294967264
        %v3758 = vlaneseq
        %v3759 = vshrl.u32 %v3758, 7
        %v3760 = vsub.s32 %v3757, %v3759
        %v3761 = vrot.slane %v3360, %v3760
        %vm3762 = vcmask 326912
        %v3763 = vsel %vm3762, %v3761, %v3756
        %v3764 = vadd.s32 %v3731, 4294967256
        %v3765 = vlaneseq
        %v3766 = vshrl.u32 %v3765, 7
        %v3767 = vsub.s32 %v3764, %v3766
        %v3768 = vrot.slane %v3363, %v3767
        %vm3769 = vcmask 392512
        %v3770 = vsel %vm3769, %v3768, %v3763
        %v3771 = vadd.s32 %v3731, 4294967248
        %v3772 = vlaneseq
        %v3773 = vshrl.u32 %v3772, 7
        %v3774 = vsub.s32 %v3771, %v3773
        %v3775 = vrot.slane %v3366, %v3774
        %vm3776 = vcmask 458112
        %v3777 = vsel %vm3776, %v3775, %v3770
        %v3778 = vadd.s32 %v3731, 4294967240
        %v3779 = vlaneseq
        %v3780 = vshrl.u32 %v3779, 7
        %v3781 = vsub.s32 %v3778, %v3780
        %v3782 = vrot.slane %v3369, %v3781
        %vm3783 = vcmask 523712
        %v3784 = vsel %vm3783, %v3782, %v3777
        %v3785 = vadd.s32 %v3731, 4294967232
        %v3786 = vlaneseq
        %v3787 = vshrl.u32 %v3786, 7
        %v3788 = vsub.s32 %v3785, %v3787
        %v3789 = vrot.slane %v3372, %v3788
        %vm3790 = vcmask 589312
        %v3791 = vsel %vm3790, %v3789, %v3784
        %v3792 = vadd.s32 %v3731, 4294967224
        %v3793 = vlaneseq
        %v3794 = vshrl.u32 %v3793, 7
        %v3795 = vsub.s32 %v3792, %v3794
        %v3796 = vrot.slane %v3375, %v3795
        %vm3797 = vcmask 654912
        %v3798 = vsel %vm3797, %v3796, %v3791
        %v3799 = vadd.s32 %v3731, 4294967216
        %v3800 = vlaneseq
        %v3801 = vshrl.u32 %v3800, 7
        %v3802 = vsub.s32 %v3799, %v3801
        %v3803 = vrot.slane %v3378, %v3802
        %vm3804 = vcmask 720512
        %v3805 = vsel %vm3804, %v3803, %v3798
        %v3806 = vadd.s32 %v3731, 4294967208
        %v3807 = vlaneseq
        %v3808 = vshrl.u32 %v3807, 7
        %v3809 = vsub.s32 %v3806, %v3808
        %v3810 = vrot.slane %v3381, %v3809
        %vm3811 = vcmask 786112
        %v3812 = vsel %vm3811, %v3810, %v3805
        %v3813 = vadd.s32 %v3731, 4294967200
        %v3814 = vlaneseq
        %v3815 = vshrl.u32 %v3814, 7
        %v3816 = vsub.s32 %v3813, %v3815
        %v3817 = vrot.slane %v3384, %v3816
        %vm3818 = vcmask 851712
        %v3819 = vsel %vm3818, %v3817, %v3812
        %v3820 = vadd.s32 %v3731, 4294967192
        %v3821 = vlaneseq
        %v3822 = vshrl.u32 %v3821, 7
        %v3823 = vsub.s32 %v3820, %v3822
        %v3824 = vrot.slane %v3387, %v3823
        %vm3825 = vcmask 917312
        %v3826 = vsel %vm3825, %v3824, %v3819
        %v3827 = vadd.s32 %v3731, 4294967184
        %v3828 = vlaneseq
        %v3829 = vshrl.u32 %v3828, 7
        %v3830 = vsub.s32 %v3827, %v3829
        %v3831 = vrot.slane %v3390, %v3830
        %vm3832 = vcmask 982912
        %v3833 = vsel %vm3832, %v3831, %v3826
        %v3834 = vadd.s32 %v3731, 4294967176
        %v3835 = vlaneseq
        %v3836 = vshrl.u32 %v3835, 7
        %v3837 = vsub.s32 %v3834, %v3836
        %v3838 = vrot.slane %v3393, %v3837
        %vm3839 = vcmask 1048512
        %v3840 = vsel %vm3839, %v3838, %v3833
        %v3841 = vlaneseq
        %v3842 = vshrl.u32 %v3841, 7
        %v3843 = vsub.s32 %v3731, %v3842
        %v3844 = vrot.slane %v3396, %v3843
        %v3845 = vlaneseq
        %v3846 = vshrl.u32 %v3845, 7
        %v3847 = vsub.s32 %v3736, %v3846
        %v3848 = vrot.slane %v3399, %v3847
        %v3849 = vsel %vm3741, %v3848, %v3844
        %v3850 = vlaneseq
        %v3851 = vshrl.u32 %v3850, 7
        %v3852 = vsub.s32 %v3743, %v3851
        %v3853 = vrot.slane %v3402, %v3852
        %v3854 = vsel %vm3748, %v3853, %v3849
        %v3855 = vlaneseq
        %v3856 = vshrl.u32 %v3855, 7
        %v3857 = vsub.s32 %v3750, %v3856
        %v3858 = vrot.slane %v3405, %v3857
        %v3859 = vsel %vm3755, %v3858, %v3854
        %v3860 = vlaneseq
        %v3861 = vshrl.u32 %v3860, 7
        %v3862 = vsub.s32 %v3757, %v3861
        %v3863 = vrot.slane %v3408, %v3862
        %v3864 = vsel %vm3762, %v3863, %v3859
        %v3865 = vlaneseq
        %v3866 = vshrl.u32 %v3865, 7
        %v3867 = vsub.s32 %v3764, %v3866
        %v3868 = vrot.slane %v3411, %v3867
        %v3869 = vsel %vm3769, %v3868, %v3864
        %v3870 = vlaneseq
        %v3871 = vshrl.u32 %v3870, 7
        %v3872 = vsub.s32 %v3771, %v3871
        %v3873 = vrot.slane %v3414, %v3872
        %v3874 = vsel %vm3776, %v3873, %v3869
        %v3875 = vlaneseq
        %v3876 = vshrl.u32 %v3875, 7
        %v3877 = vsub.s32 %v3778, %v3876
        %v3878 = vrot.slane %v3417, %v3877
        %v3879 = vsel %vm3783, %v3878, %v3874
        %v3880 = vlaneseq
        %v3881 = vshrl.u32 %v3880, 7
        %v3882 = vsub.s32 %v3785, %v3881
        %v3883 = vrot.slane %v3420, %v3882
        %v3884 = vsel %vm3790, %v3883, %v3879
        %v3885 = vlaneseq
        %v3886 = vshrl.u32 %v3885, 7
        %v3887 = vsub.s32 %v3792, %v3886
        %v3888 = vrot.slane %v3423, %v3887
        %v3889 = vsel %vm3797, %v3888, %v3884
        %v3890 = vlaneseq
        %v3891 = vshrl.u32 %v3890, 7
        %v3892 = vsub.s32 %v3799, %v3891
        %v3893 = vrot.slane %v3426, %v3892
        %v3894 = vsel %vm3804, %v3893, %v3889
        %v3895 = vlaneseq
        %v3896 = vshrl.u32 %v3895, 7
        %v3897 = vsub.s32 %v3806, %v3896
        %v3898 = vrot.slane %v3429, %v3897
        %v3899 = vsel %vm3811, %v3898, %v3894
        %v3900 = vlaneseq
        %v3901 = vshrl.u32 %v3900, 7
        %v3902 = vsub.s32 %v3813, %v3901
        %v3903 = vrot.slane %v3432, %v3902
        %v3904 = vsel %vm3818, %v3903, %v3899
        %v3905 = vlaneseq
        %v3906 = vshrl.u32 %v3905, 7
        %v3907 = vsub.s32 %v3820, %v3906
        %v3908 = vrot.slane %v3435, %v3907
        %v3909 = vsel %vm3825, %v3908, %v3904
        %v3910 = vlaneseq
        %v3911 = vshrl.u32 %v3910, 7
        %v3912 = vsub.s32 %v3827, %v3911
        %v3913 = vrot.slane %v3438, %v3912
        %v3914 = vsel %vm3832, %v3913, %v3909
        %v3915 = vlaneseq
        %v3916 = vshrl.u32 %v3915, 7
        %v3917 = vsub.s32 %v3834, %v3916
        %v3918 = vrot.slane %v3441, %v3917
        %v3919 = vsel %vm3839, %v3918, %v3914
        %v3920 = vlaneseq
        %v3921 = vshrl.u32 %v3920, 7
        %v3922 = vsub.s32 %v3731, %v3921
        %v3923 = vrot.slane %v3444, %v3922
        %v3924 = vlaneseq
        %v3925 = vshrl.u32 %v3924, 7
        %v3926 = vsub.s32 %v3736, %v3925
        %v3927 = vrot.slane %v3447, %v3926
        %v3928 = vsel %vm3741, %v3927, %v3923
        %v3929 = vlaneseq
        %v3930 = vshrl.u32 %v3929, 7
        %v3931 = vsub.s32 %v3743, %v3930
        %v3932 = vrot.slane %v3450, %v3931
        %v3933 = vsel %vm3748, %v3932, %v3928
        %v3934 = vlaneseq
        %v3935 = vshrl.u32 %v3934, 7
        %v3936 = vsub.s32 %v3750, %v3935
        %v3937 = vrot.slane %v3453, %v3936
        %v3938 = vsel %vm3755, %v3937, %v3933
        %v3939 = vlaneseq
        %v3940 = vshrl.u32 %v3939, 7
        %v3941 = vsub.s32 %v3757, %v3940
        %v3942 = vrot.slane %v3456, %v3941
        %v3943 = vsel %vm3762, %v3942, %v3938
        %v3944 = vlaneseq
        %v3945 = vshrl.u32 %v3944, 7
        %v3946 = vsub.s32 %v3764, %v3945
        %v3947 = vrot.slane %v3459, %v3946
        %v3948 = vsel %vm3769, %v3947, %v3943
        %v3949 = vlaneseq
        %v3950 = vshrl.u32 %v3949, 7
        %v3951 = vsub.s32 %v3771, %v3950
        %v3952 = vrot.slane %v3462, %v3951
        %v3953 = vsel %vm3776, %v3952, %v3948
        %v3954 = vlaneseq
        %v3955 = vshrl.u32 %v3954, 7
        %v3956 = vsub.s32 %v3778, %v3955
        %v3957 = vrot.slane %v3465, %v3956
        %v3958 = vsel %vm3783, %v3957, %v3953
        %v3959 = vlaneseq
        %v3960 = vshrl.u32 %v3959, 7
        %v3961 = vsub.s32 %v3785, %v3960
        %v3962 = vrot.slane %v3468, %v3961
        %v3963 = vsel %vm3790, %v3962, %v3958
        %v3964 = vlaneseq
        %v3965 = vshrl.u32 %v3964, 7
        %v3966 = vsub.s32 %v3792, %v3965
        %v3967 = vrot.slane %v3471, %v3966
        %v3968 = vsel %vm3797, %v3967, %v3963
        %v3969 = vlaneseq
        %v3970 = vshrl.u32 %v3969, 7
        %v3971 = vsub.s32 %v3799, %v3970
        %v3972 = vrot.slane %v3474, %v3971
        %v3973 = vsel %vm3804, %v3972, %v3968
        %v3974 = vlaneseq
        %v3975 = vshrl.u32 %v3974, 7
        %v3976 = vsub.s32 %v3806, %v3975
        %v3977 = vrot.slane %v3477, %v3976
        %v3978 = vsel %vm3811, %v3977, %v3973
        %v3979 = vlaneseq
        %v3980 = vshrl.u32 %v3979, 7
        %v3981 = vsub.s32 %v3813, %v3980
        %v3982 = vrot.slane %v3480, %v3981
        %v3983 = vsel %vm3818, %v3982, %v3978
        %v3984 = vlaneseq
        %v3985 = vshrl.u32 %v3984, 7
        %v3986 = vsub.s32 %v3820, %v3985
        %v3987 = vrot.slane %v3483, %v3986
        %v3988 = vsel %vm3825, %v3987, %v3983
        %v3989 = vlaneseq
        %v3990 = vshrl.u32 %v3989, 7
        %v3991 = vsub.s32 %v3827, %v3990
        %v3992 = vrot.slane %v3486, %v3991
        %v3993 = vsel %vm3832, %v3992, %v3988
        %v3994 = vlaneseq
        %v3995 = vshrl.u32 %v3994, 7
        %v3996 = vsub.s32 %v3834, %v3995
        %v3997 = vrot.slane %v3489, %v3996
        %v3998 = vsel %vm3839, %v3997, %v3993
        %v3999 = vlaneseq
        %v4000 = vshrl.u32 %v3999, 7
        %v4001 = vsub.s32 %v3731, %v4000
        %v4002 = vrot.slane %v3492, %v4001
        %v4003 = vlaneseq
        %v4004 = vshrl.u32 %v4003, 7
        %v4005 = vsub.s32 %v3736, %v4004
        %v4006 = vrot.slane %v3495, %v4005
        %v4007 = vsel %vm3741, %v4006, %v4002
        %v4008 = vlaneseq
        %v4009 = vshrl.u32 %v4008, 7
        %v4010 = vsub.s32 %v3743, %v4009
        %v4011 = vrot.slane %v3498, %v4010
        %v4012 = vsel %vm3748, %v4011, %v4007
        %v4013 = vlaneseq
        %v4014 = vshrl.u32 %v4013, 7
        %v4015 = vsub.s32 %v3750, %v4014
        %v4016 = vrot.slane %v3501, %v4015
        %v4017 = vsel %vm3755, %v4016, %v4012
        %v4018 = vlaneseq
        %v4019 = vshrl.u32 %v4018, 7
        %v4020 = vsub.s32 %v3757, %v4019
        %v4021 = vrot.slane %v3504, %v4020
        %v4022 = vsel %vm3762, %v4021, %v4017
        %v4023 = vlaneseq
        %v4024 = vshrl.u32 %v4023, 7
        %v4025 = vsub.s32 %v3764, %v4024
        %v4026 = vrot.slane %v3507, %v4025
        %v4027 = vsel %vm3769, %v4026, %v4022
        %v4028 = vlaneseq
        %v4029 = vshrl.u32 %v4028, 7
        %v4030 = vsub.s32 %v3771, %v4029
        %v4031 = vrot.slane %v3510, %v4030
        %v4032 = vsel %vm3776, %v4031, %v4027
        %v4033 = vlaneseq
        %v4034 = vshrl.u32 %v4033, 7
        %v4035 = vsub.s32 %v3778, %v4034
        %v4036 = vrot.slane %v3513, %v4035
        %v4037 = vsel %vm3783, %v4036, %v4032
        %v4038 = vlaneseq
        %v4039 = vshrl.u32 %v4038, 7
        %v4040 = vsub.s32 %v3785, %v4039
        %v4041 = vrot.slane %v3516, %v4040
        %v4042 = vsel %vm3790, %v4041, %v4037
        %v4043 = vlaneseq
        %v4044 = vshrl.u32 %v4043, 7
        %v4045 = vsub.s32 %v3792, %v4044
        %v4046 = vrot.slane %v3519, %v4045
        %v4047 = vsel %vm3797, %v4046, %v4042
        %v4048 = vlaneseq
        %v4049 = vshrl.u32 %v4048, 7
        %v4050 = vsub.s32 %v3799, %v4049
        %v4051 = vrot.slane %v3522, %v4050
        %v4052 = vsel %vm3804, %v4051, %v4047
        %v4053 = vlaneseq
        %v4054 = vshrl.u32 %v4053, 7
        %v4055 = vsub.s32 %v3806, %v4054
        %v4056 = vrot.slane %v3525, %v4055
        %v4057 = vsel %vm3811, %v4056, %v4052
        %v4058 = vlaneseq
        %v4059 = vshrl.u32 %v4058, 7
        %v4060 = vsub.s32 %v3813, %v4059
        %v4061 = vrot.slane %v3528, %v4060
        %v4062 = vsel %vm3818, %v4061, %v4057
        %v4063 = vlaneseq
        %v4064 = vshrl.u32 %v4063, 7
        %v4065 = vsub.s32 %v3820, %v4064
        %v4066 = vrot.slane %v3531, %v4065
        %v4067 = vsel %vm3825, %v4066, %v4062
        %v4068 = vlaneseq
        %v4069 = vshrl.u32 %v4068, 7
        %v4070 = vsub.s32 %v3827, %v4069
        %v4071 = vrot.slane %v3534, %v4070
        %v4072 = vsel %vm3832, %v4071, %v4067
        %v4073 = vlaneseq
        %v4074 = vshrl.u32 %v4073, 7
        %v4075 = vsub.s32 %v3834, %v4074
        %v4076 = vrot.slane %v3537, %v4075
        %v4077 = vsel %vm3839, %v4076, %v4072
        %v4078 = vlaneseq
        %v4079 = vshrl.u32 %v4078, 7
        %v4080 = vsub.s32 %v3731, %v4079
        %v4081 = vrot.slane %v3540, %v4080
        %v4082 = vlaneseq
        %v4083 = vshrl.u32 %v4082, 7
        %v4084 = vsub.s32 %v3736, %v4083
        %v4085 = vrot.slane %v3543, %v4084
        %v4086 = vsel %vm3741, %v4085, %v4081
        %v4087 = vlaneseq
        %v4088 = vshrl.u32 %v4087, 7
        %v4089 = vsub.s32 %v3743, %v4088
        %v4090 = vrot.slane %v3546, %v4089
        %v4091 = vsel %vm3748, %v4090, %v4086
        %v4092 = vlaneseq
        %v4093 = vshrl.u32 %v4092, 7
        %v4094 = vsub.s32 %v3750, %v4093
        %v4095 = vrot.slane %v3549, %v4094
        %v4096 = vsel %vm3755, %v4095, %v4091
        %v4097 = vlaneseq
        %v4098 = vshrl.u32 %v4097, 7
        %v4099 = vsub.s32 %v3757, %v4098
        %v4100 = vrot.slane %v3552, %v4099
        %v4101 = vsel %vm3762, %v4100, %v4096
        %v4102 = vlaneseq
        %v4103 = vshrl.u32 %v4102, 7
        %v4104 = vsub.s32 %v3764, %v4103
        %v4105 = vrot.slane %v3555, %v4104
        %v4106 = vsel %vm3769, %v4105, %v4101
        %v4107 = vlaneseq
        %v4108 = vshrl.u32 %v4107, 7
        %v4109 = vsub.s32 %v3771, %v4108
        %v4110 = vrot.slane %v3558, %v4109
        %v4111 = vsel %vm3776, %v4110, %v4106
        %v4112 = vlaneseq
        %v4113 = vshrl.u32 %v4112, 7
        %v4114 = vsub.s32 %v3778, %v4113
        %v4115 = vrot.slane %v3561, %v4114
        %v4116 = vsel %vm3783, %v4115, %v4111
        %v4117 = vlaneseq
        %v4118 = vshrl.u32 %v4117, 7
        %v4119 = vsub.s32 %v3785, %v4118
        %v4120 = vrot.slane %v3564, %v4119
        %v4121 = vsel %vm3790, %v4120, %v4116
        %v4122 = vlaneseq
        %v4123 = vshrl.u32 %v4122, 7
        %v4124 = vsub.s32 %v3792, %v4123
        %v4125 = vrot.slane %v3567, %v4124
        %v4126 = vsel %vm3797, %v4125, %v4121
        %v4127 = vlaneseq
        %v4128 = vshrl.u32 %v4127, 7
        %v4129 = vsub.s32 %v3799, %v4128
        %v4130 = vrot.slane %v3570, %v4129
        %v4131 = vsel %vm3804, %v4130, %v4126
        %v4132 = vlaneseq
        %v4133 = vshrl.u32 %v4132, 7
        %v4134 = vsub.s32 %v3806, %v4133
        %v4135 = vrot.slane %v3573, %v4134
        %v4136 = vsel %vm3811, %v4135, %v4131
        %v4137 = vlaneseq
        %v4138 = vshrl.u32 %v4137, 7
        %v4139 = vsub.s32 %v3813, %v4138
        %v4140 = vrot.slane %v3576, %v4139
        %v4141 = vsel %vm3818, %v4140, %v4136
        %v4142 = vlaneseq
        %v4143 = vshrl.u32 %v4142, 7
        %v4144 = vsub.s32 %v3820, %v4143
        %v4145 = vrot.slane %v3579, %v4144
        %v4146 = vsel %vm3825, %v4145, %v4141
        %v4147 = vlaneseq
        %v4148 = vshrl.u32 %v4147, 7
        %v4149 = vsub.s32 %v3827, %v4148
        %v4150 = vrot.slane %v3582, %v4149
        %v4151 = vsel %vm3832, %v4150, %v4146
        %v4152 = vlaneseq
        %v4153 = vshrl.u32 %v4152, 7
        %v4154 = vsub.s32 %v3834, %v4153
        %v4155 = vrot.slane %v3585, %v4154
        %v4156 = vsel %vm3839, %v4155, %v4151
        %v4157 = vlaneseq
        %v4158 = vshrl.u32 %v4157, 7
        %v4159 = vsub.s32 %v3731, %v4158
        %v4160 = vrot.slane %v3588, %v4159
        %v4161 = vlaneseq
        %v4162 = vshrl.u32 %v4161, 7
        %v4163 = vsub.s32 %v3736, %v4162
        %v4164 = vrot.slane %v3591, %v4163
        %v4165 = vsel %vm3741, %v4164, %v4160
        %v4166 = vlaneseq
        %v4167 = vshrl.u32 %v4166, 7
        %v4168 = vsub.s32 %v3743, %v4167
        %v4169 = vrot.slane %v3594, %v4168
        %v4170 = vsel %vm3748, %v4169, %v4165
        %v4171 = vlaneseq
        %v4172 = vshrl.u32 %v4171, 7
        %v4173 = vsub.s32 %v3750, %v4172
        %v4174 = vrot.slane %v3597, %v4173
        %v4175 = vsel %vm3755, %v4174, %v4170
        %v4176 = vlaneseq
        %v4177 = vshrl.u32 %v4176, 7
        %v4178 = vsub.s32 %v3757, %v4177
        %v4179 = vrot.slane %v3600, %v4178
        %v4180 = vsel %vm3762, %v4179, %v4175
        %v4181 = vlaneseq
        %v4182 = vshrl.u32 %v4181, 7
        %v4183 = vsub.s32 %v3764, %v4182
        %v4184 = vrot.slane %v3603, %v4183
        %v4185 = vsel %vm3769, %v4184, %v4180
        %v4186 = vlaneseq
        %v4187 = vshrl.u32 %v4186, 7
        %v4188 = vsub.s32 %v3771, %v4187
        %v4189 = vrot.slane %v3606, %v4188
        %v4190 = vsel %vm3776, %v4189, %v4185
        %v4191 = vlaneseq
        %v4192 = vshrl.u32 %v4191, 7
        %v4193 = vsub.s32 %v3778, %v4192
        %v4194 = vrot.slane %v3609, %v4193
        %v4195 = vsel %vm3783, %v4194, %v4190
        %v4196 = vlaneseq
        %v4197 = vshrl.u32 %v4196, 7
        %v4198 = vsub.s32 %v3785, %v4197
        %v4199 = vrot.slane %v3612, %v4198
        %v4200 = vsel %vm3790, %v4199, %v4195
        %v4201 = vlaneseq
        %v4202 = vshrl.u32 %v4201, 7
        %v4203 = vsub.s32 %v3792, %v4202
        %v4204 = vrot.slane %v3615, %v4203
        %v4205 = vsel %vm3797, %v4204, %v4200
        %v4206 = vlaneseq
        %v4207 = vshrl.u32 %v4206, 7
        %v4208 = vsub.s32 %v3799, %v4207
        %v4209 = vrot.slane %v3618, %v4208
        %v4210 = vsel %vm3804, %v4209, %v4205
        %v4211 = vlaneseq
        %v4212 = vshrl.u32 %v4211, 7
        %v4213 = vsub.s32 %v3806, %v4212
        %v4214 = vrot.slane %v3621, %v4213
        %v4215 = vsel %vm3811, %v4214, %v4210
        %v4216 = vlaneseq
        %v4217 = vshrl.u32 %v4216, 7
        %v4218 = vsub.s32 %v3813, %v4217
        %v4219 = vrot.slane %v3624, %v4218
        %v4220 = vsel %vm3818, %v4219, %v4215
        %v4221 = vlaneseq
        %v4222 = vshrl.u32 %v4221, 7
        %v4223 = vsub.s32 %v3820, %v4222
        %v4224 = vrot.slane %v3627, %v4223
        %v4225 = vsel %vm3825, %v4224, %v4220
        %v4226 = vlaneseq
        %v4227 = vshrl.u32 %v4226, 7
        %v4228 = vsub.s32 %v3827, %v4227
        %v4229 = vrot.slane %v3630, %v4228
        %v4230 = vsel %vm3832, %v4229, %v4225
        %v4231 = vlaneseq
        %v4232 = vshrl.u32 %v4231, 7
        %v4233 = vsub.s32 %v3834, %v4232
        %v4234 = vrot.slane %v3633, %v4233
        %v4235 = vsel %vm3839, %v4234, %v4230
        %v4236 = vlaneseq
        %v4237 = vshrl.u32 %v4236, 7
        %v4238 = vsub.s32 %v3731, %v4237
        %v4239 = vrot.slane %v3636, %v4238
        %v4240 = vlaneseq
        %v4241 = vshrl.u32 %v4240, 7
        %v4242 = vsub.s32 %v3736, %v4241
        %v4243 = vrot.slane %v3639, %v4242
        %v4244 = vsel %vm3741, %v4243, %v4239
        %v4245 = vlaneseq
        %v4246 = vshrl.u32 %v4245, 7
        %v4247 = vsub.s32 %v3743, %v4246
        %v4248 = vrot.slane %v3642, %v4247
        %v4249 = vsel %vm3748, %v4248, %v4244
        %v4250 = vlaneseq
        %v4251 = vshrl.u32 %v4250, 7
        %v4252 = vsub.s32 %v3750, %v4251
        %v4253 = vrot.slane %v3645, %v4252
        %v4254 = vsel %vm3755, %v4253, %v4249
        %v4255 = vlaneseq
        %v4256 = vshrl.u32 %v4255, 7
        %v4257 = vsub.s32 %v3757, %v4256
        %v4258 = vrot.slane %v3648, %v4257
        %v4259 = vsel %vm3762, %v4258, %v4254
        %v4260 = vlaneseq
        %v4261 = vshrl.u32 %v4260, 7
        %v4262 = vsub.s32 %v3764, %v4261
        %v4263 = vrot.slane %v3651, %v4262
        %v4264 = vsel %vm3769, %v4263, %v4259
        %v4265 = vlaneseq
        %v4266 = vshrl.u32 %v4265, 7
        %v4267 = vsub.s32 %v3771, %v4266
        %v4268 = vrot.slane %v3654, %v4267
        %v4269 = vsel %vm3776, %v4268, %v4264
        %v4270 = vlaneseq
        %v4271 = vshrl.u32 %v4270, 7
        %v4272 = vsub.s32 %v3778, %v4271
        %v4273 = vrot.slane %v3657, %v4272
        %v4274 = vsel %vm3783, %v4273, %v4269
        %v4275 = vlaneseq
        %v4276 = vshrl.u32 %v4275, 7
        %v4277 = vsub.s32 %v3785, %v4276
        %v4278 = vrot.slane %v3660, %v4277
        %v4279 = vsel %vm3790, %v4278, %v4274
        %v4280 = vlaneseq
        %v4281 = vshrl.u32 %v4280, 7
        %v4282 = vsub.s32 %v3792, %v4281
        %v4283 = vrot.slane %v3663, %v4282
        %v4284 = vsel %vm3797, %v4283, %v4279
        %v4285 = vlaneseq
        %v4286 = vshrl.u32 %v4285, 7
        %v4287 = vsub.s32 %v3799, %v4286
        %v4288 = vrot.slane %v3666, %v4287
        %v4289 = vsel %vm3804, %v4288, %v4284
        %v4290 = vlaneseq
        %v4291 = vshrl.u32 %v4290, 7
        %v4292 = vsub.s32 %v3806, %v4291
        %v4293 = vrot.slane %v3669, %v4292
        %v4294 = vsel %vm3811, %v4293, %v4289
        %v4295 = vlaneseq
        %v4296 = vshrl.u32 %v4295, 7
        %v4297 = vsub.s32 %v3813, %v4296
        %v4298 = vrot.slane %v3672, %v4297
        %v4299 = vsel %vm3818, %v4298, %v4294
        %v4300 = vlaneseq
        %v4301 = vshrl.u32 %v4300, 7
        %v4302 = vsub.s32 %v3820, %v4301
        %v4303 = vrot.slane %v3675, %v4302
        %v4304 = vsel %vm3825, %v4303, %v4299
        %v4305 = vlaneseq
        %v4306 = vshrl.u32 %v4305, 7
        %v4307 = vsub.s32 %v3827, %v4306
        %v4308 = vrot.slane %v3678, %v4307
        %v4309 = vsel %vm3832, %v4308, %v4304
        %v4310 = vlaneseq
        %v4311 = vshrl.u32 %v4310, 7
        %v4312 = vsub.s32 %v3834, %v4311
        %v4313 = vrot.slane %v3681, %v4312
        %v4314 = vsel %vm3839, %v4313, %v4309
        %v4315 = vlaneseq
        %v4316 = vshrl.u32 %v4315, 7
        %v4317 = vsub.s32 %v3731, %v4316
        %v4318 = vrot.slane %v3684, %v4317
        %v4319 = vlaneseq
        %v4320 = vshrl.u32 %v4319, 7
        %v4321 = vsub.s32 %v3736, %v4320
        %v4322 = vrot.slane %v3687, %v4321
        %v4323 = vsel %vm3741, %v4322, %v4318
        %v4324 = vlaneseq
        %v4325 = vshrl.u32 %v4324, 7
        %v4326 = vsub.s32 %v3743, %v4325
        %v4327 = vrot.slane %v3690, %v4326
        %v4328 = vsel %vm3748, %v4327, %v4323
        %v4329 = vlaneseq
        %v4330 = vshrl.u32 %v4329, 7
        %v4331 = vsub.s32 %v3750, %v4330
        %v4332 = vrot.slane %v3693, %v4331
        %v4333 = vsel %vm3755, %v4332, %v4328
        %v4334 = vlaneseq
        %v4335 = vshrl.u32 %v4334, 7
        %v4336 = vsub.s32 %v3757, %v4335
        %v4337 = vrot.slane %v3696, %v4336
        %v4338 = vsel %vm3762, %v4337, %v4333
        %v4339 = vlaneseq
        %v4340 = vshrl.u32 %v4339, 7
        %v4341 = vsub.s32 %v3764, %v4340
        %v4342 = vrot.slane %v3699, %v4341
        %v4343 = vsel %vm3769, %v4342, %v4338
        %v4344 = vlaneseq
        %v4345 = vshrl.u32 %v4344, 7
        %v4346 = vsub.s32 %v3771, %v4345
        %v4347 = vrot.slane %v3702, %v4346
        %v4348 = vsel %vm3776, %v4347, %v4343
        %v4349 = vlaneseq
        %v4350 = vshrl.u32 %v4349, 7
        %v4351 = vsub.s32 %v3778, %v4350
        %v4352 = vrot.slane %v3705, %v4351
        %v4353 = vsel %vm3783, %v4352, %v4348
        %v4354 = vlaneseq
        %v4355 = vshrl.u32 %v4354, 7
        %v4356 = vsub.s32 %v3785, %v4355
        %v4357 = vrot.slane %v3708, %v4356
        %v4358 = vsel %vm3790, %v4357, %v4353
        %v4359 = vlaneseq
        %v4360 = vshrl.u32 %v4359, 7
        %v4361 = vsub.s32 %v3792, %v4360
        %v4362 = vrot.slane %v3711, %v4361
        %v4363 = vsel %vm3797, %v4362, %v4358
        %v4364 = vlaneseq
        %v4365 = vshrl.u32 %v4364, 7
        %v4366 = vsub.s32 %v3799, %v4365
        %v4367 = vrot.slane %v3714, %v4366
        %v4368 = vsel %vm3804, %v4367, %v4363
        %v4369 = vlaneseq
        %v4370 = vshrl.u32 %v4369, 7
        %v4371 = vsub.s32 %v3806, %v4370
        %v4372 = vrot.slane %v3717, %v4371
        %v4373 = vsel %vm3811, %v4372, %v4368
        %v4374 = vlaneseq
        %v4375 = vshrl.u32 %v4374, 7
        %v4376 = vsub.s32 %v3813, %v4375
        %v4377 = vrot.slane %v3720, %v4376
        %v4378 = vsel %vm3818, %v4377, %v4373
        %v4379 = vlaneseq
        %v4380 = vshrl.u32 %v4379, 7
        %v4381 = vsub.s32 %v3820, %v4380
        %v4382 = vrot.slane %v3723, %v4381
        %v4383 = vsel %vm3825, %v4382, %v4378
        %v4384 = vlaneseq
        %v4385 = vshrl.u32 %v4384, 7
        %v4386 = vsub.s32 %v3827, %v4385
        %v4387 = vrot.slane %v3726, %v4386
        %v4388 = vsel %vm3832, %v4387, %v4383
        %v4389 = vlaneseq
        %v4390 = vshrl.u32 %v4389, 7
        %v4391 = vsub.s32 %v3834, %v4390
        %v4392 = vrot.slane %v3729, %v4391
        %v4393 = vsel %vm3839, %v4392, %v4388
        %vm4394 = vcmask 1041409
        %v4395 = vsel %vm4394, %v3919, %v3840
        %vm4396 = vcmask 1042434
        %v4397 = vsel %vm4396, %v3998, %v4395
        %vm4398 = vcmask 1043459
        %v4399 = vsel %vm4398, %v4077, %v4397
        %vm4400 = vcmask 1044484
        %v4401 = vsel %vm4400, %v4156, %v4399
        %vm4402 = vcmask 1045509
        %v4403 = vsel %vm4402, %v4235, %v4401
        %vm4404 = vcmask 1046534
        %v4405 = vsel %vm4404, %v4314, %v4403
        %vm4406 = vcmask 1047559
        %v4407 = vsel %vm4406, %v4393, %v4405
        %4409 = vmax.xlane.f32.xlu0 %v4407
        %v4410 = vpop.xlane.xlu0 %4409
        %v4411 = vmul.f32 %v2962, %v1792
        %v4412 = vmul.f32 %v2963, %v1796
        %v4413 = vmul.f32 %v2964, %v1800
        %v4414 = vmul.f32 %v2965, %v1804
        %v4415 = vmul.f32 %v2966, %v1808
        %v4416 = vmul.f32 %v2967, %v1812
        %v4417 = vmul.f32 %v2968, %v1816
        %v4418 = vmul.f32 %v2969, %v1820
        %v4419 = vmul.f32 %v2970, %v1824
        %v4420 = vmul.f32 %v2971, %v1828
        %v4421 = vmul.f32 %v2972, %v1832
        %v4422 = vmul.f32 %v2973, %v1836
        %v4423 = vmul.f32 %v2974, %v1840
        %v4424 = vmul.f32 %v2975, %v1844
        %v4425 = vmul.f32 %v2976, %v1848
        %v4426 = vmul.f32 %v2977, %v1852
        %v4427 = vmul.f32 %v2978, %v1859
        %v4428 = vmul.f32 %v2979, %v1863
        %v4429 = vmul.f32 %v2980, %v1867
        %v4430 = vmul.f32 %v2981, %v1871
        %v4431 = vmul.f32 %v2982, %v1875
        %v4432 = vmul.f32 %v2983, %v1879
        %v4433 = vmul.f32 %v2984, %v1883
        %v4434 = vmul.f32 %v2985, %v1887
        %v4435 = vmul.f32 %v2986, %v1891
        %v4436 = vmul.f32 %v2987, %v1895
        %v4437 = vmul.f32 %v2988, %v1899
        %v4438 = vmul.f32 %v2989, %v1903
        %v4439 = vmul.f32 %v2990, %v1907
        %v4440 = vmul.f32 %v2991, %v1911
        %v4441 = vmul.f32 %v2992, %v1915
        %v4442 = vmul.f32 %v2993, %v1919
        %v4443 = vmul.f32 %v2994, %v1926
        %v4444 = vmul.f32 %v2995, %v1930
        %v4445 = vmul.f32 %v2996, %v1934
        %v4446 = vmul.f32 %v2997, %v1938
        %v4447 = vmul.f32 %v2998, %v1942
        %v4448 = vmul.f32 %v2999, %v1946
        %v4449 = vmul.f32 %v3000, %v1950
        %v4450 = vmul.f32 %v3001, %v1954
        %v4451 = vmul.f32 %v3002, %v1958
        %v4452 = vmul.f32 %v3003, %v1962
        %v4453 = vmul.f32 %v3004, %v1966
        %v4454 = vmul.f32 %v3005, %v1970
        %v4455 = vmul.f32 %v3006, %v1974
        %v4456 = vmul.f32 %v3007, %v1978
        %v4457 = vmul.f32 %v3008, %v1982
        %v4458 = vmul.f32 %v3009, %v1986
        %v4459 = vmul.f32 %v3010, %v1993
        %v4460 = vmul.f32 %v3011, %v1997
        %v4461 = vmul.f32 %v3012, %v2001
        %v4462 = vmul.f32 %v3013, %v2005
        %v4463 = vmul.f32 %v3014, %v2009
        %v4464 = vmul.f32 %v3015, %v2013
        %v4465 = vmul.f32 %v3016, %v2017
        %v4466 = vmul.f32 %v3017, %v2021
        %v4467 = vmul.f32 %v3018, %v2025
        %v4468 = vmul.f32 %v3019, %v2029
        %v4469 = vmul.f32 %v3020, %v2033
        %v4470 = vmul.f32 %v3021, %v2037
        %v4471 = vmul.f32 %v3022, %v2041
        %v4472 = vmul.f32 %v3023, %v2045
        %v4473 = vmul.f32 %v3024, %v2049
        %v4474 = vmul.f32 %v3025, %v2053
        %v4475 = vmul.f32 %v3026, %v2060
        %v4476 = vmul.f32 %v3027, %v2064
        %v4477 = vmul.f32 %v3028, %v2068
        %v4478 = vmul.f32 %v3029, %v2072
        %v4479 = vmul.f32 %v3030, %v2076
        %v4480 = vmul.f32 %v3031, %v2080
        %v4481 = vmul.f32 %v3032, %v2084
        %v4482 = vmul.f32 %v3033, %v2088
        %v4483 = vmul.f32 %v3034, %v2092
        %v4484 = vmul.f32 %v3035, %v2096
        %v4485 = vmul.f32 %v3036, %v2100
        %v4486 = vmul.f32 %v3037, %v2104
        %v4487 = vmul.f32 %v3038, %v2108
        %v4488 = vmul.f32 %v3039, %v2112
        %v4489 = vmul.f32 %v3040, %v2116
        %v4490 = vmul.f32 %v3041, %v2120
        %v4491 = vmul.f32 %v3042, %v2127
        %v4492 = vmul.f32 %v3043, %v2131
        %v4493 = vmul.f32 %v3044, %v2135
        %v4494 = vmul.f32 %v3045, %v2139
        %v4495 = vmul.f32 %v3046, %v2143
        %v4496 = vmul.f32 %v3047, %v2147
        %v4497 = vmul.f32 %v3048, %v2151
        %v4498 = vmul.f32 %v3049, %v2155
        %v4499 = vmul.f32 %v3050, %v2159
        %v4500 = vmul.f32 %v3051, %v2163
        %v4501 = vmul.f32 %v3052, %v2167
        %v4502 = vmul.f32 %v3053, %v2171
        %v4503 = vmul.f32 %v3054, %v2175
        %v4504 = vmul.f32 %v3055, %v2179
        %v4505 = vmul.f32 %v3056, %v2183
        %v4506 = vmul.f32 %v3057, %v2187
        %v4507 = vmul.f32 %v3058, %v2194
        %v4508 = vmul.f32 %v3059, %v2198
        %v4509 = vmul.f32 %v3060, %v2202
        %v4510 = vmul.f32 %v3061, %v2206
        %v4511 = vmul.f32 %v3062, %v2210
        %v4512 = vmul.f32 %v3063, %v2214
        %v4513 = vmul.f32 %v3064, %v2218
        %v4514 = vmul.f32 %v3065, %v2222
        %v4515 = vmul.f32 %v3066, %v2226
        %v4516 = vmul.f32 %v3067, %v2230
        %v4517 = vmul.f32 %v3068, %v2234
        %v4518 = vmul.f32 %v3069, %v2238
        %v4519 = vmul.f32 %v3070, %v2242
        %v4520 = vmul.f32 %v3071, %v2246
        %v4521 = vmul.f32 %v3072, %v2250
        %v4522 = vmul.f32 %v3073, %v2254
        %v4523 = vmul.f32 %v3074, %v2261
        %v4524 = vmul.f32 %v3075, %v2265
        %v4525 = vmul.f32 %v3076, %v2269
        %v4526 = vmul.f32 %v3077, %v2273
        %v4527 = vmul.f32 %v3078, %v2277
        %v4528 = vmul.f32 %v3079, %v2281
        %v4529 = vmul.f32 %v3080, %v2285
        %v4530 = vmul.f32 %v3081, %v2289
        %v4531 = vmul.f32 %v3082, %v2293
        %v4532 = vmul.f32 %v3083, %v2297
        %v4533 = vmul.f32 %v3084, %v2301
        %v4534 = vmul.f32 %v3085, %v2305
        %v4535 = vmul.f32 %v3086, %v2309
        %v4536 = vmul.f32 %v3087, %v2313
        %v4537 = vmul.f32 %v3088, %v2317
        %v4538 = vmul.f32 %v3089, %v2321
        %4667 = vset.pattern.permute.xlu0 0
        %4668 = vperm.xlu0 %4667, %v4411
        %v4669 = vpop.permute.xlu0 %4668
        %4670 = vset.pattern.permute.xlu0 0
        %4671 = vperm.xlu0 %4670, %v4412
        %v4672 = vpop.permute.xlu0 %4671
        %4673 = vset.pattern.permute.xlu0 0
        %4674 = vperm.xlu0 %4673, %v4413
        %v4675 = vpop.permute.xlu0 %4674
        %4676 = vset.pattern.permute.xlu0 0
        %4677 = vperm.xlu0 %4676, %v4414
        %v4678 = vpop.permute.xlu0 %4677
        %4679 = vset.pattern.permute.xlu0 0
        %4680 = vperm.xlu0 %4679, %v4415
        %v4681 = vpop.permute.xlu0 %4680
        %4682 = vset.pattern.permute.xlu0 0
        %4683 = vperm.xlu0 %4682, %v4416
        %v4684 = vpop.permute.xlu0 %4683
        %4685 = vset.pattern.permute.xlu0 0
        %4686 = vperm.xlu0 %4685, %v4417
        %v4687 = vpop.permute.xlu0 %4686
        %4688 = vset.pattern.permute.xlu0 0
        %4689 = vperm.xlu0 %4688, %v4418
        %v4690 = vpop.permute.xlu0 %4689
        %4691 = vset.pattern.permute.xlu0 0
        %4692 = vperm.xlu0 %4691, %v4419
        %v4693 = vpop.permute.xlu0 %4692
        %4694 = vset.pattern.permute.xlu0 0
        %4695 = vperm.xlu0 %4694, %v4420
        %v4696 = vpop.permute.xlu0 %4695
        %4697 = vset.pattern.permute.xlu0 0
        %4698 = vperm.xlu0 %4697, %v4421
        %v4699 = vpop.permute.xlu0 %4698
        %4700 = vset.pattern.permute.xlu0 0
        %4701 = vperm.xlu0 %4700, %v4422
        %v4702 = vpop.permute.xlu0 %4701
        %4703 = vset.pattern.permute.xlu0 0
        %4704 = vperm.xlu0 %4703, %v4423
        %v4705 = vpop.permute.xlu0 %4704
        %4706 = vset.pattern.permute.xlu0 0
        %4707 = vperm.xlu0 %4706, %v4424
        %v4708 = vpop.permute.xlu0 %4707
        %4709 = vset.pattern.permute.xlu0 0
        %4710 = vperm.xlu0 %4709, %v4425
        %v4711 = vpop.permute.xlu0 %4710
        %4712 = vset.pattern.permute.xlu0 0
        %4713 = vperm.xlu0 %4712, %v4426
        %v4714 = vpop.permute.xlu0 %4713
        %4715 = vset.pattern.permute.xlu0 0
        %4716 = vperm.xlu0 %4715, %v4427
        %v4717 = vpop.permute.xlu0 %4716
        %4718 = vset.pattern.permute.xlu0 0
        %4719 = vperm.xlu0 %4718, %v4428
        %v4720 = vpop.permute.xlu0 %4719
        %4721 = vset.pattern.permute.xlu0 0
        %4722 = vperm.xlu0 %4721, %v4429
        %v4723 = vpop.permute.xlu0 %4722
        %4724 = vset.pattern.permute.xlu0 0
        %4725 = vperm.xlu0 %4724, %v4430
        %v4726 = vpop.permute.xlu0 %4725
        %4727 = vset.pattern.permute.xlu0 0
        %4728 = vperm.xlu0 %4727, %v4431
        %v4729 = vpop.permute.xlu0 %4728
        %4730 = vset.pattern.permute.xlu0 0
        %4731 = vperm.xlu0 %4730, %v4432
        %v4732 = vpop.permute.xlu0 %4731
        %4733 = vset.pattern.permute.xlu0 0
        %4734 = vperm.xlu0 %4733, %v4433
        %v4735 = vpop.permute.xlu0 %4734
        %4736 = vset.pattern.permute.xlu0 0
        %4737 = vperm.xlu0 %4736, %v4434
        %v4738 = vpop.permute.xlu0 %4737
        %4739 = vset.pattern.permute.xlu0 0
        %4740 = vperm.xlu0 %4739, %v4435
        %v4741 = vpop.permute.xlu0 %4740
        %4742 = vset.pattern.permute.xlu0 0
        %4743 = vperm.xlu0 %4742, %v4436
        %v4744 = vpop.permute.xlu0 %4743
        %4745 = vset.pattern.permute.xlu0 0
        %4746 = vperm.xlu0 %4745, %v4437
        %v4747 = vpop.permute.xlu0 %4746
        %4748 = vset.pattern.permute.xlu0 0
        %4749 = vperm.xlu0 %4748, %v4438
        %v4750 = vpop.permute.xlu0 %4749
        %4751 = vset.pattern.permute.xlu0 0
        %4752 = vperm.xlu0 %4751, %v4439
        %v4753 = vpop.permute.xlu0 %4752
        %4754 = vset.pattern.permute.xlu0 0
        %4755 = vperm.xlu0 %4754, %v4440
        %v4756 = vpop.permute.xlu0 %4755
        %4757 = vset.pattern.permute.xlu0 0
        %4758 = vperm.xlu0 %4757, %v4441
        %v4759 = vpop.permute.xlu0 %4758
        %4760 = vset.pattern.permute.xlu0 0
        %4761 = vperm.xlu0 %4760, %v4442
        %v4762 = vpop.permute.xlu0 %4761
        %4763 = vset.pattern.permute.xlu0 0
        %4764 = vperm.xlu0 %4763, %v4443
        %v4765 = vpop.permute.xlu0 %4764
        %4766 = vset.pattern.permute.xlu0 0
        %4767 = vperm.xlu0 %4766, %v4444
        %v4768 = vpop.permute.xlu0 %4767
        %4769 = vset.pattern.permute.xlu0 0
        %4770 = vperm.xlu0 %4769, %v4445
        %v4771 = vpop.permute.xlu0 %4770
        %4772 = vset.pattern.permute.xlu0 0
        %4773 = vperm.xlu0 %4772, %v4446
        %v4774 = vpop.permute.xlu0 %4773
        %4775 = vset.pattern.permute.xlu0 0
        %4776 = vperm.xlu0 %4775, %v4447
        %v4777 = vpop.permute.xlu0 %4776
        %4778 = vset.pattern.permute.xlu0 0
        %4779 = vperm.xlu0 %4778, %v4448
        %v4780 = vpop.permute.xlu0 %4779
        %4781 = vset.pattern.permute.xlu0 0
        %4782 = vperm.xlu0 %4781, %v4449
        %v4783 = vpop.permute.xlu0 %4782
        %4784 = vset.pattern.permute.xlu0 0
        %4785 = vperm.xlu0 %4784, %v4450
        %v4786 = vpop.permute.xlu0 %4785
        %4787 = vset.pattern.permute.xlu0 0
        %4788 = vperm.xlu0 %4787, %v4451
        %v4789 = vpop.permute.xlu0 %4788
        %4790 = vset.pattern.permute.xlu0 0
        %4791 = vperm.xlu0 %4790, %v4452
        %v4792 = vpop.permute.xlu0 %4791
        %4793 = vset.pattern.permute.xlu0 0
        %4794 = vperm.xlu0 %4793, %v4453
        %v4795 = vpop.permute.xlu0 %4794
        %4796 = vset.pattern.permute.xlu0 0
        %4797 = vperm.xlu0 %4796, %v4454
        %v4798 = vpop.permute.xlu0 %4797
        %4799 = vset.pattern.permute.xlu0 0
        %4800 = vperm.xlu0 %4799, %v4455
        %v4801 = vpop.permute.xlu0 %4800
        %4802 = vset.pattern.permute.xlu0 0
        %4803 = vperm.xlu0 %4802, %v4456
        %v4804 = vpop.permute.xlu0 %4803
        %4805 = vset.pattern.permute.xlu0 0
        %4806 = vperm.xlu0 %4805, %v4457
        %v4807 = vpop.permute.xlu0 %4806
        %4808 = vset.pattern.permute.xlu0 0
        %4809 = vperm.xlu0 %4808, %v4458
        %v4810 = vpop.permute.xlu0 %4809
        %4811 = vset.pattern.permute.xlu0 0
        %4812 = vperm.xlu0 %4811, %v4459
        %v4813 = vpop.permute.xlu0 %4812
        %4814 = vset.pattern.permute.xlu0 0
        %4815 = vperm.xlu0 %4814, %v4460
        %v4816 = vpop.permute.xlu0 %4815
        %4817 = vset.pattern.permute.xlu0 0
        %4818 = vperm.xlu0 %4817, %v4461
        %v4819 = vpop.permute.xlu0 %4818
        %4820 = vset.pattern.permute.xlu0 0
        %4821 = vperm.xlu0 %4820, %v4462
        %v4822 = vpop.permute.xlu0 %4821
        %4823 = vset.pattern.permute.xlu0 0
        %4824 = vperm.xlu0 %4823, %v4463
        %v4825 = vpop.permute.xlu0 %4824
        %4826 = vset.pattern.permute.xlu0 0
        %4827 = vperm.xlu0 %4826, %v4464
        %v4828 = vpop.permute.xlu0 %4827
        %4829 = vset.pattern.permute.xlu0 0
        %4830 = vperm.xlu0 %4829, %v4465
        %v4831 = vpop.permute.xlu0 %4830
        %4832 = vset.pattern.permute.xlu0 0
        %4833 = vperm.xlu0 %4832, %v4466
        %v4834 = vpop.permute.xlu0 %4833
        %4835 = vset.pattern.permute.xlu0 0
        %4836 = vperm.xlu0 %4835, %v4467
        %v4837 = vpop.permute.xlu0 %4836
        %4838 = vset.pattern.permute.xlu0 0
        %4839 = vperm.xlu0 %4838, %v4468
        %v4840 = vpop.permute.xlu0 %4839
        %4841 = vset.pattern.permute.xlu0 0
        %4842 = vperm.xlu0 %4841, %v4469
        %v4843 = vpop.permute.xlu0 %4842
        %4844 = vset.pattern.permute.xlu0 0
        %4845 = vperm.xlu0 %4844, %v4470
        %v4846 = vpop.permute.xlu0 %4845
        %4847 = vset.pattern.permute.xlu0 0
        %4848 = vperm.xlu0 %4847, %v4471
        %v4849 = vpop.permute.xlu0 %4848
        %4850 = vset.pattern.permute.xlu0 0
        %4851 = vperm.xlu0 %4850, %v4472
        %v4852 = vpop.permute.xlu0 %4851
        %4853 = vset.pattern.permute.xlu0 0
        %4854 = vperm.xlu0 %4853, %v4473
        %v4855 = vpop.permute.xlu0 %4854
        %4856 = vset.pattern.permute.xlu0 0
        %4857 = vperm.xlu0 %4856, %v4474
        %v4858 = vpop.permute.xlu0 %4857
        %4859 = vset.pattern.permute.xlu0 0
        %4860 = vperm.xlu0 %4859, %v4475
        %v4861 = vpop.permute.xlu0 %4860
        %4862 = vset.pattern.permute.xlu0 0
        %4863 = vperm.xlu0 %4862, %v4476
        %v4864 = vpop.permute.xlu0 %4863
        %4865 = vset.pattern.permute.xlu0 0
        %4866 = vperm.xlu0 %4865, %v4477
        %v4867 = vpop.permute.xlu0 %4866
        %4868 = vset.pattern.permute.xlu0 0
        %4869 = vperm.xlu0 %4868, %v4478
        %v4870 = vpop.permute.xlu0 %4869
        %4871 = vset.pattern.permute.xlu0 0
        %4872 = vperm.xlu0 %4871, %v4479
        %v4873 = vpop.permute.xlu0 %4872
        %4874 = vset.pattern.permute.xlu0 0
        %4875 = vperm.xlu0 %4874, %v4480
        %v4876 = vpop.permute.xlu0 %4875
        %4877 = vset.pattern.permute.xlu0 0
        %4878 = vperm.xlu0 %4877, %v4481
        %v4879 = vpop.permute.xlu0 %4878
        %4880 = vset.pattern.permute.xlu0 0
        %4881 = vperm.xlu0 %4880, %v4482
        %v4882 = vpop.permute.xlu0 %4881
        %4883 = vset.pattern.permute.xlu0 0
        %4884 = vperm.xlu0 %4883, %v4483
        %v4885 = vpop.permute.xlu0 %4884
        %4886 = vset.pattern.permute.xlu0 0
        %4887 = vperm.xlu0 %4886, %v4484
        %v4888 = vpop.permute.xlu0 %4887
        %4889 = vset.pattern.permute.xlu0 0
        %4890 = vperm.xlu0 %4889, %v4485
        %v4891 = vpop.permute.xlu0 %4890
        %4892 = vset.pattern.permute.xlu0 0
        %4893 = vperm.xlu0 %4892, %v4486
        %v4894 = vpop.permute.xlu0 %4893
        %4895 = vset.pattern.permute.xlu0 0
        %4896 = vperm.xlu0 %4895, %v4487
        %v4897 = vpop.permute.xlu0 %4896
        %4898 = vset.pattern.permute.xlu0 0
        %4899 = vperm.xlu0 %4898, %v4488
        %v4900 = vpop.permute.xlu0 %4899
        %4901 = vset.pattern.permute.xlu0 0
        %4902 = vperm.xlu0 %4901, %v4489
        %v4903 = vpop.permute.xlu0 %4902
        %4904 = vset.pattern.permute.xlu0 0
        %4905 = vperm.xlu0 %4904, %v4490
        %v4906 = vpop.permute.xlu0 %4905
        %4907 = vset.pattern.permute.xlu0 0
        %4908 = vperm.xlu0 %4907, %v4491
        %v4909 = vpop.permute.xlu0 %4908
        %4910 = vset.pattern.permute.xlu0 0
        %4911 = vperm.xlu0 %4910, %v4492
        %v4912 = vpop.permute.xlu0 %4911
        %4913 = vset.pattern.permute.xlu0 0
        %4914 = vperm.xlu0 %4913, %v4493
        %v4915 = vpop.permute.xlu0 %4914
        %4916 = vset.pattern.permute.xlu0 0
        %4917 = vperm.xlu0 %4916, %v4494
        %v4918 = vpop.permute.xlu0 %4917
        %4919 = vset.pattern.permute.xlu0 0
        %4920 = vperm.xlu0 %4919, %v4495
        %v4921 = vpop.permute.xlu0 %4920
        %4922 = vset.pattern.permute.xlu0 0
        %4923 = vperm.xlu0 %4922, %v4496
        %v4924 = vpop.permute.xlu0 %4923
        %4925 = vset.pattern.permute.xlu0 0
        %4926 = vperm.xlu0 %4925, %v4497
        %v4927 = vpop.permute.xlu0 %4926
        %4928 = vset.pattern.permute.xlu0 0
        %4929 = vperm.xlu0 %4928, %v4498
        %v4930 = vpop.permute.xlu0 %4929
        %4931 = vset.pattern.permute.xlu0 0
        %4932 = vperm.xlu0 %4931, %v4499
        %v4933 = vpop.permute.xlu0 %4932
        %4934 = vset.pattern.permute.xlu0 0
        %4935 = vperm.xlu0 %4934, %v4500
        %v4936 = vpop.permute.xlu0 %4935
        %4937 = vset.pattern.permute.xlu0 0
        %4938 = vperm.xlu0 %4937, %v4501
        %v4939 = vpop.permute.xlu0 %4938
        %4940 = vset.pattern.permute.xlu0 0
        %4941 = vperm.xlu0 %4940, %v4502
        %v4942 = vpop.permute.xlu0 %4941
        %4943 = vset.pattern.permute.xlu0 0
        %4944 = vperm.xlu0 %4943, %v4503
        %v4945 = vpop.permute.xlu0 %4944
        %4946 = vset.pattern.permute.xlu0 0
        %4947 = vperm.xlu0 %4946, %v4504
        %v4948 = vpop.permute.xlu0 %4947
        %4949 = vset.pattern.permute.xlu0 0
        %4950 = vperm.xlu0 %4949, %v4505
        %v4951 = vpop.permute.xlu0 %4950
        %4952 = vset.pattern.permute.xlu0 0
        %4953 = vperm.xlu0 %4952, %v4506
        %v4954 = vpop.permute.xlu0 %4953
        %4955 = vset.pattern.permute.xlu0 0
        %4956 = vperm.xlu0 %4955, %v4507
        %v4957 = vpop.permute.xlu0 %4956
        %4958 = vset.pattern.permute.xlu0 0
        %4959 = vperm.xlu0 %4958, %v4508
        %v4960 = vpop.permute.xlu0 %4959
        %4961 = vset.pattern.permute.xlu0 0
        %4962 = vperm.xlu0 %4961, %v4509
        %v4963 = vpop.permute.xlu0 %4962
        %4964 = vset.pattern.permute.xlu0 0
        %4965 = vperm.xlu0 %4964, %v4510
        %v4966 = vpop.permute.xlu0 %4965
        %4967 = vset.pattern.permute.xlu0 0
        %4968 = vperm.xlu0 %4967, %v4511
        %v4969 = vpop.permute.xlu0 %4968
        %4970 = vset.pattern.permute.xlu0 0
        %4971 = vperm.xlu0 %4970, %v4512
        %v4972 = vpop.permute.xlu0 %4971
        %4973 = vset.pattern.permute.xlu0 0
        %4974 = vperm.xlu0 %4973, %v4513
        %v4975 = vpop.permute.xlu0 %4974
        %4976 = vset.pattern.permute.xlu0 0
        %4977 = vperm.xlu0 %4976, %v4514
        %v4978 = vpop.permute.xlu0 %4977
        %4979 = vset.pattern.permute.xlu0 0
        %4980 = vperm.xlu0 %4979, %v4515
        %v4981 = vpop.permute.xlu0 %4980
        %4982 = vset.pattern.permute.xlu0 0
        %4983 = vperm.xlu0 %4982, %v4516
        %v4984 = vpop.permute.xlu0 %4983
        %4985 = vset.pattern.permute.xlu0 0
        %4986 = vperm.xlu0 %4985, %v4517
        %v4987 = vpop.permute.xlu0 %4986
        %4988 = vset.pattern.permute.xlu0 0
        %4989 = vperm.xlu0 %4988, %v4518
        %v4990 = vpop.permute.xlu0 %4989
        %4991 = vset.pattern.permute.xlu0 0
        %4992 = vperm.xlu0 %4991, %v4519
        %v4993 = vpop.permute.xlu0 %4992
        %4994 = vset.pattern.permute.xlu0 0
        %4995 = vperm.xlu0 %4994, %v4520
        %v4996 = vpop.permute.xlu0 %4995
        %4997 = vset.pattern.permute.xlu0 0
        %4998 = vperm.xlu0 %4997, %v4521
        %v4999 = vpop.permute.xlu0 %4998
        %5000 = vset.pattern.permute.xlu0 0
        %5001 = vperm.xlu0 %5000, %v4522
        %v5002 = vpop.permute.xlu0 %5001
        %5003 = vset.pattern.permute.xlu0 0
        %5004 = vperm.xlu0 %5003, %v4523
        %v5005 = vpop.permute.xlu0 %5004
        %5006 = vset.pattern.permute.xlu0 0
        %5007 = vperm.xlu0 %5006, %v4524
        %v5008 = vpop.permute.xlu0 %5007
        %5009 = vset.pattern.permute.xlu0 0
        %5010 = vperm.xlu0 %5009, %v4525
        %v5011 = vpop.permute.xlu0 %5010
        %5012 = vset.pattern.permute.xlu0 0
        %5013 = vperm.xlu0 %5012, %v4526
        %v5014 = vpop.permute.xlu0 %5013
        %5015 = vset.pattern.permute.xlu0 0
        %5016 = vperm.xlu0 %5015, %v4527
        %v5017 = vpop.permute.xlu0 %5016
        %5018 = vset.pattern.permute.xlu0 0
        %5019 = vperm.xlu0 %5018, %v4528
        %v5020 = vpop.permute.xlu0 %5019
        %5021 = vset.pattern.permute.xlu0 0
        %5022 = vperm.xlu0 %5021, %v4529
        %v5023 = vpop.permute.xlu0 %5022
        %5024 = vset.pattern.permute.xlu0 0
        %5025 = vperm.xlu0 %5024, %v4530
        %v5026 = vpop.permute.xlu0 %5025
        %5027 = vset.pattern.permute.xlu0 0
        %5028 = vperm.xlu0 %5027, %v4531
        %v5029 = vpop.permute.xlu0 %5028
        %5030 = vset.pattern.permute.xlu0 0
        %5031 = vperm.xlu0 %5030, %v4532
        %v5032 = vpop.permute.xlu0 %5031
        %5033 = vset.pattern.permute.xlu0 0
        %5034 = vperm.xlu0 %5033, %v4533
        %v5035 = vpop.permute.xlu0 %5034
        %5036 = vset.pattern.permute.xlu0 0
        %5037 = vperm.xlu0 %5036, %v4534
        %v5038 = vpop.permute.xlu0 %5037
        %5039 = vset.pattern.permute.xlu0 0
        %5040 = vperm.xlu0 %5039, %v4535
        %v5041 = vpop.permute.xlu0 %5040
        %5042 = vset.pattern.permute.xlu0 0
        %5043 = vperm.xlu0 %5042, %v4536
        %v5044 = vpop.permute.xlu0 %5043
        %5045 = vset.pattern.permute.xlu0 0
        %5046 = vperm.xlu0 %5045, %v4537
        %v5047 = vpop.permute.xlu0 %5046
        %5048 = vset.pattern.permute.xlu0 0
        %5049 = vperm.xlu0 %5048, %v4538
        %v5050 = vpop.permute.xlu0 %5049
        %v5051 = vlaneseq
        %v5052 = vshrl.u32 %v5051, 7
        %v5053 = vsub.s32 %v3731, %v5052
        %v5054 = vrot.slane %v4669, %v5053
        %v5055 = vlaneseq
        %v5056 = vshrl.u32 %v5055, 7
        %v5057 = vsub.s32 %v3736, %v5056
        %v5058 = vrot.slane %v4672, %v5057
        %v5059 = vsel %vm3741, %v5058, %v5054
        %v5060 = vlaneseq
        %v5061 = vshrl.u32 %v5060, 7
        %v5062 = vsub.s32 %v3743, %v5061
        %v5063 = vrot.slane %v4675, %v5062
        %v5064 = vsel %vm3748, %v5063, %v5059
        %v5065 = vlaneseq
        %v5066 = vshrl.u32 %v5065, 7
        %v5067 = vsub.s32 %v3750, %v5066
        %v5068 = vrot.slane %v4678, %v5067
        %v5069 = vsel %vm3755, %v5068, %v5064
        %v5070 = vlaneseq
        %v5071 = vshrl.u32 %v5070, 7
        %v5072 = vsub.s32 %v3757, %v5071
        %v5073 = vrot.slane %v4681, %v5072
        %v5074 = vsel %vm3762, %v5073, %v5069
        %v5075 = vlaneseq
        %v5076 = vshrl.u32 %v5075, 7
        %v5077 = vsub.s32 %v3764, %v5076
        %v5078 = vrot.slane %v4684, %v5077
        %v5079 = vsel %vm3769, %v5078, %v5074
        %v5080 = vlaneseq
        %v5081 = vshrl.u32 %v5080, 7
        %v5082 = vsub.s32 %v3771, %v5081
        %v5083 = vrot.slane %v4687, %v5082
        %v5084 = vsel %vm3776, %v5083, %v5079
        %v5085 = vlaneseq
        %v5086 = vshrl.u32 %v5085, 7
        %v5087 = vsub.s32 %v3778, %v5086
        %v5088 = vrot.slane %v4690, %v5087
        %v5089 = vsel %vm3783, %v5088, %v5084
        %v5090 = vlaneseq
        %v5091 = vshrl.u32 %v5090, 7
        %v5092 = vsub.s32 %v3785, %v5091
        %v5093 = vrot.slane %v4693, %v5092
        %v5094 = vsel %vm3790, %v5093, %v5089
        %v5095 = vlaneseq
        %v5096 = vshrl.u32 %v5095, 7
        %v5097 = vsub.s32 %v3792, %v5096
        %v5098 = vrot.slane %v4696, %v5097
        %v5099 = vsel %vm3797, %v5098, %v5094
        %v5100 = vlaneseq
        %v5101 = vshrl.u32 %v5100, 7
        %v5102 = vsub.s32 %v3799, %v5101
        %v5103 = vrot.slane %v4699, %v5102
        %v5104 = vsel %vm3804, %v5103, %v5099
        %v5105 = vlaneseq
        %v5106 = vshrl.u32 %v5105, 7
        %v5107 = vsub.s32 %v3806, %v5106
        %v5108 = vrot.slane %v4702, %v5107
        %v5109 = vsel %vm3811, %v5108, %v5104
        %v5110 = vlaneseq
        %v5111 = vshrl.u32 %v5110, 7
        %v5112 = vsub.s32 %v3813, %v5111
        %v5113 = vrot.slane %v4705, %v5112
        %v5114 = vsel %vm3818, %v5113, %v5109
        %v5115 = vlaneseq
        %v5116 = vshrl.u32 %v5115, 7
        %v5117 = vsub.s32 %v3820, %v5116
        %v5118 = vrot.slane %v4708, %v5117
        %v5119 = vsel %vm3825, %v5118, %v5114
        %v5120 = vlaneseq
        %v5121 = vshrl.u32 %v5120, 7
        %v5122 = vsub.s32 %v3827, %v5121
        %v5123 = vrot.slane %v4711, %v5122
        %v5124 = vsel %vm3832, %v5123, %v5119
        %v5125 = vlaneseq
        %v5126 = vshrl.u32 %v5125, 7
        %v5127 = vsub.s32 %v3834, %v5126
        %v5128 = vrot.slane %v4714, %v5127
        %v5129 = vsel %vm3839, %v5128, %v5124
        %v5130 = vlaneseq
        %v5131 = vshrl.u32 %v5130, 7
        %v5132 = vsub.s32 %v3731, %v5131
        %v5133 = vrot.slane %v4717, %v5132
        %v5134 = vlaneseq
        %v5135 = vshrl.u32 %v5134, 7
        %v5136 = vsub.s32 %v3736, %v5135
        %v5137 = vrot.slane %v4720, %v5136
        %v5138 = vsel %vm3741, %v5137, %v5133
        %v5139 = vlaneseq
        %v5140 = vshrl.u32 %v5139, 7
        %v5141 = vsub.s32 %v3743, %v5140
        %v5142 = vrot.slane %v4723, %v5141
        %v5143 = vsel %vm3748, %v5142, %v5138
        %v5144 = vlaneseq
        %v5145 = vshrl.u32 %v5144, 7
        %v5146 = vsub.s32 %v3750, %v5145
        %v5147 = vrot.slane %v4726, %v5146
        %v5148 = vsel %vm3755, %v5147, %v5143
        %v5149 = vlaneseq
        %v5150 = vshrl.u32 %v5149, 7
        %v5151 = vsub.s32 %v3757, %v5150
        %v5152 = vrot.slane %v4729, %v5151
        %v5153 = vsel %vm3762, %v5152, %v5148
        %v5154 = vlaneseq
        %v5155 = vshrl.u32 %v5154, 7
        %v5156 = vsub.s32 %v3764, %v5155
        %v5157 = vrot.slane %v4732, %v5156
        %v5158 = vsel %vm3769, %v5157, %v5153
        %v5159 = vlaneseq
        %v5160 = vshrl.u32 %v5159, 7
        %v5161 = vsub.s32 %v3771, %v5160
        %v5162 = vrot.slane %v4735, %v5161
        %v5163 = vsel %vm3776, %v5162, %v5158
        %v5164 = vlaneseq
        %v5165 = vshrl.u32 %v5164, 7
        %v5166 = vsub.s32 %v3778, %v5165
        %v5167 = vrot.slane %v4738, %v5166
        %v5168 = vsel %vm3783, %v5167, %v5163
        %v5169 = vlaneseq
        %v5170 = vshrl.u32 %v5169, 7
        %v5171 = vsub.s32 %v3785, %v5170
        %v5172 = vrot.slane %v4741, %v5171
        %v5173 = vsel %vm3790, %v5172, %v5168
        %v5174 = vlaneseq
        %v5175 = vshrl.u32 %v5174, 7
        %v5176 = vsub.s32 %v3792, %v5175
        %v5177 = vrot.slane %v4744, %v5176
        %v5178 = vsel %vm3797, %v5177, %v5173
        %v5179 = vlaneseq
        %v5180 = vshrl.u32 %v5179, 7
        %v5181 = vsub.s32 %v3799, %v5180
        %v5182 = vrot.slane %v4747, %v5181
        %v5183 = vsel %vm3804, %v5182, %v5178
        %v5184 = vlaneseq
        %v5185 = vshrl.u32 %v5184, 7
        %v5186 = vsub.s32 %v3806, %v5185
        %v5187 = vrot.slane %v4750, %v5186
        %v5188 = vsel %vm3811, %v5187, %v5183
        %v5189 = vlaneseq
        %v5190 = vshrl.u32 %v5189, 7
        %v5191 = vsub.s32 %v3813, %v5190
        %v5192 = vrot.slane %v4753, %v5191
        %v5193 = vsel %vm3818, %v5192, %v5188
        %v5194 = vlaneseq
        %v5195 = vshrl.u32 %v5194, 7
        %v5196 = vsub.s32 %v3820, %v5195
        %v5197 = vrot.slane %v4756, %v5196
        %v5198 = vsel %vm3825, %v5197, %v5193
        %v5199 = vlaneseq
        %v5200 = vshrl.u32 %v5199, 7
        %v5201 = vsub.s32 %v3827, %v5200
        %v5202 = vrot.slane %v4759, %v5201
        %v5203 = vsel %vm3832, %v5202, %v5198
        %v5204 = vlaneseq
        %v5205 = vshrl.u32 %v5204, 7
        %v5206 = vsub.s32 %v3834, %v5205
        %v5207 = vrot.slane %v4762, %v5206
        %v5208 = vsel %vm3839, %v5207, %v5203
        %v5209 = vlaneseq
        %v5210 = vshrl.u32 %v5209, 7
        %v5211 = vsub.s32 %v3731, %v5210
        %v5212 = vrot.slane %v4765, %v5211
        %v5213 = vlaneseq
        %v5214 = vshrl.u32 %v5213, 7
        %v5215 = vsub.s32 %v3736, %v5214
        %v5216 = vrot.slane %v4768, %v5215
        %v5217 = vsel %vm3741, %v5216, %v5212
        %v5218 = vlaneseq
        %v5219 = vshrl.u32 %v5218, 7
        %v5220 = vsub.s32 %v3743, %v5219
        %v5221 = vrot.slane %v4771, %v5220
        %v5222 = vsel %vm3748, %v5221, %v5217
        %v5223 = vlaneseq
        %v5224 = vshrl.u32 %v5223, 7
        %v5225 = vsub.s32 %v3750, %v5224
        %v5226 = vrot.slane %v4774, %v5225
        %v5227 = vsel %vm3755, %v5226, %v5222
        %v5228 = vlaneseq
        %v5229 = vshrl.u32 %v5228, 7
        %v5230 = vsub.s32 %v3757, %v5229
        %v5231 = vrot.slane %v4777, %v5230
        %v5232 = vsel %vm3762, %v5231, %v5227
        %v5233 = vlaneseq
        %v5234 = vshrl.u32 %v5233, 7
        %v5235 = vsub.s32 %v3764, %v5234
        %v5236 = vrot.slane %v4780, %v5235
        %v5237 = vsel %vm3769, %v5236, %v5232
        %v5238 = vlaneseq
        %v5239 = vshrl.u32 %v5238, 7
        %v5240 = vsub.s32 %v3771, %v5239
        %v5241 = vrot.slane %v4783, %v5240
        %v5242 = vsel %vm3776, %v5241, %v5237
        %v5243 = vlaneseq
        %v5244 = vshrl.u32 %v5243, 7
        %v5245 = vsub.s32 %v3778, %v5244
        %v5246 = vrot.slane %v4786, %v5245
        %v5247 = vsel %vm3783, %v5246, %v5242
        %v5248 = vlaneseq
        %v5249 = vshrl.u32 %v5248, 7
        %v5250 = vsub.s32 %v3785, %v5249
        %v5251 = vrot.slane %v4789, %v5250
        %v5252 = vsel %vm3790, %v5251, %v5247
        %v5253 = vlaneseq
        %v5254 = vshrl.u32 %v5253, 7
        %v5255 = vsub.s32 %v3792, %v5254
        %v5256 = vrot.slane %v4792, %v5255
        %v5257 = vsel %vm3797, %v5256, %v5252
        %v5258 = vlaneseq
        %v5259 = vshrl.u32 %v5258, 7
        %v5260 = vsub.s32 %v3799, %v5259
        %v5261 = vrot.slane %v4795, %v5260
        %v5262 = vsel %vm3804, %v5261, %v5257
        %v5263 = vlaneseq
        %v5264 = vshrl.u32 %v5263, 7
        %v5265 = vsub.s32 %v3806, %v5264
        %v5266 = vrot.slane %v4798, %v5265
        %v5267 = vsel %vm3811, %v5266, %v5262
        %v5268 = vlaneseq
        %v5269 = vshrl.u32 %v5268, 7
        %v5270 = vsub.s32 %v3813, %v5269
        %v5271 = vrot.slane %v4801, %v5270
        %v5272 = vsel %vm3818, %v5271, %v5267
        %v5273 = vlaneseq
        %v5274 = vshrl.u32 %v5273, 7
        %v5275 = vsub.s32 %v3820, %v5274
        %v5276 = vrot.slane %v4804, %v5275
        %v5277 = vsel %vm3825, %v5276, %v5272
        %v5278 = vlaneseq
        %v5279 = vshrl.u32 %v5278, 7
        %v5280 = vsub.s32 %v3827, %v5279
        %v5281 = vrot.slane %v4807, %v5280
        %v5282 = vsel %vm3832, %v5281, %v5277
        %v5283 = vlaneseq
        %v5284 = vshrl.u32 %v5283, 7
        %v5285 = vsub.s32 %v3834, %v5284
        %v5286 = vrot.slane %v4810, %v5285
        %v5287 = vsel %vm3839, %v5286, %v5282
        %v5288 = vlaneseq
        %v5289 = vshrl.u32 %v5288, 7
        %v5290 = vsub.s32 %v3731, %v5289
        %v5291 = vrot.slane %v4813, %v5290
        %v5292 = vlaneseq
        %v5293 = vshrl.u32 %v5292, 7
        %v5294 = vsub.s32 %v3736, %v5293
        %v5295 = vrot.slane %v4816, %v5294
        %v5296 = vsel %vm3741, %v5295, %v5291
        %v5297 = vlaneseq
        %v5298 = vshrl.u32 %v5297, 7
        %v5299 = vsub.s32 %v3743, %v5298
        %v5300 = vrot.slane %v4819, %v5299
        %v5301 = vsel %vm3748, %v5300, %v5296
        %v5302 = vlaneseq
        %v5303 = vshrl.u32 %v5302, 7
        %v5304 = vsub.s32 %v3750, %v5303
        %v5305 = vrot.slane %v4822, %v5304
        %v5306 = vsel %vm3755, %v5305, %v5301
        %v5307 = vlaneseq
        %v5308 = vshrl.u32 %v5307, 7
        %v5309 = vsub.s32 %v3757, %v5308
        %v5310 = vrot.slane %v4825, %v5309
        %v5311 = vsel %vm3762, %v5310, %v5306
        %v5312 = vlaneseq
        %v5313 = vshrl.u32 %v5312, 7
        %v5314 = vsub.s32 %v3764, %v5313
        %v5315 = vrot.slane %v4828, %v5314
        %v5316 = vsel %vm3769, %v5315, %v5311
        %v5317 = vlaneseq
        %v5318 = vshrl.u32 %v5317, 7
        %v5319 = vsub.s32 %v3771, %v5318
        %v5320 = vrot.slane %v4831, %v5319
        %v5321 = vsel %vm3776, %v5320, %v5316
        %v5322 = vlaneseq
        %v5323 = vshrl.u32 %v5322, 7
        %v5324 = vsub.s32 %v3778, %v5323
        %v5325 = vrot.slane %v4834, %v5324
        %v5326 = vsel %vm3783, %v5325, %v5321
        %v5327 = vlaneseq
        %v5328 = vshrl.u32 %v5327, 7
        %v5329 = vsub.s32 %v3785, %v5328
        %v5330 = vrot.slane %v4837, %v5329
        %v5331 = vsel %vm3790, %v5330, %v5326
        %v5332 = vlaneseq
        %v5333 = vshrl.u32 %v5332, 7
        %v5334 = vsub.s32 %v3792, %v5333
        %v5335 = vrot.slane %v4840, %v5334
        %v5336 = vsel %vm3797, %v5335, %v5331
        %v5337 = vlaneseq
        %v5338 = vshrl.u32 %v5337, 7
        %v5339 = vsub.s32 %v3799, %v5338
        %v5340 = vrot.slane %v4843, %v5339
        %v5341 = vsel %vm3804, %v5340, %v5336
        %v5342 = vlaneseq
        %v5343 = vshrl.u32 %v5342, 7
        %v5344 = vsub.s32 %v3806, %v5343
        %v5345 = vrot.slane %v4846, %v5344
        %v5346 = vsel %vm3811, %v5345, %v5341
        %v5347 = vlaneseq
        %v5348 = vshrl.u32 %v5347, 7
        %v5349 = vsub.s32 %v3813, %v5348
        %v5350 = vrot.slane %v4849, %v5349
        %v5351 = vsel %vm3818, %v5350, %v5346
        %v5352 = vlaneseq
        %v5353 = vshrl.u32 %v5352, 7
        %v5354 = vsub.s32 %v3820, %v5353
        %v5355 = vrot.slane %v4852, %v5354
        %v5356 = vsel %vm3825, %v5355, %v5351
        %v5357 = vlaneseq
        %v5358 = vshrl.u32 %v5357, 7
        %v5359 = vsub.s32 %v3827, %v5358
        %v5360 = vrot.slane %v4855, %v5359
        %v5361 = vsel %vm3832, %v5360, %v5356
        %v5362 = vlaneseq
        %v5363 = vshrl.u32 %v5362, 7
        %v5364 = vsub.s32 %v3834, %v5363
        %v5365 = vrot.slane %v4858, %v5364
        %v5366 = vsel %vm3839, %v5365, %v5361
        %v5367 = vlaneseq
        %v5368 = vshrl.u32 %v5367, 7
        %v5369 = vsub.s32 %v3731, %v5368
        %v5370 = vrot.slane %v4861, %v5369
        %v5371 = vlaneseq
        %v5372 = vshrl.u32 %v5371, 7
        %v5373 = vsub.s32 %v3736, %v5372
        %v5374 = vrot.slane %v4864, %v5373
        %v5375 = vsel %vm3741, %v5374, %v5370
        %v5376 = vlaneseq
        %v5377 = vshrl.u32 %v5376, 7
        %v5378 = vsub.s32 %v3743, %v5377
        %v5379 = vrot.slane %v4867, %v5378
        %v5380 = vsel %vm3748, %v5379, %v5375
        %v5381 = vlaneseq
        %v5382 = vshrl.u32 %v5381, 7
        %v5383 = vsub.s32 %v3750, %v5382
        %v5384 = vrot.slane %v4870, %v5383
        %v5385 = vsel %vm3755, %v5384, %v5380
        %v5386 = vlaneseq
        %v5387 = vshrl.u32 %v5386, 7
        %v5388 = vsub.s32 %v3757, %v5387
        %v5389 = vrot.slane %v4873, %v5388
        %v5390 = vsel %vm3762, %v5389, %v5385
        %v5391 = vlaneseq
        %v5392 = vshrl.u32 %v5391, 7
        %v5393 = vsub.s32 %v3764, %v5392
        %v5394 = vrot.slane %v4876, %v5393
        %v5395 = vsel %vm3769, %v5394, %v5390
        %v5396 = vlaneseq
        %v5397 = vshrl.u32 %v5396, 7
        %v5398 = vsub.s32 %v3771, %v5397
        %v5399 = vrot.slane %v4879, %v5398
        %v5400 = vsel %vm3776, %v5399, %v5395
        %v5401 = vlaneseq
        %v5402 = vshrl.u32 %v5401, 7
        %v5403 = vsub.s32 %v3778, %v5402
        %v5404 = vrot.slane %v4882, %v5403
        %v5405 = vsel %vm3783, %v5404, %v5400
        %v5406 = vlaneseq
        %v5407 = vshrl.u32 %v5406, 7
        %v5408 = vsub.s32 %v3785, %v5407
        %v5409 = vrot.slane %v4885, %v5408
        %v5410 = vsel %vm3790, %v5409, %v5405
        %v5411 = vlaneseq
        %v5412 = vshrl.u32 %v5411, 7
        %v5413 = vsub.s32 %v3792, %v5412
        %v5414 = vrot.slane %v4888, %v5413
        %v5415 = vsel %vm3797, %v5414, %v5410
        %v5416 = vlaneseq
        %v5417 = vshrl.u32 %v5416, 7
        %v5418 = vsub.s32 %v3799, %v5417
        %v5419 = vrot.slane %v4891, %v5418
        %v5420 = vsel %vm3804, %v5419, %v5415
        %v5421 = vlaneseq
        %v5422 = vshrl.u32 %v5421, 7
        %v5423 = vsub.s32 %v3806, %v5422
        %v5424 = vrot.slane %v4894, %v5423
        %v5425 = vsel %vm3811, %v5424, %v5420
        %v5426 = vlaneseq
        %v5427 = vshrl.u32 %v5426, 7
        %v5428 = vsub.s32 %v3813, %v5427
        %v5429 = vrot.slane %v4897, %v5428
        %v5430 = vsel %vm3818, %v5429, %v5425
        %v5431 = vlaneseq
        %v5432 = vshrl.u32 %v5431, 7
        %v5433 = vsub.s32 %v3820, %v5432
        %v5434 = vrot.slane %v4900, %v5433
        %v5435 = vsel %vm3825, %v5434, %v5430
        %v5436 = vlaneseq
        %v5437 = vshrl.u32 %v5436, 7
        %v5438 = vsub.s32 %v3827, %v5437
        %v5439 = vrot.slane %v4903, %v5438
        %v5440 = vsel %vm3832, %v5439, %v5435
        %v5441 = vlaneseq
        %v5442 = vshrl.u32 %v5441, 7
        %v5443 = vsub.s32 %v3834, %v5442
        %v5444 = vrot.slane %v4906, %v5443
        %v5445 = vsel %vm3839, %v5444, %v5440
        %v5446 = vlaneseq
        %v5447 = vshrl.u32 %v5446, 7
        %v5448 = vsub.s32 %v3731, %v5447
        %v5449 = vrot.slane %v4909, %v5448
        %v5450 = vlaneseq
        %v5451 = vshrl.u32 %v5450, 7
        %v5452 = vsub.s32 %v3736, %v5451
        %v5453 = vrot.slane %v4912, %v5452
        %v5454 = vsel %vm3741, %v5453, %v5449
        %v5455 = vlaneseq
        %v5456 = vshrl.u32 %v5455, 7
        %v5457 = vsub.s32 %v3743, %v5456
        %v5458 = vrot.slane %v4915, %v5457
        %v5459 = vsel %vm3748, %v5458, %v5454
        %v5460 = vlaneseq
        %v5461 = vshrl.u32 %v5460, 7
        %v5462 = vsub.s32 %v3750, %v5461
        %v5463 = vrot.slane %v4918, %v5462
        %v5464 = vsel %vm3755, %v5463, %v5459
        %v5465 = vlaneseq
        %v5466 = vshrl.u32 %v5465, 7
        %v5467 = vsub.s32 %v3757, %v5466
        %v5468 = vrot.slane %v4921, %v5467
        %v5469 = vsel %vm3762, %v5468, %v5464
        %v5470 = vlaneseq
        %v5471 = vshrl.u32 %v5470, 7
        %v5472 = vsub.s32 %v3764, %v5471
        %v5473 = vrot.slane %v4924, %v5472
        %v5474 = vsel %vm3769, %v5473, %v5469
        %v5475 = vlaneseq
        %v5476 = vshrl.u32 %v5475, 7
        %v5477 = vsub.s32 %v3771, %v5476
        %v5478 = vrot.slane %v4927, %v5477
        %v5479 = vsel %vm3776, %v5478, %v5474
        %v5480 = vlaneseq
        %v5481 = vshrl.u32 %v5480, 7
        %v5482 = vsub.s32 %v3778, %v5481
        %v5483 = vrot.slane %v4930, %v5482
        %v5484 = vsel %vm3783, %v5483, %v5479
        %v5485 = vlaneseq
        %v5486 = vshrl.u32 %v5485, 7
        %v5487 = vsub.s32 %v3785, %v5486
        %v5488 = vrot.slane %v4933, %v5487
        %v5489 = vsel %vm3790, %v5488, %v5484
        %v5490 = vlaneseq
        %v5491 = vshrl.u32 %v5490, 7
        %v5492 = vsub.s32 %v3792, %v5491
        %v5493 = vrot.slane %v4936, %v5492
        %v5494 = vsel %vm3797, %v5493, %v5489
        %v5495 = vlaneseq
        %v5496 = vshrl.u32 %v5495, 7
        %v5497 = vsub.s32 %v3799, %v5496
        %v5498 = vrot.slane %v4939, %v5497
        %v5499 = vsel %vm3804, %v5498, %v5494
        %v5500 = vlaneseq
        %v5501 = vshrl.u32 %v5500, 7
        %v5502 = vsub.s32 %v3806, %v5501
        %v5503 = vrot.slane %v4942, %v5502
        %v5504 = vsel %vm3811, %v5503, %v5499
        %v5505 = vlaneseq
        %v5506 = vshrl.u32 %v5505, 7
        %v5507 = vsub.s32 %v3813, %v5506
        %v5508 = vrot.slane %v4945, %v5507
        %v5509 = vsel %vm3818, %v5508, %v5504
        %v5510 = vlaneseq
        %v5511 = vshrl.u32 %v5510, 7
        %v5512 = vsub.s32 %v3820, %v5511
        %v5513 = vrot.slane %v4948, %v5512
        %v5514 = vsel %vm3825, %v5513, %v5509
        %v5515 = vlaneseq
        %v5516 = vshrl.u32 %v5515, 7
        %v5517 = vsub.s32 %v3827, %v5516
        %v5518 = vrot.slane %v4951, %v5517
        %v5519 = vsel %vm3832, %v5518, %v5514
        %v5520 = vlaneseq
        %v5521 = vshrl.u32 %v5520, 7
        %v5522 = vsub.s32 %v3834, %v5521
        %v5523 = vrot.slane %v4954, %v5522
        %v5524 = vsel %vm3839, %v5523, %v5519
        %v5525 = vlaneseq
        %v5526 = vshrl.u32 %v5525, 7
        %v5527 = vsub.s32 %v3731, %v5526
        %v5528 = vrot.slane %v4957, %v5527
        %v5529 = vlaneseq
        %v5530 = vshrl.u32 %v5529, 7
        %v5531 = vsub.s32 %v3736, %v5530
        %v5532 = vrot.slane %v4960, %v5531
        %v5533 = vsel %vm3741, %v5532, %v5528
        %v5534 = vlaneseq
        %v5535 = vshrl.u32 %v5534, 7
        %v5536 = vsub.s32 %v3743, %v5535
        %v5537 = vrot.slane %v4963, %v5536
        %v5538 = vsel %vm3748, %v5537, %v5533
        %v5539 = vlaneseq
        %v5540 = vshrl.u32 %v5539, 7
        %v5541 = vsub.s32 %v3750, %v5540
        %v5542 = vrot.slane %v4966, %v5541
        %v5543 = vsel %vm3755, %v5542, %v5538
        %v5544 = vlaneseq
        %v5545 = vshrl.u32 %v5544, 7
        %v5546 = vsub.s32 %v3757, %v5545
        %v5547 = vrot.slane %v4969, %v5546
        %v5548 = vsel %vm3762, %v5547, %v5543
        %v5549 = vlaneseq
        %v5550 = vshrl.u32 %v5549, 7
        %v5551 = vsub.s32 %v3764, %v5550
        %v5552 = vrot.slane %v4972, %v5551
        %v5553 = vsel %vm3769, %v5552, %v5548
        %v5554 = vlaneseq
        %v5555 = vshrl.u32 %v5554, 7
        %v5556 = vsub.s32 %v3771, %v5555
        %v5557 = vrot.slane %v4975, %v5556
        %v5558 = vsel %vm3776, %v5557, %v5553
        %v5559 = vlaneseq
        %v5560 = vshrl.u32 %v5559, 7
        %v5561 = vsub.s32 %v3778, %v5560
        %v5562 = vrot.slane %v4978, %v5561
        %v5563 = vsel %vm3783, %v5562, %v5558
        %v5564 = vlaneseq
        %v5565 = vshrl.u32 %v5564, 7
        %v5566 = vsub.s32 %v3785, %v5565
        %v5567 = vrot.slane %v4981, %v5566
        %v5568 = vsel %vm3790, %v5567, %v5563
        %v5569 = vlaneseq
        %v5570 = vshrl.u32 %v5569, 7
        %v5571 = vsub.s32 %v3792, %v5570
        %v5572 = vrot.slane %v4984, %v5571
        %v5573 = vsel %vm3797, %v5572, %v5568
        %v5574 = vlaneseq
        %v5575 = vshrl.u32 %v5574, 7
        %v5576 = vsub.s32 %v3799, %v5575
        %v5577 = vrot.slane %v4987, %v5576
        %v5578 = vsel %vm3804, %v5577, %v5573
        %v5579 = vlaneseq
        %v5580 = vshrl.u32 %v5579, 7
        %v5581 = vsub.s32 %v3806, %v5580
        %v5582 = vrot.slane %v4990, %v5581
        %v5583 = vsel %vm3811, %v5582, %v5578
        %v5584 = vlaneseq
        %v5585 = vshrl.u32 %v5584, 7
        %v5586 = vsub.s32 %v3813, %v5585
        %v5587 = vrot.slane %v4993, %v5586
        %v5588 = vsel %vm3818, %v5587, %v5583
        %v5589 = vlaneseq
        %v5590 = vshrl.u32 %v5589, 7
        %v5591 = vsub.s32 %v3820, %v5590
        %v5592 = vrot.slane %v4996, %v5591
        %v5593 = vsel %vm3825, %v5592, %v5588
        %v5594 = vlaneseq
        %v5595 = vshrl.u32 %v5594, 7
        %v5596 = vsub.s32 %v3827, %v5595
        %v5597 = vrot.slane %v4999, %v5596
        %v5598 = vsel %vm3832, %v5597, %v5593
        %v5599 = vlaneseq
        %v5600 = vshrl.u32 %v5599, 7
        %v5601 = vsub.s32 %v3834, %v5600
        %v5602 = vrot.slane %v5002, %v5601
        %v5603 = vsel %vm3839, %v5602, %v5598
        %v5604 = vlaneseq
        %v5605 = vshrl.u32 %v5604, 7
        %v5606 = vsub.s32 %v3731, %v5605
        %v5607 = vrot.slane %v5005, %v5606
        %v5608 = vlaneseq
        %v5609 = vshrl.u32 %v5608, 7
        %v5610 = vsub.s32 %v3736, %v5609
        %v5611 = vrot.slane %v5008, %v5610
        %v5612 = vsel %vm3741, %v5611, %v5607
        %v5613 = vlaneseq
        %v5614 = vshrl.u32 %v5613, 7
        %v5615 = vsub.s32 %v3743, %v5614
        %v5616 = vrot.slane %v5011, %v5615
        %v5617 = vsel %vm3748, %v5616, %v5612
        %v5618 = vlaneseq
        %v5619 = vshrl.u32 %v5618, 7
        %v5620 = vsub.s32 %v3750, %v5619
        %v5621 = vrot.slane %v5014, %v5620
        %v5622 = vsel %vm3755, %v5621, %v5617
        %v5623 = vlaneseq
        %v5624 = vshrl.u32 %v5623, 7
        %v5625 = vsub.s32 %v3757, %v5624
        %v5626 = vrot.slane %v5017, %v5625
        %v5627 = vsel %vm3762, %v5626, %v5622
        %v5628 = vlaneseq
        %v5629 = vshrl.u32 %v5628, 7
        %v5630 = vsub.s32 %v3764, %v5629
        %v5631 = vrot.slane %v5020, %v5630
        %v5632 = vsel %vm3769, %v5631, %v5627
        %v5633 = vlaneseq
        %v5634 = vshrl.u32 %v5633, 7
        %v5635 = vsub.s32 %v3771, %v5634
        %v5636 = vrot.slane %v5023, %v5635
        %v5637 = vsel %vm3776, %v5636, %v5632
        %v5638 = vlaneseq
        %v5639 = vshrl.u32 %v5638, 7
        %v5640 = vsub.s32 %v3778, %v5639
        %v5641 = vrot.slane %v5026, %v5640
        %v5642 = vsel %vm3783, %v5641, %v5637
        %v5643 = vlaneseq
        %v5644 = vshrl.u32 %v5643, 7
        %v5645 = vsub.s32 %v3785, %v5644
        %v5646 = vrot.slane %v5029, %v5645
        %v5647 = vsel %vm3790, %v5646, %v5642
        %v5648 = vlaneseq
        %v5649 = vshrl.u32 %v5648, 7
        %v5650 = vsub.s32 %v3792, %v5649
        %v5651 = vrot.slane %v5032, %v5650
        %v5652 = vsel %vm3797, %v5651, %v5647
        %v5653 = vlaneseq
        %v5654 = vshrl.u32 %v5653, 7
        %v5655 = vsub.s32 %v3799, %v5654
        %v5656 = vrot.slane %v5035, %v5655
        %v5657 = vsel %vm3804, %v5656, %v5652
        %v5658 = vlaneseq
        %v5659 = vshrl.u32 %v5658, 7
        %v5660 = vsub.s32 %v3806, %v5659
        %v5661 = vrot.slane %v5038, %v5660
        %v5662 = vsel %vm3811, %v5661, %v5657
        %v5663 = vlaneseq
        %v5664 = vshrl.u32 %v5663, 7
        %v5665 = vsub.s32 %v3813, %v5664
        %v5666 = vrot.slane %v5041, %v5665
        %v5667 = vsel %vm3818, %v5666, %v5662
        %v5668 = vlaneseq
        %v5669 = vshrl.u32 %v5668, 7
        %v5670 = vsub.s32 %v3820, %v5669
        %v5671 = vrot.slane %v5044, %v5670
        %v5672 = vsel %vm3825, %v5671, %v5667
        %v5673 = vlaneseq
        %v5674 = vshrl.u32 %v5673, 7
        %v5675 = vsub.s32 %v3827, %v5674
        %v5676 = vrot.slane %v5047, %v5675
        %v5677 = vsel %vm3832, %v5676, %v5672
        %v5678 = vlaneseq
        %v5679 = vshrl.u32 %v5678, 7
        %v5680 = vsub.s32 %v3834, %v5679
        %v5681 = vrot.slane %v5050, %v5680
        %v5682 = vsel %vm3839, %v5681, %v5677
        %v5683 = vsel %vm4394, %v5208, %v5129
        %v5684 = vsel %vm4396, %v5287, %v5683
        %v5685 = vsel %vm4398, %v5366, %v5684
        %v5686 = vsel %vm4400, %v5445, %v5685
        %v5687 = vsel %vm4402, %v5524, %v5686
        %v5688 = vsel %vm4404, %v5603, %v5687
        %v5689 = vsel %vm4406, %v5682, %v5688
        %5691 = vadd.xlane.f32.xlu0 %v5689
        %v5692 = vpop.xlane.xlu0 %5691
        %v5693 = vsub.f32 %v5692, 1.0
        %v5694 = vrcp.pop %v4410
        %v5695 = vmul.f32 %v5693, %v5694
        %v5696 = vsub.f32 %v135, %v5695
        %v5697 = vmax.f32 %v5696, 0.0
        %5698 = vst [vmem:[%s131] sm:$0xff] %v5697
        %s5699 = sand.u32 %s52, 1
        %s5700 = scalar_lea.sflag [#allocation4], %s5699
        %s5701 = sand.u32 %s52, 1
        %s5702 = smul.addr %s5701, 8
        %s5703 = scalar_lea.vmem [#allocation5], %s5702
        // Predicated region
        $region29: #{tpu_custom_call.1} parent=23 // pred_check
          %p5704 = pneg %p62
        $region30: #{tpu_custom_call.1} parent=23 // pred_check_branch
          %5706 = sbr.rel (%p5704) target = $region32
        $region31: #{tpu_custom_call.1} parent=23 // pred_region
          %s5708 = ssub.s32 128, 128
          %5709 = vsyncadd %s5700, %s5708
          %s5710 = smul.addr %s18, 128
          %s5711 = scalar_lea.hbm %s1, %s5710
          %s5713 = sshll.u32 %s5703, 4
          %s5714 = int_to_ptr.vmem [resolvable:$true] %s5713
          %5716 = dma.vmem_to_hbm [thread:$0]  %s5714, 128, %s5711, %s5700
        $region32: #{tpu_custom_call.1} parent=23 // pred_fallthru
          _
      $region24: #{tpu_custom_call.1} parent=5 // pred_fallthru
        _
      %p5717 = scmp.le.s32.totalorder 2, %s13
      // Predicated region
      $region33: #{tpu_custom_call.1} parent=5 // pred_check
        %p5718 = pneg %p5717
      $region34: #{tpu_custom_call.1} parent=5 // pred_check_branch
        %5720 = sbr.rel (%p5718) target = $region36
      $region35: #{tpu_custom_call.1} parent=5 // pred_region
        %s5721 = ssub.s32 %s13, 2
        // Predicated region
        $region37: #{tpu_custom_call.1} parent=35 // pred_check
          %p5722 = pneg %p68
        $region38: #{tpu_custom_call.1} parent=35 // pred_check_branch
          %5724 = sbr.rel (%p5722) target = $region40
        $region39: #{tpu_custom_call.1} parent=35 // pred_region
          %s5725 = sand.u32 %s53, 1
          %s5726 = scalar_lea.sflag [#allocation4], %s5725
          %s5727 = sand.u32 %s53, 1
          %s5728 = smul.addr %s5727, 8
          %s5729 = scalar_lea.vmem [#allocation5], %s5728
          %5730 = dma.done %s5726, 128
        $region40: #{tpu_custom_call.1} parent=35 // pred_fallthru
          _
      $region36: #{tpu_custom_call.1} parent=5 // pred_fallthru
        _
    $region6: #{tpu_custom_call.1} parent=1 // loop_footer
      %s17 = sadd.s32 1, %s13
    $region7: #{tpu_custom_call.1} parent=1 // loop_footer_branch
      %12 = sbr.rel target = $region3
    $region8: #{tpu_custom_call.1} parent=1 // loop_exit
      _
    %5731 = vsyncpa [#allocation3], 1
    %s5732 = scalar_lea.sflag [#allocation3], 1
    %5733 = vsyncpa %s5732, 1
    %5734 = vsyncpa [#allocation4], 1
    %s5735 = scalar_lea.sflag [#allocation4], 1
    %5736 = vsyncpa %s5735, 1

</llo_original>
